<compile_context>
chip_gen: v7x
topology: tpu7x:2x2x1
jax: 0.10.0
libtpu: 0.0.40
codegen_flags: <defaults>
</compile_context>

<pallas_src>
import functools

import jax
import jax.numpy as jnp
import numpy as np
from jax.experimental import pallas as pl
from jax.experimental.pallas import tpu as pltpu


def encoder_layer_kernel(
    src_ref, bias_ref,
    wqkv_ref, bqkv_ref, wo_ref, bo_ref,
    rel_ref, relt_ref,
    ln1_g_ref, ln1_b_ref,
    w1_ref, b1_ref, w2_ref, b2_ref,
    ln2_g_ref, ln2_b_ref,
    out_ref,
    *, n_heads, head_dim, inv_scale, eps, max_rel,
):
    H, hd = n_heads, head_dim
    NB = 2 * max_rel + 1

    x = src_ref[0]        # (S, D)
    bias = bias_ref[0]    # (S, S) additive mask: 0 (keep) / -1e10 (masked)
    S, D = x.shape

    # ---- fused QKV projection: one MXU matmul ----
    qkv = jnp.dot(x, wqkv_ref[...], preferred_element_type=jnp.float32) + bqkv_ref[...]
    Q = qkv[:, 0 * D:1 * D] * inv_scale        # fold 1/sqrt(hd) into Q (scales e1 & e2)
    K = qkv[:, 1 * D:2 * D]
    V = qkv[:, 2 * D:3 * D]

    # ---- head-batched layout (H, S, hd) ----
    def to_heads(M):
        return jnp.stack([M[:, h * hd:(h + 1) * hd] for h in range(H)], axis=0)

    Qh, Kh, Vh = to_heads(Q), to_heads(K), to_heads(V)

    # ---- content-content energy: batched over heads on the MXU ----
    e1 = jnp.einsum('hqd,hkd->hqk', Qh, Kh, preferred_element_type=jnp.float32)

    # ---- content-position energy via the bucket trick ----
    # T[h,q,b] = Qh[h,q,:] . rel_emb[b,:]   (MXU: (H*S, hd) @ (hd, NB))
    T = jnp.dot(Qh.reshape(H * S, hd), relt_ref[...],
                preferred_element_type=jnp.float32).reshape(H, S, NB)

    qi = jax.lax.broadcasted_iota(jnp.int32, (S, S), 0)
    kj = jax.lax.broadcasted_iota(jnp.int32, (S, S), 1)
    bucket = jnp.clip(qi - kj, -max_rel, max_rel) + max_rel     # (S, S) int32

    e2 = jnp.zeros((H, S, S), jnp.float32)
    for b in range(NB):                                         # NB = 9, static unroll
        mb = (bucket == b).astype(jnp.float32)[None, :, :]      # (1, S, S)
        e2 = e2 + T[:, :, b:b + 1] * mb                         # (H,S,1) * (1,S,S)

    energy = e1 + e2 + bias[None, :, :]

    # ---- softmax over keys (f32; reciprocal on the EUP) ----
    m = jnp.max(energy, axis=-1, keepdims=True)
    p = jnp.exp(energy - m)
    attn = p * pl.reciprocal(jnp.sum(p, axis=-1, keepdims=True), approx=True)

    # ---- content context: batched over heads on the MXU ----
    ctx = jnp.einsum('hqk,hkd->hqd', attn, Vh, preferred_element_type=jnp.float32)

    # ---- position context via the bucket trick (K=9, so rank-1 updates) ----
    rel = rel_ref[...]                                          # (NB, hd)
    for b in range(NB):
        mb = (bucket == b).astype(jnp.float32)[None, :, :]
        a_b = jnp.sum(attn * mb, axis=-1)                       # (H, S)
        ctx = ctx + a_b[:, :, None] * rel[b:b + 1][None, :, :]  # (H,S,1)*(1,1,hd)

    # ---- merge heads lane-dense and apply output projection ----
    ctx_flat = jnp.concatenate([ctx[h] for h in range(H)], axis=-1)   # (S, D)
    attn_out = jnp.dot(ctx_flat, wo_ref[...],
                       preferred_element_type=jnp.float32) + bo_ref[...]

    # ---- residual + LayerNorm 1 ----
    y = x + attn_out
    mu = jnp.mean(y, axis=-1, keepdims=True)
    var = jnp.mean((y - mu) ** 2, axis=-1, keepdims=True)
    y = (y - mu) * jax.lax.rsqrt(var + eps) * ln1_g_ref[...] + ln1_b_ref[...]

    # ---- position-wise feed-forward ----
    hdn = jnp.maximum(
        jnp.dot(y, w1_ref[...], preferred_element_type=jnp.float32) + b1_ref[...],
        0.0)
    f = jnp.dot(hdn, w2_ref[...], preferred_element_type=jnp.float32) + b2_ref[...]

    # ---- residual + LayerNorm 2 ----
    z = y + f
    mu2 = jnp.mean(z, axis=-1, keepdims=True)
    var2 = jnp.mean((z - mu2) ** 2, axis=-1, keepdims=True)
    z = (z - mu2) * jax.lax.rsqrt(var2 + eps) * ln2_g_ref[...] + ln2_b_ref[...]

    out_ref[0] = z


def encoder_layer(src, mask, params, *, n_heads, max_rel=4, eps=1e-5):
    B, S, D = src.shape
    hd = D // n_heads
    P = params["w1"].shape[1]
    NB = 2 * max_rel + 1
    inv_scale = 1.0 / float(np.sqrt(hd))

    # Pack Q/K/V weights into one (D, 3D) operand for a single fused matmul.
    wqkv = jnp.concatenate([params["wq"], params["wk"], params["wv"]], axis=1)
    bqkv = jnp.concatenate([params["bq"], params["bk"], params["bv"]], axis=1)
    rel = params["rel_emb"].astype(jnp.float32)      # (NB, hd)
    rel_t = rel.T                                    # (hd, NB)
    # Additive mask bias precomputed once, reused by every head in-kernel.
    bias = jnp.where(mask == 0, jnp.float32(-1e10), jnp.float32(0.0))

    def full(shape):
        return pl.BlockSpec(shape, lambda *_: (0,) * len(shape))

    in_specs = [
        pl.BlockSpec((1, S, D), lambda b: (b, 0, 0)),   # src
        pl.BlockSpec((1, S, S), lambda b: (b, 0, 0)),   # additive mask bias
        full((D, 3 * D)), full((1, 3 * D)),             # W_qkv, b_qkv
        full((D, D)), full((1, D)),                     # W_o, b_o
        full((NB, hd)), full((hd, NB)),                 # rel_emb, rel_emb^T
        full((1, D)), full((1, D)),                     # ln1 gamma, beta
        full((D, P)), full((1, P)),                     # W1, b1
        full((P, D)), full((1, D)),                     # W2, b2
        full((1, D)), full((1, D)),                     # ln2 gamma, beta
    ]

    # Scoped-VMEM limit sized from the resident set (weights are grid-invariant,
    # activations are whole-sequence/all-heads).  Capped at 64 MiB (v7x-safe).
    fp = 4
    weight_bytes = fp * (3 * D * D + 3 * D + D * D + D + D * P + P + P * D + D
                         + 4 * D + 2 * NB * hd)
    act_bytes = fp * (2 * S * D + 2 * S * S + 3 * S * D
                      + 3 * n_heads * S * hd     # Qh / Kh / Vh
                      + 3 * n_heads * S * S      # e1 / e2 / attn
                      + 2 * n_heads * S * hd     # ctx (+ merged copy)
                      + S * P)                   # FFN hidden
    vmem_limit = int(min(max(32 * 1024 * 1024, 2 * (weight_bytes + act_bytes)),
                         64 * 1024 * 1024))

    kernel = functools.partial(
        encoder_layer_kernel,
        n_heads=n_heads, head_dim=hd, inv_scale=inv_scale, eps=eps,
        max_rel=max_rel)

    return pl.pallas_call(
        kernel,
        out_shape=jax.ShapeDtypeStruct((B, S, D), jnp.float32),
        grid=(B,),
        in_specs=in_specs,
        out_specs=pl.BlockSpec((1, S, D), lambda b: (b, 0, 0)),
        compiler_params=pltpu.CompilerParams(
            dimension_semantics=("parallel",),
            vmem_limit_bytes=vmem_limit),
    )(
        src, bias,
        wqkv, bqkv, params["wo"], params["bo"],
        rel, rel_t,
        params["ln1_g"], params["ln1_b"],
        params["w1"], params["b1"], params["w2"], params["b2"],
        params["ln2_g"], params["ln2_b"],
    )


# ---------------- pure-JAX reference (mirrors the PyTorch forward) ----------
def ref_encoder_layer(src, mask, params, *, n_heads, max_rel=4, eps=1e-5):
    B, S, D = src.shape
    hd = D // n_heads
    scale = np.sqrt(hd)

    pos_i = jnp.arange(S)[:, None]
    pos_j = jnp.arange(S)[None, :]
    pos_abs = jnp.clip(pos_i - pos_j, -max_rel, max_rel) + max_rel
    R = params["rel_emb"][pos_abs]  # (S, S, hd)

    lin = lambda x, w, b: x @ w + b
    Q = lin(src, params["wq"], params["bq"]).reshape(B, S, n_heads, hd).transpose(0, 2, 1, 3)
    K = lin(src, params["wk"], params["bk"]).reshape(B, S, n_heads, hd).transpose(0, 2, 1, 3)
    V = lin(src, params["wv"], params["bv"]).reshape(B, S, n_heads, hd).transpose(0, 2, 1, 3)

    e1 = Q @ K.transpose(0, 1, 3, 2)
    e2 = jnp.einsum("bhqd,qkd->bhqk", Q, R)
    energy = (e1 + e2) / scale
    energy = jnp.where(mask[:, None, :, :] == 0, -1e10, energy)
    attn = jax.nn.softmax(energy, axis=-1)
    ctx = attn @ V + jnp.einsum("bhqk,qkd->bhqd", attn, R)
    x_attn = ctx.transpose(0, 2, 1, 3).reshape(B, S, D)
    x_attn = lin(x_attn, params["wo"], params["bo"])

    def layer_norm(x, g, b):
        mu = jnp.mean(x, axis=-1, keepdims=True)
        var = jnp.mean((x - mu) ** 2, axis=-1, keepdims=True)
        return (x - mu) * jax.lax.rsqrt(var + eps) * g + b

    y = layer_norm(src + x_attn, params["ln1_g"], params["ln1_b"])
    f = lin(jnp.maximum(lin(y, params["w1"], params["b1"]), 0.0),
            params["w2"], params["b2"])
    return layer_norm(y + f, params["ln2_g"], params["ln2_b"])


if __name__ == "__main__":
    B, S, D, H, P = 2, 8, 32, 4, 64
    hd = D // H
    max_rel = 4

    key = jax.random.PRNGKey(0)
    ks = jax.random.split(key, 12)

    def w(k, shape, s=0.05):
        return (jax.random.normal(k, shape, jnp.float32) * s)

    params = {
        "wq": w(ks[0], (D, D)), "bq": w(ks[1], (1, D)),
        "wk": w(ks[2], (D, D)), "bk": w(ks[3], (1, D)),
        "wv": w(ks[4], (D, D)), "bv": w(ks[5], (1, D)),
        "wo": w(ks[6], (D, D)), "bo": w(ks[7], (1, D)),
        "rel_emb": w(ks[8], (2 * max_rel + 1, hd)),
        "w1": w(ks[9], (D, P)), "b1": jnp.zeros((1, P), jnp.float32),
        "w2": w(ks[10], (P, D)), "b2": jnp.zeros((1, D), jnp.float32),
        "ln1_g": jnp.ones((1, D), jnp.float32), "ln1_b": jnp.zeros((1, D), jnp.float32),
        "ln2_g": jnp.ones((1, D), jnp.float32), "ln2_b": jnp.zeros((1, D), jnp.float32),
    }

    src = jax.random.normal(ks[11], (B, S, D), jnp.float32)
    # src_mask: 1 = attend, 0 = masked. Mask last two keys of the 2nd batch elem.
    mask = jnp.ones((B, S, S), jnp.float32).at[1, :, -2:].set(0.0)

    out = encoder_layer(src, mask, params, n_heads=H, max_rel=max_rel)
    out = jax.block_until_ready(out)

    ref = ref_encoder_layer(src, mask, params, n_heads=H, max_rel=max_rel)
    np.testing.assert_allclose(np.asarray(out), np.asarray(ref), atol=2e-3, rtol=2e-3)

    print("KERNEL_OK")
</pallas_src>

<mosaic_0001>
module attributes {stable_mosaic.version = 11 : i64} {
  func.func @encoder_layer_kernel(%arg0: i32, %arg1: memref<1x8x32xf32, #tpu.memory_space<vmem>>, %arg2: memref<1x8x8xf32, #tpu.memory_space<vmem>>, %arg3: memref<32x96xf32, #tpu.memory_space<vmem>>, %arg4: memref<1x96xf32, #tpu.memory_space<vmem>>, %arg5: memref<32x32xf32, #tpu.memory_space<vmem>>, %arg6: memref<1x32xf32, #tpu.memory_space<vmem>>, %arg7: memref<9x8xf32, #tpu.memory_space<vmem>>, %arg8: memref<8x9xf32, #tpu.memory_space<vmem>>, %arg9: memref<1x32xf32, #tpu.memory_space<vmem>>, %arg10: memref<1x32xf32, #tpu.memory_space<vmem>>, %arg11: memref<32x64xf32, #tpu.memory_space<vmem>>, %arg12: memref<1x64xf32, #tpu.memory_space<vmem>>, %arg13: memref<64x32xf32, #tpu.memory_space<vmem>>, %arg14: memref<1x32xf32, #tpu.memory_space<vmem>>, %arg15: memref<1x32xf32, #tpu.memory_space<vmem>>, %arg16: memref<1x32xf32, #tpu.memory_space<vmem>>, %arg17: memref<1x8x32xf32, #tpu.memory_space<vmem>>) attributes {dimension_semantics = [#tpu.dimension_semantics<parallel>], iteration_bounds = array<i64: 2>, scalar_prefetch = 0 : i64, scratch_operands = 0 : i64, tpu.core_type = #tpu.core_type<tc>, window_params = [{transform_indices = @transform_0, window_bounds = array<i64: 1, 8, 32>}, {transform_indices = @transform_1, window_bounds = array<i64: 1, 8, 8>}, {pipeline_mode = #tpu.pipeline_mode<synchronous>, transform_indices = @transform_2, window_bounds = array<i64: 32, 96>}, {pipeline_mode = #tpu.pipeline_mode<synchronous>, transform_indices = @transform_3, window_bounds = array<i64: 1, 96>}, {pipeline_mode = #tpu.pipeline_mode<synchronous>, transform_indices = @transform_4, window_bounds = array<i64: 32, 32>}, {pipeline_mode = #tpu.pipeline_mode<synchronous>, transform_indices = @transform_5, window_bounds = array<i64: 1, 32>}, {pipeline_mode = #tpu.pipeline_mode<synchronous>, transform_indices = @transform_6, window_bounds = array<i64: 9, 8>}, {pipeline_mode = #tpu.pipeline_mode<synchronous>, transform_indices = @transform_7, window_bounds = array<i64: 8, 9>}, {pipeline_mode = #tpu.pipeline_mode<synchronous>, transform_indices = @transform_8, window_bounds = array<i64: 1, 32>}, {pipeline_mode = #tpu.pipeline_mode<synchronous>, transform_indices = @transform_9, window_bounds = array<i64: 1, 32>}, {pipeline_mode = #tpu.pipeline_mode<synchronous>, transform_indices = @transform_10, window_bounds = array<i64: 32, 64>}, {pipeline_mode = #tpu.pipeline_mode<synchronous>, transform_indices = @transform_11, window_bounds = array<i64: 1, 64>}, {pipeline_mode = #tpu.pipeline_mode<synchronous>, transform_indices = @transform_12, window_bounds = array<i64: 64, 32>}, {pipeline_mode = #tpu.pipeline_mode<synchronous>, transform_indices = @transform_13, window_bounds = array<i64: 1, 32>}, {pipeline_mode = #tpu.pipeline_mode<synchronous>, transform_indices = @transform_14, window_bounds = array<i64: 1, 32>}, {pipeline_mode = #tpu.pipeline_mode<synchronous>, transform_indices = @transform_15, window_bounds = array<i64: 1, 32>}, {transform_indices = @transform_16, window_bounds = array<i64: 1, 8, 32>}]} {
    %c0 = arith.constant 0 : index
    %c0_0 = arith.constant 0 : index
    %c0_1 = arith.constant 0 : index
    %0 = vector.load %arg1[%c0, %c0_0, %c0_1] : memref<1x8x32xf32, #tpu.memory_space<vmem>>, vector<1x8x32xf32>
    %1 = vector.shape_cast %0 : vector<1x8x32xf32> to vector<8x32xf32>
    %c0_2 = arith.constant 0 : index
    %c0_3 = arith.constant 0 : index
    %c0_4 = arith.constant 0 : index
    %2 = vector.load %arg2[%c0_2, %c0_3, %c0_4] : memref<1x8x8xf32, #tpu.memory_space<vmem>>, vector<1x8x8xf32>
    %3 = vector.shape_cast %2 : vector<1x8x8xf32> to vector<8x8xf32>
    %c0_5 = arith.constant 0 : index
    %c0_6 = arith.constant 0 : index
    %4 = vector.load %arg3[%c0_5, %c0_6] : memref<32x96xf32, #tpu.memory_space<vmem>>, vector<32x96xf32>
    %cst = arith.constant dense<0.000000e+00> : vector<8x96xf32>
    %5 = tpu.matmul %1, %4, %cst {dimension_numbers = #tpu.dot_dimension_numbers<[1], [0], [0], [1], [0, 0, 1, 1], [], []>} : vector<8x32xf32>, vector<32x96xf32>, vector<8x96xf32> -> vector<8x96xf32>
    %c0_7 = arith.constant 0 : index
    %c0_8 = arith.constant 0 : index
    %6 = vector.load %arg4[%c0_7, %c0_8] : memref<1x96xf32, #tpu.memory_space<vmem>>, vector<1x96xf32>
    %7 = vector.broadcast %6 : vector<1x96xf32> to vector<8x96xf32>
    %8 = arith.addf %5, %7 : vector<8x96xf32>
    %9 = vector.extract_strided_slice %8 {offsets = [0, 0], sizes = [8, 32], strides = [1, 1]} : vector<8x96xf32> to vector<8x32xf32>
    %cst_9 = arith.constant 0.353553385 : f32
    %10 = vector.broadcast %cst_9 : f32 to vector<8x32xf32>
    %11 = arith.mulf %9, %10 : vector<8x32xf32>
    %12 = vector.extract_strided_slice %8 {offsets = [0, 32], sizes = [8, 32], strides = [1, 1]} : vector<8x96xf32> to vector<8x32xf32>
    %13 = vector.extract_strided_slice %8 {offsets = [0, 64], sizes = [8, 32], strides = [1, 1]} : vector<8x96xf32> to vector<8x32xf32>
    %14 = vector.extract_strided_slice %11 {offsets = [0, 0], sizes = [8, 8], strides = [1, 1]} : vector<8x32xf32> to vector<8x8xf32>
    %15 = vector.extract_strided_slice %11 {offsets = [0, 8], sizes = [8, 8], strides = [1, 1]} : vector<8x32xf32> to vector<8x8xf32>
    %16 = vector.extract_strided_slice %11 {offsets = [0, 16], sizes = [8, 8], strides = [1, 1]} : vector<8x32xf32> to vector<8x8xf32>
    %17 = vector.extract_strided_slice %11 {offsets = [0, 24], sizes = [8, 8], strides = [1, 1]} : vector<8x32xf32> to vector<8x8xf32>
    %18 = vector.shape_cast %14 : vector<8x8xf32> to vector<1x8x8xf32>
    %19 = vector.shape_cast %15 : vector<8x8xf32> to vector<1x8x8xf32>
    %20 = vector.shape_cast %16 : vector<8x8xf32> to vector<1x8x8xf32>
    %21 = vector.shape_cast %17 : vector<8x8xf32> to vector<1x8x8xf32>
    %22 = tpu.concatenate %18, %19, %20, %21 in 0 : vector<1x8x8xf32>, vector<1x8x8xf32>, vector<1x8x8xf32>, vector<1x8x8xf32> -> vector<4x8x8xf32>
    %23 = vector.extract_strided_slice %12 {offsets = [0, 0], sizes = [8, 8], strides = [1, 1]} : vector<8x32xf32> to vector<8x8xf32>
    %24 = vector.extract_strided_slice %12 {offsets = [0, 8], sizes = [8, 8], strides = [1, 1]} : vector<8x32xf32> to vector<8x8xf32>
    %25 = vector.extract_strided_slice %12 {offsets = [0, 16], sizes = [8, 8], strides = [1, 1]} : vector<8x32xf32> to vector<8x8xf32>
    %26 = vector.extract_strided_slice %12 {offsets = [0, 24], sizes = [8, 8], strides = [1, 1]} : vector<8x32xf32> to vector<8x8xf32>
    %27 = vector.shape_cast %23 : vector<8x8xf32> to vector<1x8x8xf32>
    %28 = vector.shape_cast %24 : vector<8x8xf32> to vector<1x8x8xf32>
    %29 = vector.shape_cast %25 : vector<8x8xf32> to vector<1x8x8xf32>
    %30 = vector.shape_cast %26 : vector<8x8xf32> to vector<1x8x8xf32>
    %31 = tpu.concatenate %27, %28, %29, %30 in 0 : vector<1x8x8xf32>, vector<1x8x8xf32>, vector<1x8x8xf32>, vector<1x8x8xf32> -> vector<4x8x8xf32>
    %32 = vector.extract_strided_slice %13 {offsets = [0, 0], sizes = [8, 8], strides = [1, 1]} : vector<8x32xf32> to vector<8x8xf32>
    %33 = vector.extract_strided_slice %13 {offsets = [0, 8], sizes = [8, 8], strides = [1, 1]} : vector<8x32xf32> to vector<8x8xf32>
    %34 = vector.extract_strided_slice %13 {offsets = [0, 16], sizes = [8, 8], strides = [1, 1]} : vector<8x32xf32> to vector<8x8xf32>
    %35 = vector.extract_strided_slice %13 {offsets = [0, 24], sizes = [8, 8], strides = [1, 1]} : vector<8x32xf32> to vector<8x8xf32>
    %36 = vector.shape_cast %32 : vector<8x8xf32> to vector<1x8x8xf32>
    %37 = vector.shape_cast %33 : vector<8x8xf32> to vector<1x8x8xf32>
    %38 = vector.shape_cast %34 : vector<8x8xf32> to vector<1x8x8xf32>
    %39 = vector.shape_cast %35 : vector<8x8xf32> to vector<1x8x8xf32>
    %40 = tpu.concatenate %36, %37, %38, %39 in 0 : vector<1x8x8xf32>, vector<1x8x8xf32>, vector<1x8x8xf32>, vector<1x8x8xf32> -> vector<4x8x8xf32>
    "tpu.trace_start"() <{level = 10 : i32, message = "hqd,hkd->hqk"}> : () -> ()
    %cst_10 = arith.constant dense<0.000000e+00> : vector<4x8x8xf32>
    %41 = tpu.matmul %22, %31, %cst_10 {dimension_numbers = #tpu.dot_dimension_numbers<[2], [2], [1], [1], [0, 0, 0, 1, 1, 1], [0], [0]>} : vector<4x8x8xf32>, vector<4x8x8xf32>, vector<4x8x8xf32> -> vector<4x8x8xf32>
    "tpu.trace_stop"() : () -> ()
    %42 = vector.shape_cast %22 : vector<4x8x8xf32> to vector<32x8xf32>
    %c0_11 = arith.constant 0 : index
    %c0_12 = arith.constant 0 : index
    %43 = vector.load %arg8[%c0_11, %c0_12] : memref<8x9xf32, #tpu.memory_space<vmem>>, vector<8x9xf32>
    %cst_13 = arith.constant dense<0.000000e+00> : vector<32x9xf32>
    %44 = tpu.matmul %42, %43, %cst_13 {dimension_numbers = #tpu.dot_dimension_numbers<[1], [0], [0], [1], [0, 0, 1, 1], [], []>} : vector<32x8xf32>, vector<8x9xf32>, vector<32x9xf32> -> vector<32x9xf32>
    %45 = vector.shape_cast %44 : vector<32x9xf32> to vector<4x8x9xf32>
    %46 = tpu.iota {dimensions = array<i32: 0>} : vector<8x8xi32>
    %47 = tpu.iota {dimensions = array<i32: 1>} : vector<8x8xi32>
    %48 = arith.subi %46, %47 : vector<8x8xi32>
    %c-4_i32 = arith.constant -4 : i32
    %c4_i32 = arith.constant 4 : i32
    %49 = vector.broadcast %c-4_i32 : i32 to vector<8x8xi32>
    %50 = arith.maxsi %49, %48 : vector<8x8xi32>
    %51 = vector.broadcast %c4_i32 : i32 to vector<8x8xi32>
    %52 = arith.minsi %51, %50 : vector<8x8xi32>
    %c4_i32_14 = arith.constant 4 : i32
    %53 = vector.broadcast %c4_i32_14 : i32 to vector<8x8xi32>
    %54 = arith.addi %52, %53 : vector<8x8xi32>
    %cst_15 = arith.constant 0.000000e+00 : f32
    %55 = vector.broadcast %cst_15 : f32 to vector<4x8x8xf32>
    %c0_i32 = arith.constant 0 : i32
    %56 = vector.broadcast %c0_i32 : i32 to vector<8x8xi32>
    %57 = arith.cmpi eq, %54, %56 : vector<8x8xi32>
    %58 = arith.extui %57 : vector<8x8xi1> to vector<8x8xi32>
    %59 = arith.sitofp %58 : vector<8x8xi32> to vector<8x8xf32>
    %60 = vector.shape_cast %59 : vector<8x8xf32> to vector<1x8x8xf32>
    %61 = vector.extract_strided_slice %45 {offsets = [0, 0, 0], sizes = [4, 8, 1], strides = [1, 1, 1]} : vector<4x8x9xf32> to vector<4x8x1xf32>
    %62 = vector.broadcast %61 : vector<4x8x1xf32> to vector<4x8x8xf32>
    %63 = vector.broadcast %60 : vector<1x8x8xf32> to vector<4x8x8xf32>
    %64 = arith.mulf %62, %63 : vector<4x8x8xf32>
    %65 = arith.addf %55, %64 : vector<4x8x8xf32>
    %c1_i32 = arith.constant 1 : i32
    %66 = vector.broadcast %c1_i32 : i32 to vector<8x8xi32>
    %67 = arith.cmpi eq, %54, %66 : vector<8x8xi32>
    %68 = arith.extui %67 : vector<8x8xi1> to vector<8x8xi32>
    %69 = arith.sitofp %68 : vector<8x8xi32> to vector<8x8xf32>
    %70 = vector.shape_cast %69 : vector<8x8xf32> to vector<1x8x8xf32>
    %71 = vector.extract_strided_slice %45 {offsets = [0, 0, 1], sizes = [4, 8, 1], strides = [1, 1, 1]} : vector<4x8x9xf32> to vector<4x8x1xf32>
    %72 = vector.broadcast %71 : vector<4x8x1xf32> to vector<4x8x8xf32>
    %73 = vector.broadcast %70 : vector<1x8x8xf32> to vector<4x8x8xf32>
    %74 = arith.mulf %72, %73 : vector<4x8x8xf32>
    %75 = arith.addf %65, %74 : vector<4x8x8xf32>
    %c2_i32 = arith.constant 2 : i32
    %76 = vector.broadcast %c2_i32 : i32 to vector<8x8xi32>
    %77 = arith.cmpi eq, %54, %76 : vector<8x8xi32>
    %78 = arith.extui %77 : vector<8x8xi1> to vector<8x8xi32>
    %79 = arith.sitofp %78 : vector<8x8xi32> to vector<8x8xf32>
    %80 = vector.shape_cast %79 : vector<8x8xf32> to vector<1x8x8xf32>
    %81 = vector.extract_strided_slice %45 {offsets = [0, 0, 2], sizes = [4, 8, 1], strides = [1, 1, 1]} : vector<4x8x9xf32> to vector<4x8x1xf32>
    %82 = vector.broadcast %81 : vector<4x8x1xf32> to vector<4x8x8xf32>
    %83 = vector.broadcast %80 : vector<1x8x8xf32> to vector<4x8x8xf32>
    %84 = arith.mulf %82, %83 : vector<4x8x8xf32>
    %85 = arith.addf %75, %84 : vector<4x8x8xf32>
    %c3_i32 = arith.constant 3 : i32
    %86 = vector.broadcast %c3_i32 : i32 to vector<8x8xi32>
    %87 = arith.cmpi eq, %54, %86 : vector<8x8xi32>
    %88 = arith.extui %87 : vector<8x8xi1> to vector<8x8xi32>
    %89 = arith.sitofp %88 : vector<8x8xi32> to vector<8x8xf32>
    %90 = vector.shape_cast %89 : vector<8x8xf32> to vector<1x8x8xf32>
    %91 = vector.extract_strided_slice %45 {offsets = [0, 0, 3], sizes = [4, 8, 1], strides = [1, 1, 1]} : vector<4x8x9xf32> to vector<4x8x1xf32>
    %92 = vector.broadcast %91 : vector<4x8x1xf32> to vector<4x8x8xf32>
    %93 = vector.broadcast %90 : vector<1x8x8xf32> to vector<4x8x8xf32>
    %94 = arith.mulf %92, %93 : vector<4x8x8xf32>
    %95 = arith.addf %85, %94 : vector<4x8x8xf32>
    %c4_i32_16 = arith.constant 4 : i32
    %96 = vector.broadcast %c4_i32_16 : i32 to vector<8x8xi32>
    %97 = arith.cmpi eq, %54, %96 : vector<8x8xi32>
    %98 = arith.extui %97 : vector<8x8xi1> to vector<8x8xi32>
    %99 = arith.sitofp %98 : vector<8x8xi32> to vector<8x8xf32>
    %100 = vector.shape_cast %99 : vector<8x8xf32> to vector<1x8x8xf32>
    %101 = vector.extract_strided_slice %45 {offsets = [0, 0, 4], sizes = [4, 8, 1], strides = [1, 1, 1]} : vector<4x8x9xf32> to vector<4x8x1xf32>
    %102 = vector.broadcast %101 : vector<4x8x1xf32> to vector<4x8x8xf32>
    %103 = vector.broadcast %100 : vector<1x8x8xf32> to vector<4x8x8xf32>
    %104 = arith.mulf %102, %103 : vector<4x8x8xf32>
    %105 = arith.addf %95, %104 : vector<4x8x8xf32>
    %c5_i32 = arith.constant 5 : i32
    %106 = vector.broadcast %c5_i32 : i32 to vector<8x8xi32>
    %107 = arith.cmpi eq, %54, %106 : vector<8x8xi32>
    %108 = arith.extui %107 : vector<8x8xi1> to vector<8x8xi32>
    %109 = arith.sitofp %108 : vector<8x8xi32> to vector<8x8xf32>
    %110 = vector.shape_cast %109 : vector<8x8xf32> to vector<1x8x8xf32>
    %111 = vector.extract_strided_slice %45 {offsets = [0, 0, 5], sizes = [4, 8, 1], strides = [1, 1, 1]} : vector<4x8x9xf32> to vector<4x8x1xf32>
    %112 = vector.broadcast %111 : vector<4x8x1xf32> to vector<4x8x8xf32>
    %113 = vector.broadcast %110 : vector<1x8x8xf32> to vector<4x8x8xf32>
    %114 = arith.mulf %112, %113 : vector<4x8x8xf32>
    %115 = arith.addf %105, %114 : vector<4x8x8xf32>
    %c6_i32 = arith.constant 6 : i32
    %116 = vector.broadcast %c6_i32 : i32 to vector<8x8xi32>
    %117 = arith.cmpi eq, %54, %116 : vector<8x8xi32>
    %118 = arith.extui %117 : vector<8x8xi1> to vector<8x8xi32>
    %119 = arith.sitofp %118 : vector<8x8xi32> to vector<8x8xf32>
    %120 = vector.shape_cast %119 : vector<8x8xf32> to vector<1x8x8xf32>
    %121 = vector.extract_strided_slice %45 {offsets = [0, 0, 6], sizes = [4, 8, 1], strides = [1, 1, 1]} : vector<4x8x9xf32> to vector<4x8x1xf32>
    %122 = vector.broadcast %121 : vector<4x8x1xf32> to vector<4x8x8xf32>
    %123 = vector.broadcast %120 : vector<1x8x8xf32> to vector<4x8x8xf32>
    %124 = arith.mulf %122, %123 : vector<4x8x8xf32>
    %125 = arith.addf %115, %124 : vector<4x8x8xf32>
    %c7_i32 = arith.constant 7 : i32
    %126 = vector.broadcast %c7_i32 : i32 to vector<8x8xi32>
    %127 = arith.cmpi eq, %54, %126 : vector<8x8xi32>
    %128 = arith.extui %127 : vector<8x8xi1> to vector<8x8xi32>
    %129 = arith.sitofp %128 : vector<8x8xi32> to vector<8x8xf32>
    %130 = vector.shape_cast %129 : vector<8x8xf32> to vector<1x8x8xf32>
    %131 = vector.extract_strided_slice %45 {offsets = [0, 0, 7], sizes = [4, 8, 1], strides = [1, 1, 1]} : vector<4x8x9xf32> to vector<4x8x1xf32>
    %132 = vector.broadcast %131 : vector<4x8x1xf32> to vector<4x8x8xf32>
    %133 = vector.broadcast %130 : vector<1x8x8xf32> to vector<4x8x8xf32>
    %134 = arith.mulf %132, %133 : vector<4x8x8xf32>
    %135 = arith.addf %125, %134 : vector<4x8x8xf32>
    %c8_i32 = arith.constant 8 : i32
    %136 = vector.broadcast %c8_i32 : i32 to vector<8x8xi32>
    %137 = arith.cmpi eq, %54, %136 : vector<8x8xi32>
    %138 = arith.extui %137 : vector<8x8xi1> to vector<8x8xi32>
    %139 = arith.sitofp %138 : vector<8x8xi32> to vector<8x8xf32>
    %140 = vector.shape_cast %139 : vector<8x8xf32> to vector<1x8x8xf32>
    %141 = vector.extract_strided_slice %45 {offsets = [0, 0, 8], sizes = [4, 8, 1], strides = [1, 1, 1]} : vector<4x8x9xf32> to vector<4x8x1xf32>
    %142 = vector.broadcast %141 : vector<4x8x1xf32> to vector<4x8x8xf32>
    %143 = vector.broadcast %140 : vector<1x8x8xf32> to vector<4x8x8xf32>
    %144 = arith.mulf %142, %143 : vector<4x8x8xf32>
    %145 = arith.addf %135, %144 : vector<4x8x8xf32>
    %146 = arith.addf %41, %145 : vector<4x8x8xf32>
    %147 = vector.shape_cast %3 : vector<8x8xf32> to vector<1x8x8xf32>
    %148 = vector.broadcast %147 : vector<1x8x8xf32> to vector<4x8x8xf32>
    %149 = arith.addf %146, %148 : vector<4x8x8xf32>
    %cst_17 = arith.constant dense<0xFF800000> : vector<4x8xf32>
    %150 = vector.multi_reduction <maximumf>, %149, %cst_17 [2] : vector<4x8x8xf32> to vector<4x8xf32>
    %151 = vector.shape_cast %150 : vector<4x8xf32> to vector<4x8x1xf32>
    %152 = vector.broadcast %151 : vector<4x8x1xf32> to vector<4x8x8xf32>
    %153 = arith.subf %149, %152 : vector<4x8x8xf32>
    %154 = math.exp %153 : vector<4x8x8xf32>
    %cst_18 = arith.constant dense<0.000000e+00> : vector<4x8xf32>
    %155 = vector.multi_reduction <add>, %154, %cst_18 [2] : vector<4x8x8xf32> to vector<4x8xf32>
    %156 = vector.shape_cast %155 : vector<4x8xf32> to vector<4x8x1xf32>
    %157 = tpu.reciprocal %156 {approx = true} : vector<4x8x1xf32> -> vector<4x8x1xf32>
    %158 = vector.broadcast %157 : vector<4x8x1xf32> to vector<4x8x8xf32>
    %159 = arith.mulf %154, %158 : vector<4x8x8xf32>
    "tpu.trace_start"() <{level = 10 : i32, message = "hqk,hkd->hqd"}> : () -> ()
    %cst_19 = arith.constant dense<0.000000e+00> : vector<4x8x8xf32>
    %160 = tpu.matmul %159, %40, %cst_19 {dimension_numbers = #tpu.dot_dimension_numbers<[2], [1], [1], [2], [0, 0, 0, 1, 1, 2], [0], [0]>} : vector<4x8x8xf32>, vector<4x8x8xf32>, vector<4x8x8xf32> -> vector<4x8x8xf32>
    "tpu.trace_stop"() : () -> ()
    %c0_20 = arith.constant 0 : index
    %c0_21 = arith.constant 0 : index
    %161 = vector.load %arg7[%c0_20, %c0_21] : memref<9x8xf32, #tpu.memory_space<vmem>>, vector<9x8xf32>
    %c0_i32_22 = arith.constant 0 : i32
    %162 = vector.broadcast %c0_i32_22 : i32 to vector<8x8xi32>
    %163 = arith.cmpi eq, %54, %162 : vector<8x8xi32>
    %164 = arith.extui %163 : vector<8x8xi1> to vector<8x8xi32>
    %165 = arith.sitofp %164 : vector<8x8xi32> to vector<8x8xf32>
    %166 = vector.shape_cast %165 : vector<8x8xf32> to vector<1x8x8xf32>
    %167 = vector.broadcast %166 : vector<1x8x8xf32> to vector<4x8x8xf32>
    %168 = arith.mulf %159, %167 : vector<4x8x8xf32>
    %cst_23 = arith.constant dense<0.000000e+00> : vector<4x8xf32>
    %169 = vector.multi_reduction <add>, %168, %cst_23 [2] : vector<4x8x8xf32> to vector<4x8xf32>
    %170 = vector.shape_cast %169 : vector<4x8xf32> to vector<4x8x1xf32>
    %171 = vector.extract_strided_slice %161 {offsets = [0, 0], sizes = [1, 8], strides = [1, 1]} : vector<9x8xf32> to vector<1x8xf32>
    %172 = vector.shape_cast %171 : vector<1x8xf32> to vector<1x1x8xf32>
    %173 = vector.broadcast %170 : vector<4x8x1xf32> to vector<4x8x8xf32>
    %174 = vector.broadcast %172 : vector<1x1x8xf32> to vector<4x8x8xf32>
    %175 = arith.mulf %173, %174 : vector<4x8x8xf32>
    %176 = arith.addf %160, %175 : vector<4x8x8xf32>
    %c1_i32_24 = arith.constant 1 : i32
    %177 = vector.broadcast %c1_i32_24 : i32 to vector<8x8xi32>
    %178 = arith.cmpi eq, %54, %177 : vector<8x8xi32>
    %179 = arith.extui %178 : vector<8x8xi1> to vector<8x8xi32>
    %180 = arith.sitofp %179 : vector<8x8xi32> to vector<8x8xf32>
    %181 = vector.shape_cast %180 : vector<8x8xf32> to vector<1x8x8xf32>
    %182 = vector.broadcast %181 : vector<1x8x8xf32> to vector<4x8x8xf32>
    %183 = arith.mulf %159, %182 : vector<4x8x8xf32>
    %cst_25 = arith.constant dense<0.000000e+00> : vector<4x8xf32>
    %184 = vector.multi_reduction <add>, %183, %cst_25 [2] : vector<4x8x8xf32> to vector<4x8xf32>
    %185 = vector.shape_cast %184 : vector<4x8xf32> to vector<4x8x1xf32>
    %186 = vector.extract_strided_slice %161 {offsets = [1, 0], sizes = [1, 8], strides = [1, 1]} : vector<9x8xf32> to vector<1x8xf32>
    %187 = vector.shape_cast %186 : vector<1x8xf32> to vector<1x1x8xf32>
    %188 = vector.broadcast %185 : vector<4x8x1xf32> to vector<4x8x8xf32>
    %189 = vector.broadcast %187 : vector<1x1x8xf32> to vector<4x8x8xf32>
    %190 = arith.mulf %188, %189 : vector<4x8x8xf32>
    %191 = arith.addf %176, %190 : vector<4x8x8xf32>
    %c2_i32_26 = arith.constant 2 : i32
    %192 = vector.broadcast %c2_i32_26 : i32 to vector<8x8xi32>
    %193 = arith.cmpi eq, %54, %192 : vector<8x8xi32>
    %194 = arith.extui %193 : vector<8x8xi1> to vector<8x8xi32>
    %195 = arith.sitofp %194 : vector<8x8xi32> to vector<8x8xf32>
    %196 = vector.shape_cast %195 : vector<8x8xf32> to vector<1x8x8xf32>
    %197 = vector.broadcast %196 : vector<1x8x8xf32> to vector<4x8x8xf32>
    %198 = arith.mulf %159, %197 : vector<4x8x8xf32>
    %cst_27 = arith.constant dense<0.000000e+00> : vector<4x8xf32>
    %199 = vector.multi_reduction <add>, %198, %cst_27 [2] : vector<4x8x8xf32> to vector<4x8xf32>
    %200 = vector.shape_cast %199 : vector<4x8xf32> to vector<4x8x1xf32>
    %201 = vector.extract_strided_slice %161 {offsets = [2, 0], sizes = [1, 8], strides = [1, 1]} : vector<9x8xf32> to vector<1x8xf32>
    %202 = vector.shape_cast %201 : vector<1x8xf32> to vector<1x1x8xf32>
    %203 = vector.broadcast %200 : vector<4x8x1xf32> to vector<4x8x8xf32>
    %204 = vector.broadcast %202 : vector<1x1x8xf32> to vector<4x8x8xf32>
    %205 = arith.mulf %203, %204 : vector<4x8x8xf32>
    %206 = arith.addf %191, %205 : vector<4x8x8xf32>
    %c3_i32_28 = arith.constant 3 : i32
    %207 = vector.broadcast %c3_i32_28 : i32 to vector<8x8xi32>
    %208 = arith.cmpi eq, %54, %207 : vector<8x8xi32>
    %209 = arith.extui %208 : vector<8x8xi1> to vector<8x8xi32>
    %210 = arith.sitofp %209 : vector<8x8xi32> to vector<8x8xf32>
    %211 = vector.shape_cast %210 : vector<8x8xf32> to vector<1x8x8xf32>
    %212 = vector.broadcast %211 : vector<1x8x8xf32> to vector<4x8x8xf32>
    %213 = arith.mulf %159, %212 : vector<4x8x8xf32>
    %cst_29 = arith.constant dense<0.000000e+00> : vector<4x8xf32>
    %214 = vector.multi_reduction <add>, %213, %cst_29 [2] : vector<4x8x8xf32> to vector<4x8xf32>
    %215 = vector.shape_cast %214 : vector<4x8xf32> to vector<4x8x1xf32>
    %216 = vector.extract_strided_slice %161 {offsets = [3, 0], sizes = [1, 8], strides = [1, 1]} : vector<9x8xf32> to vector<1x8xf32>
    %217 = vector.shape_cast %216 : vector<1x8xf32> to vector<1x1x8xf32>
    %218 = vector.broadcast %215 : vector<4x8x1xf32> to vector<4x8x8xf32>
    %219 = vector.broadcast %217 : vector<1x1x8xf32> to vector<4x8x8xf32>
    %220 = arith.mulf %218, %219 : vector<4x8x8xf32>
    %221 = arith.addf %206, %220 : vector<4x8x8xf32>
    %c4_i32_30 = arith.constant 4 : i32
    %222 = vector.broadcast %c4_i32_30 : i32 to vector<8x8xi32>
    %223 = arith.cmpi eq, %54, %222 : vector<8x8xi32>
    %224 = arith.extui %223 : vector<8x8xi1> to vector<8x8xi32>
    %225 = arith.sitofp %224 : vector<8x8xi32> to vector<8x8xf32>
    %226 = vector.shape_cast %225 : vector<8x8xf32> to vector<1x8x8xf32>
    %227 = vector.broadcast %226 : vector<1x8x8xf32> to vector<4x8x8xf32>
    %228 = arith.mulf %159, %227 : vector<4x8x8xf32>
    %cst_31 = arith.constant dense<0.000000e+00> : vector<4x8xf32>
    %229 = vector.multi_reduction <add>, %228, %cst_31 [2] : vector<4x8x8xf32> to vector<4x8xf32>
    %230 = vector.shape_cast %229 : vector<4x8xf32> to vector<4x8x1xf32>
    %231 = vector.extract_strided_slice %161 {offsets = [4, 0], sizes = [1, 8], strides = [1, 1]} : vector<9x8xf32> to vector<1x8xf32>
    %232 = vector.shape_cast %231 : vector<1x8xf32> to vector<1x1x8xf32>
    %233 = vector.broadcast %230 : vector<4x8x1xf32> to vector<4x8x8xf32>
    %234 = vector.broadcast %232 : vector<1x1x8xf32> to vector<4x8x8xf32>
    %235 = arith.mulf %233, %234 : vector<4x8x8xf32>
    %236 = arith.addf %221, %235 : vector<4x8x8xf32>
    %c5_i32_32 = arith.constant 5 : i32
    %237 = vector.broadcast %c5_i32_32 : i32 to vector<8x8xi32>
    %238 = arith.cmpi eq, %54, %237 : vector<8x8xi32>
    %239 = arith.extui %238 : vector<8x8xi1> to vector<8x8xi32>
    %240 = arith.sitofp %239 : vector<8x8xi32> to vector<8x8xf32>
    %241 = vector.shape_cast %240 : vector<8x8xf32> to vector<1x8x8xf32>
    %242 = vector.broadcast %241 : vector<1x8x8xf32> to vector<4x8x8xf32>
    %243 = arith.mulf %159, %242 : vector<4x8x8xf32>
    %cst_33 = arith.constant dense<0.000000e+00> : vector<4x8xf32>
    %244 = vector.multi_reduction <add>, %243, %cst_33 [2] : vector<4x8x8xf32> to vector<4x8xf32>
    %245 = vector.shape_cast %244 : vector<4x8xf32> to vector<4x8x1xf32>
    %246 = vector.extract_strided_slice %161 {offsets = [5, 0], sizes = [1, 8], strides = [1, 1]} : vector<9x8xf32> to vector<1x8xf32>
    %247 = vector.shape_cast %246 : vector<1x8xf32> to vector<1x1x8xf32>
    %248 = vector.broadcast %245 : vector<4x8x1xf32> to vector<4x8x8xf32>
    %249 = vector.broadcast %247 : vector<1x1x8xf32> to vector<4x8x8xf32>
    %250 = arith.mulf %248, %249 : vector<4x8x8xf32>
    %251 = arith.addf %236, %250 : vector<4x8x8xf32>
    %c6_i32_34 = arith.constant 6 : i32
    %252 = vector.broadcast %c6_i32_34 : i32 to vector<8x8xi32>
    %253 = arith.cmpi eq, %54, %252 : vector<8x8xi32>
    %254 = arith.extui %253 : vector<8x8xi1> to vector<8x8xi32>
    %255 = arith.sitofp %254 : vector<8x8xi32> to vector<8x8xf32>
    %256 = vector.shape_cast %255 : vector<8x8xf32> to vector<1x8x8xf32>
    %257 = vector.broadcast %256 : vector<1x8x8xf32> to vector<4x8x8xf32>
    %258 = arith.mulf %159, %257 : vector<4x8x8xf32>
    %cst_35 = arith.constant dense<0.000000e+00> : vector<4x8xf32>
    %259 = vector.multi_reduction <add>, %258, %cst_35 [2] : vector<4x8x8xf32> to vector<4x8xf32>
    %260 = vector.shape_cast %259 : vector<4x8xf32> to vector<4x8x1xf32>
    %261 = vector.extract_strided_slice %161 {offsets = [6, 0], sizes = [1, 8], strides = [1, 1]} : vector<9x8xf32> to vector<1x8xf32>
    %262 = vector.shape_cast %261 : vector<1x8xf32> to vector<1x1x8xf32>
    %263 = vector.broadcast %260 : vector<4x8x1xf32> to vector<4x8x8xf32>
    %264 = vector.broadcast %262 : vector<1x1x8xf32> to vector<4x8x8xf32>
    %265 = arith.mulf %263, %264 : vector<4x8x8xf32>
    %266 = arith.addf %251, %265 : vector<4x8x8xf32>
    %c7_i32_36 = arith.constant 7 : i32
    %267 = vector.broadcast %c7_i32_36 : i32 to vector<8x8xi32>
    %268 = arith.cmpi eq, %54, %267 : vector<8x8xi32>
    %269 = arith.extui %268 : vector<8x8xi1> to vector<8x8xi32>
    %270 = arith.sitofp %269 : vector<8x8xi32> to vector<8x8xf32>
    %271 = vector.shape_cast %270 : vector<8x8xf32> to vector<1x8x8xf32>
    %272 = vector.broadcast %271 : vector<1x8x8xf32> to vector<4x8x8xf32>
    %273 = arith.mulf %159, %272 : vector<4x8x8xf32>
    %cst_37 = arith.constant dense<0.000000e+00> : vector<4x8xf32>
    %274 = vector.multi_reduction <add>, %273, %cst_37 [2] : vector<4x8x8xf32> to vector<4x8xf32>
    %275 = vector.shape_cast %274 : vector<4x8xf32> to vector<4x8x1xf32>
    %276 = vector.extract_strided_slice %161 {offsets = [7, 0], sizes = [1, 8], strides = [1, 1]} : vector<9x8xf32> to vector<1x8xf32>
    %277 = vector.shape_cast %276 : vector<1x8xf32> to vector<1x1x8xf32>
    %278 = vector.broadcast %275 : vector<4x8x1xf32> to vector<4x8x8xf32>
    %279 = vector.broadcast %277 : vector<1x1x8xf32> to vector<4x8x8xf32>
    %280 = arith.mulf %278, %279 : vector<4x8x8xf32>
    %281 = arith.addf %266, %280 : vector<4x8x8xf32>
    %c8_i32_38 = arith.constant 8 : i32
    %282 = vector.broadcast %c8_i32_38 : i32 to vector<8x8xi32>
    %283 = arith.cmpi eq, %54, %282 : vector<8x8xi32>
    %284 = arith.extui %283 : vector<8x8xi1> to vector<8x8xi32>
    %285 = arith.sitofp %284 : vector<8x8xi32> to vector<8x8xf32>
    %286 = vector.shape_cast %285 : vector<8x8xf32> to vector<1x8x8xf32>
    %287 = vector.broadcast %286 : vector<1x8x8xf32> to vector<4x8x8xf32>
    %288 = arith.mulf %159, %287 : vector<4x8x8xf32>
    %cst_39 = arith.constant dense<0.000000e+00> : vector<4x8xf32>
    %289 = vector.multi_reduction <add>, %288, %cst_39 [2] : vector<4x8x8xf32> to vector<4x8xf32>
    %290 = vector.shape_cast %289 : vector<4x8xf32> to vector<4x8x1xf32>
    %291 = vector.extract_strided_slice %161 {offsets = [8, 0], sizes = [1, 8], strides = [1, 1]} : vector<9x8xf32> to vector<1x8xf32>
    %292 = vector.shape_cast %291 : vector<1x8xf32> to vector<1x1x8xf32>
    %293 = vector.broadcast %290 : vector<4x8x1xf32> to vector<4x8x8xf32>
    %294 = vector.broadcast %292 : vector<1x1x8xf32> to vector<4x8x8xf32>
    %295 = arith.mulf %293, %294 : vector<4x8x8xf32>
    %296 = arith.addf %281, %295 : vector<4x8x8xf32>
    %297 = vector.extract_strided_slice %296 {offsets = [0, 0, 0], sizes = [1, 8, 8], strides = [1, 1, 1]} : vector<4x8x8xf32> to vector<1x8x8xf32>
    %298 = vector.shape_cast %297 : vector<1x8x8xf32> to vector<8x8xf32>
    %299 = vector.extract_strided_slice %296 {offsets = [1, 0, 0], sizes = [1, 8, 8], strides = [1, 1, 1]} : vector<4x8x8xf32> to vector<1x8x8xf32>
    %300 = vector.shape_cast %299 : vector<1x8x8xf32> to vector<8x8xf32>
    %301 = vector.extract_strided_slice %296 {offsets = [2, 0, 0], sizes = [1, 8, 8], strides = [1, 1, 1]} : vector<4x8x8xf32> to vector<1x8x8xf32>
    %302 = vector.shape_cast %301 : vector<1x8x8xf32> to vector<8x8xf32>
    %303 = vector.extract_strided_slice %296 {offsets = [3, 0, 0], sizes = [1, 8, 8], strides = [1, 1, 1]} : vector<4x8x8xf32> to vector<1x8x8xf32>
    %304 = vector.shape_cast %303 : vector<1x8x8xf32> to vector<8x8xf32>
    %305 = tpu.concatenate %298, %300, %302, %304 in 1 : vector<8x8xf32>, vector<8x8xf32>, vector<8x8xf32>, vector<8x8xf32> -> vector<8x32xf32>
    %c0_40 = arith.constant 0 : index
    %c0_41 = arith.constant 0 : index
    %306 = vector.load %arg5[%c0_40, %c0_41] : memref<32x32xf32, #tpu.memory_space<vmem>>, vector<32x32xf32>
    %cst_42 = arith.constant dense<0.000000e+00> : vector<8x32xf32>
    %307 = tpu.matmul %305, %306, %cst_42 {dimension_numbers = #tpu.dot_dimension_numbers<[1], [0], [0], [1], [0, 0, 1, 1], [], []>} : vector<8x32xf32>, vector<32x32xf32>, vector<8x32xf32> -> vector<8x32xf32>
    %c0_43 = arith.constant 0 : index
    %c0_44 = arith.constant 0 : index
    %308 = vector.load %arg6[%c0_43, %c0_44] : memref<1x32xf32, #tpu.memory_space<vmem>>, vector<1x32xf32>
    %309 = vector.broadcast %308 : vector<1x32xf32> to vector<8x32xf32>
    %310 = arith.addf %307, %309 : vector<8x32xf32>
    %311 = arith.addf %1, %310 : vector<8x32xf32>
    %cst_45 = arith.constant dense<0.000000e+00> : vector<8xf32>
    %312 = vector.multi_reduction <add>, %311, %cst_45 [1] : vector<8x32xf32> to vector<8xf32>
    %313 = vector.shape_cast %312 : vector<8xf32> to vector<8x1xf32>
    %cst_46 = arith.constant 3.200000e+01 : f32
    %314 = vector.broadcast %cst_46 : f32 to vector<8x1xf32>
    %315 = arith.divf %313, %314 : vector<8x1xf32>
    %316 = vector.broadcast %315 : vector<8x1xf32> to vector<8x32xf32>
    %317 = arith.subf %311, %316 : vector<8x32xf32>
    %318 = arith.mulf %317, %317 : vector<8x32xf32>
    %cst_47 = arith.constant dense<0.000000e+00> : vector<8xf32>
    %319 = vector.multi_reduction <add>, %318, %cst_47 [1] : vector<8x32xf32> to vector<8xf32>
    %320 = vector.shape_cast %319 : vector<8xf32> to vector<8x1xf32>
    %cst_48 = arith.constant 3.200000e+01 : f32
    %321 = vector.broadcast %cst_48 : f32 to vector<8x1xf32>
    %322 = arith.divf %320, %321 : vector<8x1xf32>
    %323 = vector.broadcast %315 : vector<8x1xf32> to vector<8x32xf32>
    %324 = arith.subf %311, %323 : vector<8x32xf32>
    %cst_49 = arith.constant 9.99999974E-6 : f32
    %325 = vector.broadcast %cst_49 : f32 to vector<8x1xf32>
    %326 = arith.addf %322, %325 : vector<8x1xf32>
    %327 = math.rsqrt %326 : vector<8x1xf32>
    %328 = vector.broadcast %327 : vector<8x1xf32> to vector<8x32xf32>
    %329 = arith.mulf %324, %328 : vector<8x32xf32>
    %c0_50 = arith.constant 0 : index
    %c0_51 = arith.constant 0 : index
    %330 = vector.load %arg9[%c0_50, %c0_51] : memref<1x32xf32, #tpu.memory_space<vmem>>, vector<1x32xf32>
    %331 = vector.broadcast %330 : vector<1x32xf32> to vector<8x32xf32>
    %332 = arith.mulf %329, %331 : vector<8x32xf32>
    %c0_52 = arith.constant 0 : index
    %c0_53 = arith.constant 0 : index
    %333 = vector.load %arg10[%c0_52, %c0_53] : memref<1x32xf32, #tpu.memory_space<vmem>>, vector<1x32xf32>
    %334 = vector.broadcast %333 : vector<1x32xf32> to vector<8x32xf32>
    %335 = arith.addf %332, %334 : vector<8x32xf32>
    %c0_54 = arith.constant 0 : index
    %c0_55 = arith.constant 0 : index
    %336 = vector.load %arg11[%c0_54, %c0_55] : memref<32x64xf32, #tpu.memory_space<vmem>>, vector<32x64xf32>
    %cst_56 = arith.constant dense<0.000000e+00> : vector<8x64xf32>
    %337 = tpu.matmul %335, %336, %cst_56 {dimension_numbers = #tpu.dot_dimension_numbers<[1], [0], [0], [1], [0, 0, 1, 1], [], []>} : vector<8x32xf32>, vector<32x64xf32>, vector<8x64xf32> -> vector<8x64xf32>
    %c0_57 = arith.constant 0 : index
    %c0_58 = arith.constant 0 : index
    %338 = vector.load %arg12[%c0_57, %c0_58] : memref<1x64xf32, #tpu.memory_space<vmem>>, vector<1x64xf32>
    %339 = vector.broadcast %338 : vector<1x64xf32> to vector<8x64xf32>
    %340 = arith.addf %337, %339 : vector<8x64xf32>
    %cst_59 = arith.constant 0.000000e+00 : f32
    %341 = vector.broadcast %cst_59 : f32 to vector<8x64xf32>
    %342 = arith.maximumf %340, %341 : vector<8x64xf32>
    %c0_60 = arith.constant 0 : index
    %c0_61 = arith.constant 0 : index
    %343 = vector.load %arg13[%c0_60, %c0_61] : memref<64x32xf32, #tpu.memory_space<vmem>>, vector<64x32xf32>
    %cst_62 = arith.constant dense<0.000000e+00> : vector<8x32xf32>
    %344 = tpu.matmul %342, %343, %cst_62 {dimension_numbers = #tpu.dot_dimension_numbers<[1], [0], [0], [1], [0, 0, 1, 1], [], []>} : vector<8x64xf32>, vector<64x32xf32>, vector<8x32xf32> -> vector<8x32xf32>
    %c0_63 = arith.constant 0 : index
    %c0_64 = arith.constant 0 : index
    %345 = vector.load %arg14[%c0_63, %c0_64] : memref<1x32xf32, #tpu.memory_space<vmem>>, vector<1x32xf32>
    %346 = vector.broadcast %345 : vector<1x32xf32> to vector<8x32xf32>
    %347 = arith.addf %344, %346 : vector<8x32xf32>
    %348 = arith.addf %335, %347 : vector<8x32xf32>
    %cst_65 = arith.constant dense<0.000000e+00> : vector<8xf32>
    %349 = vector.multi_reduction <add>, %348, %cst_65 [1] : vector<8x32xf32> to vector<8xf32>
    %350 = vector.shape_cast %349 : vector<8xf32> to vector<8x1xf32>
    %cst_66 = arith.constant 3.200000e+01 : f32
    %351 = vector.broadcast %cst_66 : f32 to vector<8x1xf32>
    %352 = arith.divf %350, %351 : vector<8x1xf32>
    %353 = vector.broadcast %352 : vector<8x1xf32> to vector<8x32xf32>
    %354 = arith.subf %348, %353 : vector<8x32xf32>
    %355 = arith.mulf %354, %354 : vector<8x32xf32>
    %cst_67 = arith.constant dense<0.000000e+00> : vector<8xf32>
    %356 = vector.multi_reduction <add>, %355, %cst_67 [1] : vector<8x32xf32> to vector<8xf32>
    %357 = vector.shape_cast %356 : vector<8xf32> to vector<8x1xf32>
    %cst_68 = arith.constant 3.200000e+01 : f32
    %358 = vector.broadcast %cst_68 : f32 to vector<8x1xf32>
    %359 = arith.divf %357, %358 : vector<8x1xf32>
    %360 = vector.broadcast %352 : vector<8x1xf32> to vector<8x32xf32>
    %361 = arith.subf %348, %360 : vector<8x32xf32>
    %cst_69 = arith.constant 9.99999974E-6 : f32
    %362 = vector.broadcast %cst_69 : f32 to vector<8x1xf32>
    %363 = arith.addf %359, %362 : vector<8x1xf32>
    %364 = math.rsqrt %363 : vector<8x1xf32>
    %365 = vector.broadcast %364 : vector<8x1xf32> to vector<8x32xf32>
    %366 = arith.mulf %361, %365 : vector<8x32xf32>
    %c0_70 = arith.constant 0 : index
    %c0_71 = arith.constant 0 : index
    %367 = vector.load %arg15[%c0_70, %c0_71] : memref<1x32xf32, #tpu.memory_space<vmem>>, vector<1x32xf32>
    %368 = vector.broadcast %367 : vector<1x32xf32> to vector<8x32xf32>
    %369 = arith.mulf %366, %368 : vector<8x32xf32>
    %c0_72 = arith.constant 0 : index
    %c0_73 = arith.constant 0 : index
    %370 = vector.load %arg16[%c0_72, %c0_73] : memref<1x32xf32, #tpu.memory_space<vmem>>, vector<1x32xf32>
    %371 = vector.broadcast %370 : vector<1x32xf32> to vector<8x32xf32>
    %372 = arith.addf %369, %371 : vector<8x32xf32>
    %c0_74 = arith.constant 0 : index
    %c0_75 = arith.constant 0 : index
    %c0_76 = arith.constant 0 : index
    %373 = vector.load %arg17[%c0_74, %c0_75, %c0_76] : memref<1x8x32xf32, #tpu.memory_space<vmem>>, vector<1x8x32xf32>
    %374 = vector.shape_cast %373 : vector<1x8x32xf32> to vector<8x32xf32>
    %375 = vector.shape_cast %372 : vector<8x32xf32> to vector<1x8x32xf32>
    tpu.vector_store %arg17[%c0_74, %c0_75, %c0_76], %375 {strides = array<i32>} : memref<1x8x32xf32, #tpu.memory_space<vmem>>, vector<1x8x32xf32>,
    return
  }
  func.func @transform_0(%arg0: i32) -> (i32, i32, i32) {
    %c0_i32 = arith.constant 0 : i32
    %c0_i32_0 = arith.constant 0 : i32
    %c0_i32_1 = arith.constant 0 : i32
    return %arg0, %c0_i32, %c0_i32_0 : i32, i32, i32
  }
  func.func @transform_1(%arg0: i32) -> (i32, i32, i32) {
    %c0_i32 = arith.constant 0 : i32
    %c0_i32_0 = arith.constant 0 : i32
    %c0_i32_1 = arith.constant 0 : i32
    return %arg0, %c0_i32, %c0_i32_0 : i32, i32, i32
  }
  func.func @transform_2(%arg0: i32) -> (i32, i32) {
    %c0_i32 = arith.constant 0 : i32
    %c0_i32_0 = arith.constant 0 : i32
    %c0_i32_1 = arith.constant 0 : i32
    return %c0_i32, %c0_i32_0 : i32, i32
  }
  func.func @transform_3(%arg0: i32) -> (i32, i32) {
    %c0_i32 = arith.constant 0 : i32
    %c0_i32_0 = arith.constant 0 : i32
    %c0_i32_1 = arith.constant 0 : i32
    return %c0_i32, %c0_i32_0 : i32, i32
  }
  func.func @transform_4(%arg0: i32) -> (i32, i32) {
    %c0_i32 = arith.constant 0 : i32
    %c0_i32_0 = arith.constant 0 : i32
    %c0_i32_1 = arith.constant 0 : i32
    return %c0_i32, %c0_i32_0 : i32, i32
  }
  func.func @transform_5(%arg0: i32) -> (i32, i32) {
    %c0_i32 = arith.constant 0 : i32
    %c0_i32_0 = arith.constant 0 : i32
    %c0_i32_1 = arith.constant 0 : i32
    return %c0_i32, %c0_i32_0 : i32, i32
  }
  func.func @transform_6(%arg0: i32) -> (i32, i32) {
    %c0_i32 = arith.constant 0 : i32
    %c0_i32_0 = arith.constant 0 : i32
    %c0_i32_1 = arith.constant 0 : i32
    return %c0_i32, %c0_i32_0 : i32, i32
  }
  func.func @transform_7(%arg0: i32) -> (i32, i32) {
    %c0_i32 = arith.constant 0 : i32
    %c0_i32_0 = arith.constant 0 : i32
    %c0_i32_1 = arith.constant 0 : i32
    return %c0_i32, %c0_i32_0 : i32, i32
  }
  func.func @transform_8(%arg0: i32) -> (i32, i32) {
    %c0_i32 = arith.constant 0 : i32
    %c0_i32_0 = arith.constant 0 : i32
    %c0_i32_1 = arith.constant 0 : i32
    return %c0_i32, %c0_i32_0 : i32, i32
  }
  func.func @transform_9(%arg0: i32) -> (i32, i32) {
    %c0_i32 = arith.constant 0 : i32
    %c0_i32_0 = arith.constant 0 : i32
    %c0_i32_1 = arith.constant 0 : i32
    return %c0_i32, %c0_i32_0 : i32, i32
  }
  func.func @transform_10(%arg0: i32) -> (i32, i32) {
    %c0_i32 = arith.constant 0 : i32
    %c0_i32_0 = arith.constant 0 : i32
    %c0_i32_1 = arith.constant 0 : i32
    return %c0_i32, %c0_i32_0 : i32, i32
  }
  func.func @transform_11(%arg0: i32) -> (i32, i32) {
    %c0_i32 = arith.constant 0 : i32
    %c0_i32_0 = arith.constant 0 : i32
    %c0_i32_1 = arith.constant 0 : i32
    return %c0_i32, %c0_i32_0 : i32, i32
  }
  func.func @transform_12(%arg0: i32) -> (i32, i32) {
    %c0_i32 = arith.constant 0 : i32
    %c0_i32_0 = arith.constant 0 : i32
    %c0_i32_1 = arith.constant 0 : i32
    return %c0_i32, %c0_i32_0 : i32, i32
  }
  func.func @transform_13(%arg0: i32) -> (i32, i32) {
    %c0_i32 = arith.constant 0 : i32
    %c0_i32_0 = arith.constant 0 : i32
    %c0_i32_1 = arith.constant 0 : i32
    return %c0_i32, %c0_i32_0 : i32, i32
  }
  func.func @transform_14(%arg0: i32) -> (i32, i32) {
    %c0_i32 = arith.constant 0 : i32
    %c0_i32_0 = arith.constant 0 : i32
    %c0_i32_1 = arith.constant 0 : i32
    return %c0_i32, %c0_i32_0 : i32, i32
  }
  func.func @transform_15(%arg0: i32) -> (i32, i32) {
    %c0_i32 = arith.constant 0 : i32
    %c0_i32_0 = arith.constant 0 : i32
    %c0_i32_1 = arith.constant 0 : i32
    return %c0_i32, %c0_i32_0 : i32, i32
  }
  func.func @transform_16(%arg0: i32) -> (i32, i32, i32) {
    %c0_i32 = arith.constant 0 : i32
    %c0_i32_0 = arith.constant 0 : i32
    %c0_i32_1 = arith.constant 0 : i32
    return %arg0, %c0_i32, %c0_i32_0 : i32, i32, i32
  }
}

</mosaic_0001>

<llo_original>
// kernel: tpu_custom_call.1
$region0: #{tpu_custom_call.1}
  #allocation0 [shape = 'u32[]', space=smem, size = 0x4, offset = 0x4, fixed_abs, tag = 'smem constant byte address 0x4 - core index']
  #allocation1 [shape = 'u32[144,128]{1,0:T(1,128)}', space=vmem, size = 0x12000, scoped, tag = 'internal scratch']
  %s0 = inlined_call_operand.vmem [shape: f32[2,8,32], index: 0, kind: input, shape index: {}]
  %s1 = inlined_call_operand.hbm [shape: f32[2,8,8], index: 1, kind: input, shape index: {}]
  %s2 = inlined_call_operand.vmem [shape: f32[32,96], index: 2, kind: input, shape index: {}]
  %s3 = inlined_call_operand.vmem [shape: f32[1,96], index: 3, kind: input, shape index: {}]
  %s4 = inlined_call_operand.vmem [shape: f32[32,32], index: 4, kind: input, shape index: {}]
  %s5 = inlined_call_operand.hbm [shape: f32[1,32], index: 5, kind: input, shape index: {}]
  %s6 = inlined_call_operand.vmem [shape: f32[9,8], index: 6, kind: input, shape index: {}]
  %s7 = inlined_call_operand.vmem [shape: f32[8,9], index: 7, kind: input, shape index: {}]
  %s8 = inlined_call_operand.hbm [shape: f32[1,32], index: 8, kind: input, shape index: {}]
  %s9 = inlined_call_operand.hbm [shape: f32[1,32], index: 9, kind: input, shape index: {}]
  %s10 = inlined_call_operand.vmem [shape: f32[32,64], index: 10, kind: input, shape index: {}]
  %s11 = inlined_call_operand.hbm [shape: f32[1,64], index: 11, kind: input, shape index: {}]
  %s12 = inlined_call_operand.vmem [shape: f32[64,32], index: 12, kind: input, shape index: {}]
  %s13 = inlined_call_operand.vmem [shape: f32[1,32], index: 13, kind: input, shape index: {}]
  %s14 = inlined_call_operand.vmem [shape: f32[1,32], index: 14, kind: input, shape index: {}]
  %s15 = inlined_call_operand.vmem [shape: f32[1,32], index: 15, kind: input, shape index: {}]
  %s16 = inlined_call_operand.hbm [shape: f32[2,8,32], index: 16, kind: output, shape index: {}]
  %s17 = sld [smem:[#allocation0]]
  $region117: #{tpu_custom_call.1} parent=0
    _
  %s19 = ssub.s32 1, %s17
  %s20 = scalar_select 0, %s19, %s17
  $region1: #{tpu_custom_call.1} parent=0
    #allocation2 [shape = 'u8[8192]{0}', space=vmem, size = 0x2000, scoped, tag = 'input window, operand 1']
    #allocation3 [shape = 's32[2]{0}', space=sflag, size = 0x8, scoped, tag = 'scoped memory for tpu_custom_call.1']
    #allocation4 [shape = 's32[2]{0}', space=sflag, size = 0x8, scoped, tag = 'scoped memory for tpu_custom_call.1']
    #allocation5 [shape = 'u8[512]{0}', space=vmem, size = 0x400, scoped, tag = 'input window, operand 5, single buffered']
    #allocation6 [shape = 's32[1]{0}', space=sflag, size = 0x4, scoped, tag = 'scoped memory for tpu_custom_call.1']
    #allocation7 [shape = 'u8[512]{0}', space=vmem, size = 0x400, scoped, tag = 'input window, operand 8, single buffered']
    #allocation8 [shape = 'u8[512]{0}', space=vmem, size = 0x400, scoped, tag = 'input window, operand 9, single buffered']
    #allocation9 [shape = 's32[1]{0}', space=sflag, size = 0x4, scoped, tag = 'scoped memory for tpu_custom_call.1']
    #allocation10 [shape = 'u8[512]{0}', space=vmem, size = 0x400, scoped, tag = 'input window, operand 11, single buffered']
    #allocation11 [shape = 'u8[8192]{0}', space=vmem, size = 0x2000, scoped, tag = 'output window, operand 0']
    %21 = vsyncpa [#allocation3], 0
    %s22 = scalar_lea.sflag [#allocation3], 1
    %23 = vsyncpa %s22, 0
    %24 = vsyncpa [#allocation6], 0
    %25 = vsyncpa [#allocation9], 0
    %26 = vsyncpa [#allocation4], 0
    %s27 = scalar_lea.sflag [#allocation4], 1
    %28 = vsyncpa %s27, 0
    loop: start=0, step=1, limit=4
    $region2: #{tpu_custom_call.1} parent=1 // loop_pre_header
      _
    $region3: #{tpu_custom_call.1} parent=1 // loop_header
      %s30 = sphi 0, %s34
      %p31 = scmp.ge.s32.totalorder %s30, 4
      %s40 = sphi 0, %s42
      %s43 = sphi 0, %s40
      %s44 = sphi 0, %s43
      %s60 = sphi 0, %s44
      %s66 = sphi 0, %s68
      %s69 = sphi 0, %s66
      %s70 = sphi 0, %s69
      %s86 = sphi 0, %s70
      %s90 = sphi 0, %s90
      %s92 = sphi 0, %s90
      %s93 = sphi 0, %s92
      %s107 = sphi 0, %s93
      %s111 = sphi 0, %s111
      %s113 = sphi 0, %s111
      %s114 = sphi 0, %s113
      %s128 = sphi 0, %s114
      %s132 = sphi 0, %s132
      %s134 = sphi 0, %s132
      %s135 = sphi 0, %s134
      %s149 = sphi 0, %s135
      %s153 = sphi 0, %s153
      %s155 = sphi 0, %s153
      %s156 = sphi 0, %s155
      %s170 = sphi 0, %s156
      %s174 = sphi 0, %s174
      %s176 = sphi 0, %s174
      %s177 = sphi 0, %s176
      %s191 = sphi 0, %s177
      %s195 = sphi 0, %s195
      %s197 = sphi 0, %s195
      %s198 = sphi 0, %s197
      %s212 = sphi 0, %s198
      %s216 = sphi 0, %s216
      %s218 = sphi 0, %s216
      %s219 = sphi 0, %s218
      %s233 = sphi 0, %s219
      %s237 = sphi 0, %s237
      %s239 = sphi 0, %s237
      %s240 = sphi 0, %s239
      %s254 = sphi 0, %s240
      %s258 = sphi 0, %s258
      %s260 = sphi 0, %s258
      %s261 = sphi 0, %s260
      %s275 = sphi 0, %s261
      %s279 = sphi 0, %s279
      %s281 = sphi 0, %s279
      %s282 = sphi 0, %s281
      %s296 = sphi 0, %s282
      %s300 = sphi 0, %s300
      %s302 = sphi 0, %s300
      %s303 = sphi 0, %s302
      %s317 = sphi 0, %s303
      %s321 = sphi 0, %s321
      %s323 = sphi 0, %s321
      %s324 = sphi 0, %s323
      %s338 = sphi 0, %s324
      %s342 = sphi 0, %s342
      %s344 = sphi 0, %s342
      %s345 = sphi 0, %s344
      %s359 = sphi 0, %s345
      %s363 = sphi 0, %s363
      %s365 = sphi 0, %s363
      %s366 = sphi 0, %s365
      %s380 = sphi 0, %s366
      %s386 = sphi 0, %s388
      %s389 = sphi 0, %s386
      %s390 = sphi 0, %s389
      %s406 = sphi 0, %s390
    $region4: #{tpu_custom_call.1} parent=1 // loop_header_branch
      %33 = sbr.rel (%p31) target = $region8
    $region5: #{tpu_custom_call.1} parent=1 // loop_body
      %s35 = ssub.s32 %s30, 1
      %s36 = ssub.s32 %s30, 2
      %s37 = sadd.s32 %s30, 1
      %s38 = ssub.s32 %s30, %s37
      %p39 = scmp.eq.s32.totalorder %s38, 0
      %s41 = sadd.s32 %s40, 1
      %s42 = scalar_select %p39, %s40, %s41
      %p45 = pneg %p39
      %p46 = scmp.eq.s32.totalorder %s30, 1
      %p47 = por %p45, %p46
      %p48 = scmp.ne.s32.totalorder %s40, %s43
      %p49 = scmp.eq.s32.totalorder %s30, 0
      %p50 = por %p48, %p49
      %p51 = scmp.ne.s32.totalorder %s40, %s43
      %p52 = scmp.eq.s32.totalorder %s35, 1
      %p53 = por %p51, %p52
      %p54 = scmp.ne.s32.totalorder %s43, %s44
      %p55 = scmp.eq.s32.totalorder %s35, 0
      %p56 = por %p54, %p55
      %p57 = scmp.ne.s32.totalorder %s43, %s44
      %p58 = scmp.eq.s32.totalorder %s36, 1
      %p59 = por %p57, %p58
      %p61 = scmp.ne.s32.totalorder %s44, %s60
      %p62 = scmp.eq.s32.totalorder %s36, 0
      %p63 = por %p61, %p62
      %s64 = ssub.s32 %s30, %s37
      %p65 = scmp.eq.s32.totalorder %s64, 0
      %s67 = sadd.s32 %s66, 1
      %s68 = scalar_select %p65, %s66, %s67
      %p71 = pneg %p65
      %p72 = scmp.eq.s32.totalorder %s30, 1
      %p73 = por %p71, %p72
      %p74 = scmp.ne.s32.totalorder %s66, %s69
      %p75 = scmp.eq.s32.totalorder %s30, 0
      %p76 = por %p74, %p75
      %p77 = scmp.ne.s32.totalorder %s66, %s69
      %p78 = scmp.eq.s32.totalorder %s35, 1
      %p79 = por %p77, %p78
      %p80 = scmp.ne.s32.totalorder %s69, %s70
      %p81 = scmp.eq.s32.totalorder %s35, 0
      %p82 = por %p80, %p81
      %p83 = scmp.ne.s32.totalorder %s69, %s70
      %p84 = scmp.eq.s32.totalorder %s36, 1
      %p85 = por %p83, %p84
      %p87 = scmp.ne.s32.totalorder %s70, %s86
      %p88 = scmp.eq.s32.totalorder %s36, 0
      %p89 = por %p87, %p88
      %s91 = sadd.s32 %s90, 1
      %p94 = scmp.eq.s32.totalorder %s30, 1
      %p95 = scmp.ne.s32.totalorder %s90, %s92
      %p96 = scmp.eq.s32.totalorder %s30, 0
      %p97 = por %p95, %p96
      %p98 = scmp.ne.s32.totalorder %s90, %s92
      %p99 = scmp.eq.s32.totalorder %s35, 1
      %p100 = por %p98, %p99
      %p101 = scmp.ne.s32.totalorder %s92, %s93
      %p102 = scmp.eq.s32.totalorder %s35, 0
      %p103 = por %p101, %p102
      %p104 = scmp.ne.s32.totalorder %s92, %s93
      %p105 = scmp.eq.s32.totalorder %s36, 1
      %p106 = por %p104, %p105
      %p108 = scmp.ne.s32.totalorder %s93, %s107
      %p109 = scmp.eq.s32.totalorder %s36, 0
      %p110 = por %p108, %p109
      %s112 = sadd.s32 %s111, 1
      %p115 = scmp.eq.s32.totalorder %s30, 1
      %p116 = scmp.ne.s32.totalorder %s111, %s113
      %p117 = scmp.eq.s32.totalorder %s30, 0
      %p118 = por %p116, %p117
      %p119 = scmp.ne.s32.totalorder %s111, %s113
      %p120 = scmp.eq.s32.totalorder %s35, 1
      %p121 = por %p119, %p120
      %p122 = scmp.ne.s32.totalorder %s113, %s114
      %p123 = scmp.eq.s32.totalorder %s35, 0
      %p124 = por %p122, %p123
      %p125 = scmp.ne.s32.totalorder %s113, %s114
      %p126 = scmp.eq.s32.totalorder %s36, 1
      %p127 = por %p125, %p126
      %p129 = scmp.ne.s32.totalorder %s114, %s128
      %p130 = scmp.eq.s32.totalorder %s36, 0
      %p131 = por %p129, %p130
      %s133 = sadd.s32 %s132, 1
      %p136 = scmp.eq.s32.totalorder %s30, 1
      %p137 = scmp.ne.s32.totalorder %s132, %s134
      %p138 = scmp.eq.s32.totalorder %s30, 0
      %p139 = por %p137, %p138
      %p140 = scmp.ne.s32.totalorder %s132, %s134
      %p141 = scmp.eq.s32.totalorder %s35, 1
      %p142 = por %p140, %p141
      %p143 = scmp.ne.s32.totalorder %s134, %s135
      %p144 = scmp.eq.s32.totalorder %s35, 0
      %p145 = por %p143, %p144
      %p146 = scmp.ne.s32.totalorder %s134, %s135
      %p147 = scmp.eq.s32.totalorder %s36, 1
      %p148 = por %p146, %p147
      %p150 = scmp.ne.s32.totalorder %s135, %s149
      %p151 = scmp.eq.s32.totalorder %s36, 0
      %p152 = por %p150, %p151
      %s154 = sadd.s32 %s153, 1
      %p157 = scmp.eq.s32.totalorder %s30, 1
      %p158 = scmp.ne.s32.totalorder %s153, %s155
      %p159 = scmp.eq.s32.totalorder %s30, 0
      %p160 = por %p158, %p159
      %p161 = scmp.ne.s32.totalorder %s153, %s155
      %p162 = scmp.eq.s32.totalorder %s35, 1
      %p163 = por %p161, %p162
      %p164 = scmp.ne.s32.totalorder %s155, %s156
      %p165 = scmp.eq.s32.totalorder %s35, 0
      %p166 = por %p164, %p165
      %p167 = scmp.ne.s32.totalorder %s155, %s156
      %p168 = scmp.eq.s32.totalorder %s36, 1
      %p169 = por %p167, %p168
      %p171 = scmp.ne.s32.totalorder %s156, %s170
      %p172 = scmp.eq.s32.totalorder %s36, 0
      %p173 = por %p171, %p172
      %s175 = sadd.s32 %s174, 1
      %p178 = scmp.eq.s32.totalorder %s30, 1
      %p179 = scmp.ne.s32.totalorder %s174, %s176
      %p180 = scmp.eq.s32.totalorder %s30, 0
      %p181 = por %p179, %p180
      %p182 = scmp.ne.s32.totalorder %s174, %s176
      %p183 = scmp.eq.s32.totalorder %s35, 1
      %p184 = por %p182, %p183
      %p185 = scmp.ne.s32.totalorder %s176, %s177
      %p186 = scmp.eq.s32.totalorder %s35, 0
      %p187 = por %p185, %p186
      %p188 = scmp.ne.s32.totalorder %s176, %s177
      %p189 = scmp.eq.s32.totalorder %s36, 1
      %p190 = por %p188, %p189
      %p192 = scmp.ne.s32.totalorder %s177, %s191
      %p193 = scmp.eq.s32.totalorder %s36, 0
      %p194 = por %p192, %p193
      %s196 = sadd.s32 %s195, 1
      %p199 = scmp.eq.s32.totalorder %s30, 1
      %p200 = scmp.ne.s32.totalorder %s195, %s197
      %p201 = scmp.eq.s32.totalorder %s30, 0
      %p202 = por %p200, %p201
      %p203 = scmp.ne.s32.totalorder %s195, %s197
      %p204 = scmp.eq.s32.totalorder %s35, 1
      %p205 = por %p203, %p204
      %p206 = scmp.ne.s32.totalorder %s197, %s198
      %p207 = scmp.eq.s32.totalorder %s35, 0
      %p208 = por %p206, %p207
      %p209 = scmp.ne.s32.totalorder %s197, %s198
      %p210 = scmp.eq.s32.totalorder %s36, 1
      %p211 = por %p209, %p210
      %p213 = scmp.ne.s32.totalorder %s198, %s212
      %p214 = scmp.eq.s32.totalorder %s36, 0
      %p215 = por %p213, %p214
      %s217 = sadd.s32 %s216, 1
      %p220 = scmp.eq.s32.totalorder %s30, 1
      %p221 = scmp.ne.s32.totalorder %s216, %s218
      %p222 = scmp.eq.s32.totalorder %s30, 0
      %p223 = por %p221, %p222
      %p224 = scmp.ne.s32.totalorder %s216, %s218
      %p225 = scmp.eq.s32.totalorder %s35, 1
      %p226 = por %p224, %p225
      %p227 = scmp.ne.s32.totalorder %s218, %s219
      %p228 = scmp.eq.s32.totalorder %s35, 0
      %p229 = por %p227, %p228
      %p230 = scmp.ne.s32.totalorder %s218, %s219
      %p231 = scmp.eq.s32.totalorder %s36, 1
      %p232 = por %p230, %p231
      %p234 = scmp.ne.s32.totalorder %s219, %s233
      %p235 = scmp.eq.s32.totalorder %s36, 0
      %p236 = por %p234, %p235
      %s238 = sadd.s32 %s237, 1
      %p241 = scmp.eq.s32.totalorder %s30, 1
      %p242 = scmp.ne.s32.totalorder %s237, %s239
      %p243 = scmp.eq.s32.totalorder %s30, 0
      %p244 = por %p242, %p243
      %p245 = scmp.ne.s32.totalorder %s237, %s239
      %p246 = scmp.eq.s32.totalorder %s35, 1
      %p247 = por %p245, %p246
      %p248 = scmp.ne.s32.totalorder %s239, %s240
      %p249 = scmp.eq.s32.totalorder %s35, 0
      %p250 = por %p248, %p249
      %p251 = scmp.ne.s32.totalorder %s239, %s240
      %p252 = scmp.eq.s32.totalorder %s36, 1
      %p253 = por %p251, %p252
      %p255 = scmp.ne.s32.totalorder %s240, %s254
      %p256 = scmp.eq.s32.totalorder %s36, 0
      %p257 = por %p255, %p256
      %s259 = sadd.s32 %s258, 1
      %p262 = scmp.eq.s32.totalorder %s30, 1
      %p263 = scmp.ne.s32.totalorder %s258, %s260
      %p264 = scmp.eq.s32.totalorder %s30, 0
      %p265 = por %p263, %p264
      %p266 = scmp.ne.s32.totalorder %s258, %s260
      %p267 = scmp.eq.s32.totalorder %s35, 1
      %p268 = por %p266, %p267
      %p269 = scmp.ne.s32.totalorder %s260, %s261
      %p270 = scmp.eq.s32.totalorder %s35, 0
      %p271 = por %p269, %p270
      %p272 = scmp.ne.s32.totalorder %s260, %s261
      %p273 = scmp.eq.s32.totalorder %s36, 1
      %p274 = por %p272, %p273
      %p276 = scmp.ne.s32.totalorder %s261, %s275
      %p277 = scmp.eq.s32.totalorder %s36, 0
      %p278 = por %p276, %p277
      %s280 = sadd.s32 %s279, 1
      %p283 = scmp.eq.s32.totalorder %s30, 1
      %p284 = scmp.ne.s32.totalorder %s279, %s281
      %p285 = scmp.eq.s32.totalorder %s30, 0
      %p286 = por %p284, %p285
      %p287 = scmp.ne.s32.totalorder %s279, %s281
      %p288 = scmp.eq.s32.totalorder %s35, 1
      %p289 = por %p287, %p288
      %p290 = scmp.ne.s32.totalorder %s281, %s282
      %p291 = scmp.eq.s32.totalorder %s35, 0
      %p292 = por %p290, %p291
      %p293 = scmp.ne.s32.totalorder %s281, %s282
      %p294 = scmp.eq.s32.totalorder %s36, 1
      %p295 = por %p293, %p294
      %p297 = scmp.ne.s32.totalorder %s282, %s296
      %p298 = scmp.eq.s32.totalorder %s36, 0
      %p299 = por %p297, %p298
      %s301 = sadd.s32 %s300, 1
      %p304 = scmp.eq.s32.totalorder %s30, 1
      %p305 = scmp.ne.s32.totalorder %s300, %s302
      %p306 = scmp.eq.s32.totalorder %s30, 0
      %p307 = por %p305, %p306
      %p308 = scmp.ne.s32.totalorder %s300, %s302
      %p309 = scmp.eq.s32.totalorder %s35, 1
      %p310 = por %p308, %p309
      %p311 = scmp.ne.s32.totalorder %s302, %s303
      %p312 = scmp.eq.s32.totalorder %s35, 0
      %p313 = por %p311, %p312
      %p314 = scmp.ne.s32.totalorder %s302, %s303
      %p315 = scmp.eq.s32.totalorder %s36, 1
      %p316 = por %p314, %p315
      %p318 = scmp.ne.s32.totalorder %s303, %s317
      %p319 = scmp.eq.s32.totalorder %s36, 0
      %p320 = por %p318, %p319
      %s322 = sadd.s32 %s321, 1
      %p325 = scmp.eq.s32.totalorder %s30, 1
      %p326 = scmp.ne.s32.totalorder %s321, %s323
      %p327 = scmp.eq.s32.totalorder %s30, 0
      %p328 = por %p326, %p327
      %p329 = scmp.ne.s32.totalorder %s321, %s323
      %p330 = scmp.eq.s32.totalorder %s35, 1
      %p331 = por %p329, %p330
      %p332 = scmp.ne.s32.totalorder %s323, %s324
      %p333 = scmp.eq.s32.totalorder %s35, 0
      %p334 = por %p332, %p333
      %p335 = scmp.ne.s32.totalorder %s323, %s324
      %p336 = scmp.eq.s32.totalorder %s36, 1
      %p337 = por %p335, %p336
      %p339 = scmp.ne.s32.totalorder %s324, %s338
      %p340 = scmp.eq.s32.totalorder %s36, 0
      %p341 = por %p339, %p340
      %s343 = sadd.s32 %s342, 1
      %p346 = scmp.eq.s32.totalorder %s30, 1
      %p347 = scmp.ne.s32.totalorder %s342, %s344
      %p348 = scmp.eq.s32.totalorder %s30, 0
      %p349 = por %p347, %p348
      %p350 = scmp.ne.s32.totalorder %s342, %s344
      %p351 = scmp.eq.s32.totalorder %s35, 1
      %p352 = por %p350, %p351
      %p353 = scmp.ne.s32.totalorder %s344, %s345
      %p354 = scmp.eq.s32.totalorder %s35, 0
      %p355 = por %p353, %p354
      %p356 = scmp.ne.s32.totalorder %s344, %s345
      %p357 = scmp.eq.s32.totalorder %s36, 1
      %p358 = por %p356, %p357
      %p360 = scmp.ne.s32.totalorder %s345, %s359
      %p361 = scmp.eq.s32.totalorder %s36, 0
      %p362 = por %p360, %p361
      %s364 = sadd.s32 %s363, 1
      %p367 = scmp.eq.s32.totalorder %s30, 1
      %p368 = scmp.ne.s32.totalorder %s363, %s365
      %p369 = scmp.eq.s32.totalorder %s30, 0
      %p370 = por %p368, %p369
      %p371 = scmp.ne.s32.totalorder %s363, %s365
      %p372 = scmp.eq.s32.totalorder %s35, 1
      %p373 = por %p371, %p372
      %p374 = scmp.ne.s32.totalorder %s365, %s366
      %p375 = scmp.eq.s32.totalorder %s35, 0
      %p376 = por %p374, %p375
      %p377 = scmp.ne.s32.totalorder %s365, %s366
      %p378 = scmp.eq.s32.totalorder %s36, 1
      %p379 = por %p377, %p378
      %p381 = scmp.ne.s32.totalorder %s366, %s380
      %p382 = scmp.eq.s32.totalorder %s36, 0
      %p383 = por %p381, %p382
      %s384 = ssub.s32 %s30, %s37
      %p385 = scmp.eq.s32.totalorder %s384, 0
      %s387 = sadd.s32 %s386, 1
      %s388 = scalar_select %p385, %s386, %s387
      %p391 = pneg %p385
      %p392 = scmp.eq.s32.totalorder %s30, 1
      %p393 = por %p391, %p392
      %p394 = scmp.ne.s32.totalorder %s386, %s389
      %p395 = scmp.eq.s32.totalorder %s30, 0
      %p396 = por %p394, %p395
      %p397 = scmp.ne.s32.totalorder %s386, %s389
      %p398 = scmp.eq.s32.totalorder %s35, 1
      %p399 = por %p397, %p398
      %p400 = scmp.ne.s32.totalorder %s389, %s390
      %p401 = scmp.eq.s32.totalorder %s35, 0
      %p402 = por %p400, %p401
      %p403 = scmp.ne.s32.totalorder %s389, %s390
      %p404 = scmp.eq.s32.totalorder %s36, 1
      %p405 = por %p403, %p404
      %p407 = scmp.ne.s32.totalorder %s390, %s406
      %p408 = scmp.eq.s32.totalorder %s36, 0
      %p409 = por %p407, %p408
      %p410 = scmp.le.s32.totalorder 1, %s30
      %p411 = scmp.lt.s32.totalorder %s30, 3
      %p412 = pnand %p410, %p411
      %p413 = pneg %p412
      // Predicated region
      $region9: #{tpu_custom_call.1} parent=5 // pred_check
        _
      $region10: #{tpu_custom_call.1} parent=5 // pred_check_branch
        %415 = sbr.rel (%p412) target = $region12
      $region11: #{tpu_custom_call.1} parent=5 // pred_region
        %s416 = ssub.s32 %s30, 1
        // Predicated region
        $region13: #{tpu_custom_call.1} parent=11 // pred_check
          %p417 = pneg %p103
        $region14: #{tpu_custom_call.1} parent=11 // pred_check_branch
          %419 = sbr.rel (%p417) target = $region16
        $region15: #{tpu_custom_call.1} parent=11 // pred_region
          _
        $region16: #{tpu_custom_call.1} parent=11 // pred_fallthru
          _
        // Predicated region
        $region17: #{tpu_custom_call.1} parent=11 // pred_check
          %p420 = pneg %p124
        $region18: #{tpu_custom_call.1} parent=11 // pred_check_branch
          %422 = sbr.rel (%p420) target = $region20
        $region19: #{tpu_custom_call.1} parent=11 // pred_region
          _
        $region20: #{tpu_custom_call.1} parent=11 // pred_fallthru
          _
        // Predicated region
        $region21: #{tpu_custom_call.1} parent=11 // pred_check
          %p423 = pneg %p145
        $region22: #{tpu_custom_call.1} parent=11 // pred_check_branch
          %425 = sbr.rel (%p423) target = $region24
        $region23: #{tpu_custom_call.1} parent=11 // pred_region
          _
        $region24: #{tpu_custom_call.1} parent=11 // pred_fallthru
          _
        // Predicated region
        $region25: #{tpu_custom_call.1} parent=11 // pred_check
          %p426 = pneg %p166
        $region26: #{tpu_custom_call.1} parent=11 // pred_check_branch
          %428 = sbr.rel (%p426) target = $region28
        $region27: #{tpu_custom_call.1} parent=11 // pred_region
          %s430 = ssub.s32 16, 16
          %431 = vsyncadd [#allocation6], %s430
          %s433 = sshll.u32 [#allocation5], 4
          %s434 = int_to_ptr.vmem [resolvable:$true] %s433
          %436 = dma.hbm_to_vmem [thread:$0]  %s5, 16, %s434, [#allocation6]
        $region28: #{tpu_custom_call.1} parent=11 // pred_fallthru
          _
        // Predicated region
        $region29: #{tpu_custom_call.1} parent=11 // pred_check
          %p437 = pneg %p187
        $region30: #{tpu_custom_call.1} parent=11 // pred_check_branch
          %439 = sbr.rel (%p437) target = $region32
        $region31: #{tpu_custom_call.1} parent=11 // pred_region
          _
        $region32: #{tpu_custom_call.1} parent=11 // pred_fallthru
          _
        // Predicated region
        $region33: #{tpu_custom_call.1} parent=11 // pred_check
          %p440 = pneg %p208
        $region34: #{tpu_custom_call.1} parent=11 // pred_check_branch
          %442 = sbr.rel (%p440) target = $region36
        $region35: #{tpu_custom_call.1} parent=11 // pred_region
          _
        $region36: #{tpu_custom_call.1} parent=11 // pred_fallthru
          _
        // Predicated region
        $region37: #{tpu_custom_call.1} parent=11 // pred_check
          %p443 = pneg %p229
        $region38: #{tpu_custom_call.1} parent=11 // pred_check_branch
          %445 = sbr.rel (%p443) target = $region40
        $region39: #{tpu_custom_call.1} parent=11 // pred_region
          %s447 = ssub.s32 16, 16
          %448 = vsyncadd [#allocation6], %s447
          %s450 = sshll.u32 [#allocation7], 4
          %s451 = int_to_ptr.vmem [resolvable:$true] %s450
          %453 = dma.hbm_to_vmem [thread:$0]  %s8, 16, %s451, [#allocation6]
        $region40: #{tpu_custom_call.1} parent=11 // pred_fallthru
          _
        // Predicated region
        $region41: #{tpu_custom_call.1} parent=11 // pred_check
          %p454 = pneg %p250
        $region42: #{tpu_custom_call.1} parent=11 // pred_check_branch
          %456 = sbr.rel (%p454) target = $region44
        $region43: #{tpu_custom_call.1} parent=11 // pred_region
          %s458 = ssub.s32 16, 16
          %459 = vsyncadd [#allocation9], %s458
          %s461 = sshll.u32 [#allocation8], 4
          %s462 = int_to_ptr.vmem [resolvable:$true] %s461
          %464 = dma.hbm_to_vmem [thread:$0]  %s9, 16, %s462, [#allocation9]
        $region44: #{tpu_custom_call.1} parent=11 // pred_fallthru
          _
        // Predicated region
        $region45: #{tpu_custom_call.1} parent=11 // pred_check
          %p465 = pneg %p271
        $region46: #{tpu_custom_call.1} parent=11 // pred_check_branch
          %467 = sbr.rel (%p465) target = $region48
        $region47: #{tpu_custom_call.1} parent=11 // pred_region
          _
        $region48: #{tpu_custom_call.1} parent=11 // pred_fallthru
          _
        // Predicated region
        $region49: #{tpu_custom_call.1} parent=11 // pred_check
          %p468 = pneg %p292
        $region50: #{tpu_custom_call.1} parent=11 // pred_check_branch
          %470 = sbr.rel (%p468) target = $region52
        $region51: #{tpu_custom_call.1} parent=11 // pred_region
          %s472 = ssub.s32 16, 16
          %473 = vsyncadd [#allocation9], %s472
          %s475 = sshll.u32 [#allocation10], 4
          %s476 = int_to_ptr.vmem [resolvable:$true] %s475
          %478 = dma.hbm_to_vmem [thread:$0]  %s11, 16, %s476, [#allocation9]
        $region52: #{tpu_custom_call.1} parent=11 // pred_fallthru
          _
        // Predicated region
        $region53: #{tpu_custom_call.1} parent=11 // pred_check
          %p479 = pneg %p313
        $region54: #{tpu_custom_call.1} parent=11 // pred_check_branch
          %481 = sbr.rel (%p479) target = $region56
        $region55: #{tpu_custom_call.1} parent=11 // pred_region
          _
        $region56: #{tpu_custom_call.1} parent=11 // pred_fallthru
          _
        // Predicated region
        $region57: #{tpu_custom_call.1} parent=11 // pred_check
          %p482 = pneg %p334
        $region58: #{tpu_custom_call.1} parent=11 // pred_check_branch
          %484 = sbr.rel (%p482) target = $region60
        $region59: #{tpu_custom_call.1} parent=11 // pred_region
          _
        $region60: #{tpu_custom_call.1} parent=11 // pred_fallthru
          _
        // Predicated region
        $region61: #{tpu_custom_call.1} parent=11 // pred_check
          %p485 = pneg %p355
        $region62: #{tpu_custom_call.1} parent=11 // pred_check_branch
          %487 = sbr.rel (%p485) target = $region64
        $region63: #{tpu_custom_call.1} parent=11 // pred_region
          _
        $region64: #{tpu_custom_call.1} parent=11 // pred_fallthru
          _
        // Predicated region
        $region65: #{tpu_custom_call.1} parent=11 // pred_check
          %p488 = pneg %p376
        $region66: #{tpu_custom_call.1} parent=11 // pred_check_branch
          %490 = sbr.rel (%p488) target = $region68
        $region67: #{tpu_custom_call.1} parent=11 // pred_region
          _
        $region68: #{tpu_custom_call.1} parent=11 // pred_fallthru
          _
      $region12: #{tpu_custom_call.1} parent=5 // pred_fallthru
        _
      %p491 = scmp.lt.s32.totalorder %s30, 2
      // Predicated region
      $region69: #{tpu_custom_call.1} parent=5 // pred_check
        %p492 = pneg %p491
      $region70: #{tpu_custom_call.1} parent=5 // pred_check_branch
        %494 = sbr.rel (%p492) target = $region72
      $region71: #{tpu_custom_call.1} parent=5 // pred_region
        // Predicated region
        $region73: #{tpu_custom_call.1} parent=71 // pred_check
          %p495 = pneg %p50
        $region74: #{tpu_custom_call.1} parent=71 // pred_check_branch
          %497 = sbr.rel (%p495) target = $region76
        $region75: #{tpu_custom_call.1} parent=71 // pred_region
          %p498 = scmp.lt.s32.totalorder %s30, 1
          %s499 = scalar_select %p498, %s30, 1
          %s500 = smul.addr %s499, 8
          %s501 = scalar_lea.vmem %s0, %s500
        $region76: #{tpu_custom_call.1} parent=71 // pred_fallthru
          _
        // Predicated region
        $region77: #{tpu_custom_call.1} parent=71 // pred_check
          %p502 = pneg %p76
        $region78: #{tpu_custom_call.1} parent=71 // pred_check_branch
          %504 = sbr.rel (%p502) target = $region80
        $region79: #{tpu_custom_call.1} parent=71 // pred_region
          %s505 = sand.u32 %s66, 1
          %s506 = scalar_lea.sflag [#allocation3], %s505
          %s507 = sand.u32 %s66, 1
          %s508 = smul.addr %s507, 8
          %s509 = scalar_lea.vmem [#allocation2], %s508
          %s511 = ssub.s32 128, 128
          %512 = vsyncadd %s506, %s511
          %s513 = smul.addr %s30, 128
          %s514 = scalar_lea.hbm %s1, %s513
          %s516 = sshll.u32 %s509, 4
          %s517 = int_to_ptr.vmem [resolvable:$true] %s516
          %519 = dma.hbm_to_vmem [thread:$0]  %s514, 128, %s517, %s506
        $region80: #{tpu_custom_call.1} parent=71 // pred_fallthru
          _
      $region72: #{tpu_custom_call.1} parent=5 // pred_fallthru
        _
      %p520 = scmp.le.s32.totalorder 1, %s30
      %p521 = scmp.lt.s32.totalorder %s30, 3
      %p522 = pnand %p520, %p521
      %p523 = pneg %p522
      // Predicated region
      $region81: #{tpu_custom_call.1} parent=5 // pred_check
        _
      $region82: #{tpu_custom_call.1} parent=5 // pred_check_branch
        %525 = sbr.rel (%p522) target = $region84
      $region83: #{tpu_custom_call.1} parent=5 // pred_region
        %s526 = ssub.s32 %s30, 1
        %s527 = sand.u32 %s69, 1
        %s528 = scalar_lea.sflag [#allocation3], %s527
        %s529 = sand.u32 %s69, 1
        %s530 = smul.addr %s529, 8
        %s531 = scalar_lea.vmem [#allocation2], %s530
        // Predicated region
        $region85: #{tpu_custom_call.1} parent=83 // pred_check
          %p532 = pneg %p82
        $region86: #{tpu_custom_call.1} parent=83 // pred_check_branch
          %534 = sbr.rel (%p532) target = $region88
        $region87: #{tpu_custom_call.1} parent=83 // pred_region
          %535 = dma.done %s528, 128
        $region88: #{tpu_custom_call.1} parent=83 // pred_fallthru
          _
        // Predicated region
        $region89: #{tpu_custom_call.1} parent=83 // pred_check
          %p536 = pneg %p166
        $region90: #{tpu_custom_call.1} parent=83 // pred_check_branch
          %538 = sbr.rel (%p536) target = $region92
        $region91: #{tpu_custom_call.1} parent=83 // pred_region
          %539 = dma.done [#allocation6], 16
        $region92: #{tpu_custom_call.1} parent=83 // pred_fallthru
          _
        // Predicated region
        $region93: #{tpu_custom_call.1} parent=83 // pred_check
          %p540 = pneg %p229
        $region94: #{tpu_custom_call.1} parent=83 // pred_check_branch
          %542 = sbr.rel (%p540) target = $region96
        $region95: #{tpu_custom_call.1} parent=83 // pred_region
          %543 = dma.done [#allocation6], 16
        $region96: #{tpu_custom_call.1} parent=83 // pred_fallthru
          _
        // Predicated region
        $region97: #{tpu_custom_call.1} parent=83 // pred_check
          %p544 = pneg %p250
        $region98: #{tpu_custom_call.1} parent=83 // pred_check_branch
          %546 = sbr.rel (%p544) target = $region100
        $region99: #{tpu_custom_call.1} parent=83 // pred_region
          %547 = dma.done [#allocation9], 16
        $region100: #{tpu_custom_call.1} parent=83 // pred_fallthru
          _
        // Predicated region
        $region101: #{tpu_custom_call.1} parent=83 // pred_check
          %p548 = pneg %p292
        $region102: #{tpu_custom_call.1} parent=83 // pred_check_branch
          %550 = sbr.rel (%p548) target = $region104
        $region103: #{tpu_custom_call.1} parent=83 // pred_region
          %551 = dma.done [#allocation9], 16
        $region104: #{tpu_custom_call.1} parent=83 // pred_fallthru
          _
        %p552 = scmp.lt.s32.totalorder %s35, 1
        %s553 = scalar_select %p552, %s35, 1
        %s554 = smul.addr %s553, 8
        %s555 = scalar_lea.vmem %s0, %s554
        %p556 = pneg %p56
        %p557 = pneg %p53
        %s558 = sand.u32 %s69, 1
        %s559 = scalar_lea.sflag [#allocation3], %s558
        %s560 = sand.u32 %s69, 1
        %s561 = smul.addr %s560, 8
        %s562 = scalar_lea.vmem [#allocation2], %s561
        %p563 = pneg %p82
        %p564 = pneg %p79
        %p565 = pneg %p103
        %p566 = pneg %p100
        %p567 = pneg %p124
        %p568 = pneg %p121
        %p569 = pneg %p145
        %p570 = pneg %p142
        %p571 = pneg %p166
        %p572 = pneg %p163
        %p573 = pneg %p187
        %p574 = pneg %p184
        %p575 = pneg %p208
        %p576 = pneg %p205
        %p577 = pneg %p229
        %p578 = pneg %p226
        %p579 = pneg %p250
        %p580 = pneg %p247
        %p581 = pneg %p271
        %p582 = pneg %p268
        %p583 = pneg %p292
        %p584 = pneg %p289
        %p585 = pneg %p313
        %p586 = pneg %p310
        %p587 = pneg %p334
        %p588 = pneg %p331
        %p589 = pneg %p355
        %p590 = pneg %p352
        %p591 = pneg %p376
        %p592 = pneg %p373
        %p593 = pneg %p402
        %p594 = pneg %p399
        %s595 = sand.u32 %s389, 1
        %s596 = scalar_lea.sflag [#allocation4], %s595
        %s597 = sand.u32 %s389, 1
        %s598 = smul.addr %s597, 8
        %s599 = scalar_lea.vmem [#allocation11], %s598
        %p600 = scmp.lt.s32.totalorder %s35, 1
        %s601 = scalar_select %p600, %s35, 1
        %s602 = smul.addr %s601, 8
        %s603 = scalar_lea.vmem %s0, %s602
        %v604 = vld [vmem:[%s603] sm:$0xff]
        %v605 = vld [vmem:[%s531] sm:$0xff]
        %v606 = vld [vmem:[%s2] sm:$0xff]
        %v607 = vld [vmem:[%s2 + $0x8] sm:$0xff]
        %v608 = vld [vmem:[%s2 + $0x10] sm:$0xff]
        %v609 = vld [vmem:[%s2 + $0x18] sm:$0xff]
        %v610 = vld [vmem:[%s3] sm:$0x1]
        %v612 = vlaneseq
        %v613 = vshrl.u32 %v612, 7
        %v614 = vsub.s32 0, %v613
        %v615 = vrot.slane %v610, %v614
        %vm617 = vcmask 261120
        %v619 = vsel %vm617, %v604, 0
        %621 = vmatprep.subr.mxu0 0.0
        %622 = vmatpush1.msra.mxu0 %v606
        %623 = vmatprep.subr.mxu0 0.0
        %624 = vmatpush1.msra.mxu0 %v607
        %625 = vmatprep.subr.mxu0 0.0
        %626 = vmatpush1.msra.mxu0 %v608
        %627 = vmatprep.subr.mxu0 0.0
        %628 = vmatpush1.msra.mxu0 %v609
        %629 = vmatprep.subr.mxu0 0.0
        %630 = vmatpush1.msra.mxu0 0.0
        %631 = vmatprep.subr.mxu0 0.0
        %632 = vmatpush1.msra.mxu0 0.0
        %633 = vmatprep.subr.mxu0 0.0
        %634 = vmatpush1.msra.mxu0 0.0
        %635 = vmatprep.subr.mxu0 0.0
        %636 = vmatpush1.msra.mxu0 0.0
        %637 = vmatprep.subr.mxu0 0.0
        %638 = vmatpush1.msra.mxu0 0.0
        %639 = vmatprep.subr.mxu0 0.0
        %640 = vmatpush1.msra.mxu0 0.0
        %641 = vmatprep.subr.mxu0 0.0
        %642 = vmatpush1.msra.mxu0 0.0
        %643 = vmatprep.subr.mxu0 0.0
        %644 = vmatpush1.msra.mxu0 0.0
        %645 = vmatprep.subr.mxu0 0.0
        %646 = vmatpush1.msra.mxu0 0.0
        %647 = vmatprep.subr.mxu0 0.0
        %648 = vmatpush1.msra.mxu0 0.0
        %649 = vmatprep.subr.mxu0 0.0
        %650 = vmatpush1.msra.mxu0 0.0
        %651 = vmatprep.subr.mxu0 0.0
        %652 = vmatpush1.msra.mxu0 0.0
        %653 = vmatprep.subr.mxu0 0.0
        %654 = vmatpush1.msra.mxu0 0.0
        %655 = vmatprep.subr.mxu0 0.0
        %656 = vmatpush1.msra.mxu0 0.0
        %657 = vmatprep.subr.mxu0 0.0
        %658 = vmatpush1.msra.mxu0 0.0
        %659 = vmatprep.subr.mxu0 0.0
        %660 = vmatpush1.msra.mxu0 0.0
        %661 = vmatprep.subr.mxu0 0.0
        %662 = vmatpush1.msra.mxu0 0.0
        %663 = vmatprep.subr.mxu0 0.0
        %664 = vmatpush1.msra.mxu0 0.0
        %665 = vmatprep.subr.mxu0 0.0
        %666 = vmatpush1.msra.mxu0 0.0
        %667 = vmatprep.subr.mxu0 0.0
        %668 = vmatpush1.msra.mxu0 0.0
        %669 = vmatprep.subr.mxu0 0.0
        %670 = vmatpush1.msra.mxu0 0.0
        %671 = vmatprep.subr.mxu0 0.0
        %672 = vmatpush1.msra.mxu0 0.0
        %673 = vmatprep.subr.mxu0 0.0
        %674 = vmatpush1.msra.mxu0 0.0
        %675 = vmatprep.subr.mxu0 0.0
        %676 = vmatpush1.msra.mxu0 0.0
        %677 = vmatprep.subr.mxu0 0.0
        %678 = vmatpush1.msra.mxu0 0.0
        %679 = vmatprep.subr.mxu0 0.0
        %680 = vmatpush1.msra.mxu0 0.0
        %681 = vmatprep.subr.mxu0 0.0
        %682 = vmatpush1.msra.mxu0 0.0
        %683 = vmatprep.subr.mxu0 0.0
        %684 = vmatpush1.msra.mxu0 0.0
        %685 = vmatprep.mubr.f32.mxu0 0.0
        %686 = vmatmul.mubr.f32.gmra.mrb[0].mxu0 %v619
        %v687 = vpop.f32.mrb[0].mxu0
        %v688 = vadd.f32 %v615, %v687
        %v689 = vpop.f32.mrb[0].mxu0
        %690 = vdwg.mxu0
        %v691 = vmul.f32 %v688, 0.35355338
        %693 = vrot.lane.b32.xlu0 %v691, 120
        %v694 = vpop.permute.xlu0 %693
        %695 = vrot.lane.b32.xlu0 %v691, 112
        %v696 = vpop.permute.xlu0 %695
        %697 = vrot.lane.b32.xlu0 %v691, 104
        %v698 = vpop.permute.xlu0 %697
        %700 = vrot.lane.b32.xlu0 %v688, 120
        %v701 = vpop.permute.xlu0 %700
        %702 = vrot.lane.b32.xlu0 %v688, 112
        %v703 = vpop.permute.xlu0 %702
        %704 = vrot.lane.b32.xlu0 %v688, 104
        %v705 = vpop.permute.xlu0 %704
        %v706 = vld [vmem:[%s7] sm:$0xff]
        %vm707 = vcmask 64512
        %v708 = vsel %vm707, %v691, 0
        %v710 = vsel %vm707, %v694, 0
        %v712 = vsel %vm707, %v696, 0
        %v714 = vsel %vm707, %v698, 0
        %716 = vmatprep.subr.mxu0 0.0
        %717 = vmatpush1.msra.mxu0 %v706
        %718 = vmatprep.subr.mxu0 0.0
        %719 = vmatpush1.msra.mxu0 0.0
        %720 = vmatprep.subr.mxu0 0.0
        %721 = vmatpush1.msra.mxu0 0.0
        %722 = vmatprep.subr.mxu0 0.0
        %723 = vmatpush1.msra.mxu0 0.0
        %724 = vmatprep.subr.mxu0 0.0
        %725 = vmatpush1.msra.mxu0 0.0
        %726 = vmatprep.subr.mxu0 0.0
        %727 = vmatpush1.msra.mxu0 0.0
        %728 = vmatprep.subr.mxu0 0.0
        %729 = vmatpush1.msra.mxu0 0.0
        %730 = vmatprep.subr.mxu0 0.0
        %731 = vmatpush1.msra.mxu0 0.0
        %732 = vmatprep.subr.mxu0 0.0
        %733 = vmatpush1.msra.mxu0 0.0
        %734 = vmatprep.subr.mxu0 0.0
        %735 = vmatpush1.msra.mxu0 0.0
        %736 = vmatprep.subr.mxu0 0.0
        %737 = vmatpush1.msra.mxu0 0.0
        %738 = vmatprep.subr.mxu0 0.0
        %739 = vmatpush1.msra.mxu0 0.0
        %740 = vmatprep.subr.mxu0 0.0
        %741 = vmatpush1.msra.mxu0 0.0
        %742 = vmatprep.subr.mxu0 0.0
        %743 = vmatpush1.msra.mxu0 0.0
        %744 = vmatprep.subr.mxu0 0.0
        %745 = vmatpush1.msra.mxu0 0.0
        %746 = vmatprep.subr.mxu0 0.0
        %747 = vmatpush1.msra.mxu0 0.0
        %748 = vmatprep.subr.mxu0 0.0
        %749 = vmatpush1.msra.mxu0 0.0
        %750 = vmatprep.subr.mxu0 0.0
        %751 = vmatpush1.msra.mxu0 0.0
        %752 = vmatprep.subr.mxu0 0.0
        %753 = vmatpush1.msra.mxu0 0.0
        %754 = vmatprep.subr.mxu0 0.0
        %755 = vmatpush1.msra.mxu0 0.0
        %756 = vmatprep.subr.mxu0 0.0
        %757 = vmatpush1.msra.mxu0 0.0
        %758 = vmatprep.subr.mxu0 0.0
        %759 = vmatpush1.msra.mxu0 0.0
        %760 = vmatprep.subr.mxu0 0.0
        %761 = vmatpush1.msra.mxu0 0.0
        %762 = vmatprep.subr.mxu0 0.0
        %763 = vmatpush1.msra.mxu0 0.0
        %764 = vmatprep.subr.mxu0 0.0
        %765 = vmatpush1.msra.mxu0 0.0
        %766 = vmatprep.subr.mxu0 0.0
        %767 = vmatpush1.msra.mxu0 0.0
        %768 = vmatprep.subr.mxu0 0.0
        %769 = vmatpush1.msra.mxu0 0.0
        %770 = vmatprep.subr.mxu0 0.0
        %771 = vmatpush1.msra.mxu0 0.0
        %772 = vmatprep.subr.mxu0 0.0
        %773 = vmatpush1.msra.mxu0 0.0
        %774 = vmatprep.subr.mxu0 0.0
        %775 = vmatpush1.msra.mxu0 0.0
        %776 = vmatprep.subr.mxu0 0.0
        %777 = vmatpush1.msra.mxu0 0.0
        %778 = vmatprep.subr.mxu0 0.0
        %779 = vmatpush1.msra.mxu0 0.0
        %780 = vmatprep.mubr.f32.mxu0 0.0
        %781 = vmatmul.mubr.f32.gmra.mrb[0].mxu0 %v708
        %v782 = vpop.f32.mrb[0].mxu0
        %v783 = vadd.f32 0.0, %v782
        %v784 = vpop.f32.mrb[0].mxu0
        %785 = vmatprep.mubr.f32.mxu0 0.0
        %786 = vmatmul.mubr.f32.gmra.mrb[0].mxu0 %v710
        %v787 = vpop.f32.mrb[0].mxu0
        %v788 = vadd.f32 0.0, %v787
        %v789 = vpop.f32.mrb[0].mxu0
        %790 = vmatprep.mubr.f32.mxu0 0.0
        %791 = vmatmul.mubr.f32.gmra.mrb[0].mxu0 %v712
        %v792 = vpop.f32.mrb[0].mxu0
        %v793 = vadd.f32 0.0, %v792
        %v794 = vpop.f32.mrb[0].mxu0
        %795 = vmatprep.mubr.f32.mxu0 0.0
        %796 = vmatmul.mubr.f32.gmra.mrb[0].mxu0 %v714
        %v797 = vpop.f32.mrb[0].mxu0
        %v798 = vadd.f32 0.0, %v797
        %v799 = vpop.f32.mrb[0].mxu0
        %800 = vdwg.mxu0
        %v801 = vlaneseq
        %v802 = vshrl.u32 %v801, 7
        %v803 = vlaneseq
        %v804 = vand.u32 %v803, 127
        %v805 = vsub.s32 %v802, %v804
        %vm806 = vcmp.gt.s32.totalorder %v805, 4294967292
        %v807 = vsel %vm806, %v805, 4294967292
        %vm808 = vcmp.lt.s32.totalorder %v807, 4
        %v809 = vsel %vm808, %v807, 4
        %v810 = vadd.s32 %v809, 4
        %vm811 = vcmp.eq.s32.totalorder %v810, 0
        %v812 = vsel %vm811, 1, 0
        %v813 = vcvt.s32.f32 %v812
        %815 = vset.pattern.permute.xlu0 0
        %816 = vperm.xlu0 %815, %v783
        %v817 = vpop.permute.xlu0 %816
        %820 = vset.pattern.permute.xlu0 0
        %821 = vperm.xlu0 %820, %v788
        %v822 = vpop.permute.xlu0 %821
        %825 = vset.pattern.permute.xlu0 0
        %826 = vperm.xlu0 %825, %v793
        %v827 = vpop.permute.xlu0 %826
        %830 = vset.pattern.permute.xlu0 0
        %831 = vperm.xlu0 %830, %v798
        %v832 = vpop.permute.xlu0 %831
        %v834 = vmul.f32 %v817, %v813
        %v835 = vmul.f32 %v822, %v813
        %v836 = vmul.f32 %v827, %v813
        %v837 = vmul.f32 %v832, %v813
        %v838 = vadd.f32 %v834, 0.0
        %v839 = vadd.f32 %v835, 0.0
        %v840 = vadd.f32 %v836, 0.0
        %v841 = vadd.f32 %v837, 0.0
        %vm842 = vcmp.eq.s32.totalorder %v810, 1
        %v843 = vsel %vm842, 1, 0
        %v844 = vcvt.s32.f32 %v843
        %845 = vset.pattern.permute.xlu0 1
        %846 = vperm.xlu0 %845, %v783
        %v847 = vpop.permute.xlu0 %846
        %849 = vset.pattern.permute.xlu0 1
        %850 = vperm.xlu0 %849, %v788
        %v851 = vpop.permute.xlu0 %850
        %853 = vset.pattern.permute.xlu0 1
        %854 = vperm.xlu0 %853, %v793
        %v855 = vpop.permute.xlu0 %854
        %857 = vset.pattern.permute.xlu0 1
        %858 = vperm.xlu0 %857, %v798
        %v859 = vpop.permute.xlu0 %858
        %v861 = vmul.f32 %v847, %v844
        %v862 = vmul.f32 %v851, %v844
        %v863 = vmul.f32 %v855, %v844
        %v864 = vmul.f32 %v859, %v844
        %v865 = vadd.f32 %v838, %v861
        %v866 = vadd.f32 %v839, %v862
        %v867 = vadd.f32 %v840, %v863
        %v868 = vadd.f32 %v841, %v864
        %vm869 = vcmp.eq.s32.totalorder %v810, 2
        %v870 = vsel %vm869, 1, 0
        %v871 = vcvt.s32.f32 %v870
        %872 = vset.pattern.permute.xlu0 2
        %873 = vperm.xlu0 %872, %v783
        %v874 = vpop.permute.xlu0 %873
        %876 = vset.pattern.permute.xlu0 2
        %877 = vperm.xlu0 %876, %v788
        %v878 = vpop.permute.xlu0 %877
        %880 = vset.pattern.permute.xlu0 2
        %881 = vperm.xlu0 %880, %v793
        %v882 = vpop.permute.xlu0 %881
        %884 = vset.pattern.permute.xlu0 2
        %885 = vperm.xlu0 %884, %v798
        %v886 = vpop.permute.xlu0 %885
        %v888 = vmul.f32 %v874, %v871
        %v889 = vmul.f32 %v878, %v871
        %v890 = vmul.f32 %v882, %v871
        %v891 = vmul.f32 %v886, %v871
        %v892 = vadd.f32 %v865, %v888
        %v893 = vadd.f32 %v866, %v889
        %v894 = vadd.f32 %v867, %v890
        %v895 = vadd.f32 %v868, %v891
        %vm896 = vcmp.eq.s32.totalorder %v810, 3
        %v897 = vsel %vm896, 1, 0
        %v898 = vcvt.s32.f32 %v897
        %899 = vset.pattern.permute.xlu0 3
        %900 = vperm.xlu0 %899, %v783
        %v901 = vpop.permute.xlu0 %900
        %903 = vset.pattern.permute.xlu0 3
        %904 = vperm.xlu0 %903, %v788
        %v905 = vpop.permute.xlu0 %904
        %907 = vset.pattern.permute.xlu0 3
        %908 = vperm.xlu0 %907, %v793
        %v909 = vpop.permute.xlu0 %908
        %911 = vset.pattern.permute.xlu0 3
        %912 = vperm.xlu0 %911, %v798
        %v913 = vpop.permute.xlu0 %912
        %v915 = vmul.f32 %v901, %v898
        %v916 = vmul.f32 %v905, %v898
        %v917 = vmul.f32 %v909, %v898
        %v918 = vmul.f32 %v913, %v898
        %v919 = vadd.f32 %v892, %v915
        %v920 = vadd.f32 %v893, %v916
        %v921 = vadd.f32 %v894, %v917
        %v922 = vadd.f32 %v895, %v918
        %vm923 = vcmp.eq.s32.totalorder %v810, 4
        %v924 = vsel %vm923, 1, 0
        %v925 = vcvt.s32.f32 %v924
        %926 = vset.pattern.permute.xlu0 4
        %927 = vperm.xlu0 %926, %v783
        %v928 = vpop.permute.xlu0 %927
        %930 = vset.pattern.permute.xlu0 4
        %931 = vperm.xlu0 %930, %v788
        %v932 = vpop.permute.xlu0 %931
        %934 = vset.pattern.permute.xlu0 4
        %935 = vperm.xlu0 %934, %v793
        %v936 = vpop.permute.xlu0 %935
        %938 = vset.pattern.permute.xlu0 4
        %939 = vperm.xlu0 %938, %v798
        %v940 = vpop.permute.xlu0 %939
        %v942 = vmul.f32 %v928, %v925
        %v943 = vmul.f32 %v932, %v925
        %v944 = vmul.f32 %v936, %v925
        %v945 = vmul.f32 %v940, %v925
        %v946 = vadd.f32 %v919, %v942
        %v947 = vadd.f32 %v920, %v943
        %v948 = vadd.f32 %v921, %v944
        %v949 = vadd.f32 %v922, %v945
        %vm950 = vcmp.eq.s32.totalorder %v810, 5
        %v951 = vsel %vm950, 1, 0
        %v952 = vcvt.s32.f32 %v951
        %953 = vset.pattern.permute.xlu0 5
        %954 = vperm.xlu0 %953, %v783
        %v955 = vpop.permute.xlu0 %954
        %957 = vset.pattern.permute.xlu0 5
        %958 = vperm.xlu0 %957, %v788
        %v959 = vpop.permute.xlu0 %958
        %961 = vset.pattern.permute.xlu0 5
        %962 = vperm.xlu0 %961, %v793
        %v963 = vpop.permute.xlu0 %962
        %965 = vset.pattern.permute.xlu0 5
        %966 = vperm.xlu0 %965, %v798
        %v967 = vpop.permute.xlu0 %966
        %v969 = vmul.f32 %v955, %v952
        %v970 = vmul.f32 %v959, %v952
        %v971 = vmul.f32 %v963, %v952
        %v972 = vmul.f32 %v967, %v952
        %v973 = vadd.f32 %v946, %v969
        %v974 = vadd.f32 %v947, %v970
        %v975 = vadd.f32 %v948, %v971
        %v976 = vadd.f32 %v949, %v972
        %vm977 = vcmp.eq.s32.totalorder %v810, 6
        %v978 = vsel %vm977, 1, 0
        %v979 = vcvt.s32.f32 %v978
        %980 = vset.pattern.permute.xlu0 6
        %981 = vperm.xlu0 %980, %v783
        %v982 = vpop.permute.xlu0 %981
        %984 = vset.pattern.permute.xlu0 6
        %985 = vperm.xlu0 %984, %v788
        %v986 = vpop.permute.xlu0 %985
        %988 = vset.pattern.permute.xlu0 6
        %989 = vperm.xlu0 %988, %v793
        %v990 = vpop.permute.xlu0 %989
        %992 = vset.pattern.permute.xlu0 6
        %993 = vperm.xlu0 %992, %v798
        %v994 = vpop.permute.xlu0 %993
        %v996 = vmul.f32 %v982, %v979
        %v997 = vmul.f32 %v986, %v979
        %v998 = vmul.f32 %v990, %v979
        %v999 = vmul.f32 %v994, %v979
        %v1000 = vadd.f32 %v973, %v996
        %v1001 = vadd.f32 %v974, %v997
        %v1002 = vadd.f32 %v975, %v998
        %v1003 = vadd.f32 %v976, %v999
        %vm1004 = vcmp.eq.s32.totalorder %v810, 7
        %v1005 = vsel %vm1004, 1, 0
        %v1006 = vcvt.s32.f32 %v1005
        %1007 = vset.pattern.permute.xlu0 7
        %1008 = vperm.xlu0 %1007, %v783
        %v1009 = vpop.permute.xlu0 %1008
        %1011 = vset.pattern.permute.xlu0 7
        %1012 = vperm.xlu0 %1011, %v788
        %v1013 = vpop.permute.xlu0 %1012
        %1015 = vset.pattern.permute.xlu0 7
        %1016 = vperm.xlu0 %1015, %v793
        %v1017 = vpop.permute.xlu0 %1016
        %1019 = vset.pattern.permute.xlu0 7
        %1020 = vperm.xlu0 %1019, %v798
        %v1021 = vpop.permute.xlu0 %1020
        %v1023 = vmul.f32 %v1009, %v1006
        %v1024 = vmul.f32 %v1013, %v1006
        %v1025 = vmul.f32 %v1017, %v1006
        %v1026 = vmul.f32 %v1021, %v1006
        %v1027 = vadd.f32 %v1000, %v1023
        %v1028 = vadd.f32 %v1001, %v1024
        %v1029 = vadd.f32 %v1002, %v1025
        %v1030 = vadd.f32 %v1003, %v1026
        %vm1031 = vcmp.eq.s32.totalorder %v810, 8
        %v1032 = vsel %vm1031, 1, 0
        %v1033 = vcvt.s32.f32 %v1032
        %1034 = vset.pattern.permute.xlu0 8
        %1035 = vperm.xlu0 %1034, %v783
        %v1036 = vpop.permute.xlu0 %1035
        %1038 = vset.pattern.permute.xlu0 8
        %1039 = vperm.xlu0 %1038, %v788
        %v1040 = vpop.permute.xlu0 %1039
        %1042 = vset.pattern.permute.xlu0 8
        %1043 = vperm.xlu0 %1042, %v793
        %v1044 = vpop.permute.xlu0 %1043
        %1046 = vset.pattern.permute.xlu0 8
        %1047 = vperm.xlu0 %1046, %v798
        %v1048 = vpop.permute.xlu0 %1047
        %v1050 = vmul.f32 %v1036, %v1033
        %v1051 = vmul.f32 %v1040, %v1033
        %v1052 = vmul.f32 %v1044, %v1033
        %v1053 = vmul.f32 %v1048, %v1033
        %v1054 = vadd.f32 %v1027, %v1050
        %v1055 = vadd.f32 %v1028, %v1051
        %v1056 = vadd.f32 %v1029, %v1052
        %v1057 = vadd.f32 %v1030, %v1053
        %1058 = vrot.lane.b32.xlu0 %v688, 96
        %v1059 = vpop.permute.xlu0 %1058
        %v1060 = vsel %vm707, %v1059, 0
        %1062 = vmatprep.subr.mxu0 0.0
        %1063 = vmatpush1.xpose.msra.mxu0 %v1060
        %1064 = vmatprep.subr.mxu0 0.0
        %1065 = vmatpush1.xpose.msra.mxu0 0.0
        %1066 = vmatprep.subr.mxu0 0.0
        %1067 = vmatpush1.xpose.msra.mxu0 0.0
        %1068 = vmatprep.subr.mxu0 0.0
        %1069 = vmatpush1.xpose.msra.mxu0 0.0
        %1070 = vmatprep.subr.mxu0 0.0
        %1071 = vmatpush1.xpose.msra.mxu0 0.0
        %1072 = vmatprep.subr.mxu0 0.0
        %1073 = vmatpush1.xpose.msra.mxu0 0.0
        %1074 = vmatprep.subr.mxu0 0.0
        %1075 = vmatpush1.xpose.msra.mxu0 0.0
        %1076 = vmatprep.subr.mxu0 0.0
        %1077 = vmatpush1.xpose.msra.mxu0 0.0
        %1078 = vmatprep.subr.mxu0 0.0
        %1079 = vmatpush1.xpose.msra.mxu0 0.0
        %1080 = vmatprep.subr.mxu0 0.0
        %1081 = vmatpush1.xpose.msra.mxu0 0.0
        %1082 = vmatprep.subr.mxu0 0.0
        %1083 = vmatpush1.xpose.msra.mxu0 0.0
        %1084 = vmatprep.subr.mxu0 0.0
        %1085 = vmatpush1.xpose.msra.mxu0 0.0
        %1086 = vmatprep.subr.mxu0 0.0
        %1087 = vmatpush1.xpose.msra.mxu0 0.0
        %1088 = vmatprep.subr.mxu0 0.0
        %1089 = vmatpush1.xpose.msra.mxu0 0.0
        %1090 = vmatprep.subr.mxu0 0.0
        %1091 = vmatpush1.xpose.msra.mxu0 0.0
        %1092 = vmatprep.subr.mxu0 0.0
        %1093 = vmatpush1.xpose.msra.mxu0 0.0
        %1094 = vmatprep.subr.mxu0 0.0
        %1095 = vmatpush1.xpose.msra.mxu0 0.0
        %1096 = vmatprep.subr.mxu0 0.0
        %1097 = vmatpush1.xpose.msra.mxu0 0.0
        %1098 = vmatprep.subr.mxu0 0.0
        %1099 = vmatpush1.xpose.msra.mxu0 0.0
        %1100 = vmatprep.subr.mxu0 0.0
        %1101 = vmatpush1.xpose.msra.mxu0 0.0
        %1102 = vmatprep.subr.mxu0 0.0
        %1103 = vmatpush1.xpose.msra.mxu0 0.0
        %1104 = vmatprep.subr.mxu0 0.0
        %1105 = vmatpush1.xpose.msra.mxu0 0.0
        %1106 = vmatprep.subr.mxu0 0.0
        %1107 = vmatpush1.xpose.msra.mxu0 0.0
        %1108 = vmatprep.subr.mxu0 0.0
        %1109 = vmatpush1.xpose.msra.mxu0 0.0
        %1110 = vmatprep.subr.mxu0 0.0
        %1111 = vmatpush1.xpose.msra.mxu0 0.0
        %1112 = vmatprep.subr.mxu0 0.0
        %1113 = vmatpush1.xpose.msra.mxu0 0.0
        %1114 = vmatprep.subr.mxu0 0.0
        %1115 = vmatpush1.xpose.msra.mxu0 0.0
        %1116 = vmatprep.subr.mxu0 0.0
        %1117 = vmatpush1.xpose.msra.mxu0 0.0
        %1118 = vmatprep.subr.mxu0 0.0
        %1119 = vmatpush1.xpose.msra.mxu0 0.0
        %1120 = vmatprep.subr.mxu0 0.0
        %1121 = vmatpush1.xpose.msra.mxu0 0.0
        %1122 = vmatprep.subr.mxu0 0.0
        %1123 = vmatpush1.xpose.msra.mxu0 0.0
        %1124 = vmatprep.subr.mxu0 0.0
        %1125 = vmatpush1.xpose.msra.mxu0 0.0
        %1126 = vmatprep.mubr.f32.mxu0 0.0
        %1127 = vmatmul.mubr.f32.gmra.mrb[0].mxu0 %v708
        %v1128 = vpop.f32.mrb[0].mxu0
        %v1129 = vadd.f32 %v1054, %v1128
        %v1130 = vpop.f32.mrb[0].mxu0
        %1131 = vdwg.mxu0
        %1132 = vrot.lane.b32.xlu0 %v701, 96
        %v1133 = vpop.permute.xlu0 %1132
        %v1134 = vsel %vm707, %v1133, 0
        %1136 = vmatprep.subr.mxu0 0.0
        %1137 = vmatpush1.xpose.msra.mxu0 %v1134
        %1138 = vmatprep.subr.mxu0 0.0
        %1139 = vmatpush1.xpose.msra.mxu0 0.0
        %1140 = vmatprep.subr.mxu0 0.0
        %1141 = vmatpush1.xpose.msra.mxu0 0.0
        %1142 = vmatprep.subr.mxu0 0.0
        %1143 = vmatpush1.xpose.msra.mxu0 0.0
        %1144 = vmatprep.subr.mxu0 0.0
        %1145 = vmatpush1.xpose.msra.mxu0 0.0
        %1146 = vmatprep.subr.mxu0 0.0
        %1147 = vmatpush1.xpose.msra.mxu0 0.0
        %1148 = vmatprep.subr.mxu0 0.0
        %1149 = vmatpush1.xpose.msra.mxu0 0.0
        %1150 = vmatprep.subr.mxu0 0.0
        %1151 = vmatpush1.xpose.msra.mxu0 0.0
        %1152 = vmatprep.subr.mxu0 0.0
        %1153 = vmatpush1.xpose.msra.mxu0 0.0
        %1154 = vmatprep.subr.mxu0 0.0
        %1155 = vmatpush1.xpose.msra.mxu0 0.0
        %1156 = vmatprep.subr.mxu0 0.0
        %1157 = vmatpush1.xpose.msra.mxu0 0.0
        %1158 = vmatprep.subr.mxu0 0.0
        %1159 = vmatpush1.xpose.msra.mxu0 0.0
        %1160 = vmatprep.subr.mxu0 0.0
        %1161 = vmatpush1.xpose.msra.mxu0 0.0
        %1162 = vmatprep.subr.mxu0 0.0
        %1163 = vmatpush1.xpose.msra.mxu0 0.0
        %1164 = vmatprep.subr.mxu0 0.0
        %1165 = vmatpush1.xpose.msra.mxu0 0.0
        %1166 = vmatprep.subr.mxu0 0.0
        %1167 = vmatpush1.xpose.msra.mxu0 0.0
        %1168 = vmatprep.subr.mxu0 0.0
        %1169 = vmatpush1.xpose.msra.mxu0 0.0
        %1170 = vmatprep.subr.mxu0 0.0
        %1171 = vmatpush1.xpose.msra.mxu0 0.0
        %1172 = vmatprep.subr.mxu0 0.0
        %1173 = vmatpush1.xpose.msra.mxu0 0.0
        %1174 = vmatprep.subr.mxu0 0.0
        %1175 = vmatpush1.xpose.msra.mxu0 0.0
        %1176 = vmatprep.subr.mxu0 0.0
        %1177 = vmatpush1.xpose.msra.mxu0 0.0
        %1178 = vmatprep.subr.mxu0 0.0
        %1179 = vmatpush1.xpose.msra.mxu0 0.0
        %1180 = vmatprep.subr.mxu0 0.0
        %1181 = vmatpush1.xpose.msra.mxu0 0.0
        %1182 = vmatprep.subr.mxu0 0.0
        %1183 = vmatpush1.xpose.msra.mxu0 0.0
        %1184 = vmatprep.subr.mxu0 0.0
        %1185 = vmatpush1.xpose.msra.mxu0 0.0
        %1186 = vmatprep.subr.mxu0 0.0
        %1187 = vmatpush1.xpose.msra.mxu0 0.0
        %1188 = vmatprep.subr.mxu0 0.0
        %1189 = vmatpush1.xpose.msra.mxu0 0.0
        %1190 = vmatprep.subr.mxu0 0.0
        %1191 = vmatpush1.xpose.msra.mxu0 0.0
        %1192 = vmatprep.subr.mxu0 0.0
        %1193 = vmatpush1.xpose.msra.mxu0 0.0
        %1194 = vmatprep.subr.mxu0 0.0
        %1195 = vmatpush1.xpose.msra.mxu0 0.0
        %1196 = vmatprep.subr.mxu0 0.0
        %1197 = vmatpush1.xpose.msra.mxu0 0.0
        %1198 = vmatprep.subr.mxu0 0.0
        %1199 = vmatpush1.xpose.msra.mxu0 0.0
        %1200 = vmatprep.mubr.f32.mxu0 0.0
        %1201 = vmatmul.mubr.f32.gmra.mrb[0].mxu0 %v710
        %v1202 = vpop.f32.mrb[0].mxu0
        %v1203 = vadd.f32 %v1055, %v1202
        %v1204 = vpop.f32.mrb[0].mxu0
        %1205 = vdwg.mxu0
        %1206 = vrot.lane.b32.xlu0 %v703, 96
        %v1207 = vpop.permute.xlu0 %1206
        %v1208 = vsel %vm707, %v1207, 0
        %1210 = vmatprep.subr.mxu0 0.0
        %1211 = vmatpush1.xpose.msra.mxu0 %v1208
        %1212 = vmatprep.subr.mxu0 0.0
        %1213 = vmatpush1.xpose.msra.mxu0 0.0
        %1214 = vmatprep.subr.mxu0 0.0
        %1215 = vmatpush1.xpose.msra.mxu0 0.0
        %1216 = vmatprep.subr.mxu0 0.0
        %1217 = vmatpush1.xpose.msra.mxu0 0.0
        %1218 = vmatprep.subr.mxu0 0.0
        %1219 = vmatpush1.xpose.msra.mxu0 0.0
        %1220 = vmatprep.subr.mxu0 0.0
        %1221 = vmatpush1.xpose.msra.mxu0 0.0
        %1222 = vmatprep.subr.mxu0 0.0
        %1223 = vmatpush1.xpose.msra.mxu0 0.0
        %1224 = vmatprep.subr.mxu0 0.0
        %1225 = vmatpush1.xpose.msra.mxu0 0.0
        %1226 = vmatprep.subr.mxu0 0.0
        %1227 = vmatpush1.xpose.msra.mxu0 0.0
        %1228 = vmatprep.subr.mxu0 0.0
        %1229 = vmatpush1.xpose.msra.mxu0 0.0
        %1230 = vmatprep.subr.mxu0 0.0
        %1231 = vmatpush1.xpose.msra.mxu0 0.0
        %1232 = vmatprep.subr.mxu0 0.0
        %1233 = vmatpush1.xpose.msra.mxu0 0.0
        %1234 = vmatprep.subr.mxu0 0.0
        %1235 = vmatpush1.xpose.msra.mxu0 0.0
        %1236 = vmatprep.subr.mxu0 0.0
        %1237 = vmatpush1.xpose.msra.mxu0 0.0
        %1238 = vmatprep.subr.mxu0 0.0
        %1239 = vmatpush1.xpose.msra.mxu0 0.0
        %1240 = vmatprep.subr.mxu0 0.0
        %1241 = vmatpush1.xpose.msra.mxu0 0.0
        %1242 = vmatprep.subr.mxu0 0.0
        %1243 = vmatpush1.xpose.msra.mxu0 0.0
        %1244 = vmatprep.subr.mxu0 0.0
        %1245 = vmatpush1.xpose.msra.mxu0 0.0
        %1246 = vmatprep.subr.mxu0 0.0
        %1247 = vmatpush1.xpose.msra.mxu0 0.0
        %1248 = vmatprep.subr.mxu0 0.0
        %1249 = vmatpush1.xpose.msra.mxu0 0.0
        %1250 = vmatprep.subr.mxu0 0.0
        %1251 = vmatpush1.xpose.msra.mxu0 0.0
        %1252 = vmatprep.subr.mxu0 0.0
        %1253 = vmatpush1.xpose.msra.mxu0 0.0
        %1254 = vmatprep.subr.mxu0 0.0
        %1255 = vmatpush1.xpose.msra.mxu0 0.0
        %1256 = vmatprep.subr.mxu0 0.0
        %1257 = vmatpush1.xpose.msra.mxu0 0.0
        %1258 = vmatprep.subr.mxu0 0.0
        %1259 = vmatpush1.xpose.msra.mxu0 0.0
        %1260 = vmatprep.subr.mxu0 0.0
        %1261 = vmatpush1.xpose.msra.mxu0 0.0
        %1262 = vmatprep.subr.mxu0 0.0
        %1263 = vmatpush1.xpose.msra.mxu0 0.0
        %1264 = vmatprep.subr.mxu0 0.0
        %1265 = vmatpush1.xpose.msra.mxu0 0.0
        %1266 = vmatprep.subr.mxu0 0.0
        %1267 = vmatpush1.xpose.msra.mxu0 0.0
        %1268 = vmatprep.subr.mxu0 0.0
        %1269 = vmatpush1.xpose.msra.mxu0 0.0
        %1270 = vmatprep.subr.mxu0 0.0
        %1271 = vmatpush1.xpose.msra.mxu0 0.0
        %1272 = vmatprep.subr.mxu0 0.0
        %1273 = vmatpush1.xpose.msra.mxu0 0.0
        %1274 = vmatprep.mubr.f32.mxu0 0.0
        %1275 = vmatmul.mubr.f32.gmra.mrb[0].mxu0 %v712
        %v1276 = vpop.f32.mrb[0].mxu0
        %v1277 = vadd.f32 %v1056, %v1276
        %v1278 = vpop.f32.mrb[0].mxu0
        %1279 = vdwg.mxu0
        %1280 = vrot.lane.b32.xlu0 %v705, 96
        %v1281 = vpop.permute.xlu0 %1280
        %v1282 = vsel %vm707, %v1281, 0
        %1284 = vmatprep.subr.mxu0 0.0
        %1285 = vmatpush1.xpose.msra.mxu0 %v1282
        %1286 = vmatprep.subr.mxu0 0.0
        %1287 = vmatpush1.xpose.msra.mxu0 0.0
        %1288 = vmatprep.subr.mxu0 0.0
        %1289 = vmatpush1.xpose.msra.mxu0 0.0
        %1290 = vmatprep.subr.mxu0 0.0
        %1291 = vmatpush1.xpose.msra.mxu0 0.0
        %1292 = vmatprep.subr.mxu0 0.0
        %1293 = vmatpush1.xpose.msra.mxu0 0.0
        %1294 = vmatprep.subr.mxu0 0.0
        %1295 = vmatpush1.xpose.msra.mxu0 0.0
        %1296 = vmatprep.subr.mxu0 0.0
        %1297 = vmatpush1.xpose.msra.mxu0 0.0
        %1298 = vmatprep.subr.mxu0 0.0
        %1299 = vmatpush1.xpose.msra.mxu0 0.0
        %1300 = vmatprep.subr.mxu0 0.0
        %1301 = vmatpush1.xpose.msra.mxu0 0.0
        %1302 = vmatprep.subr.mxu0 0.0
        %1303 = vmatpush1.xpose.msra.mxu0 0.0
        %1304 = vmatprep.subr.mxu0 0.0
        %1305 = vmatpush1.xpose.msra.mxu0 0.0
        %1306 = vmatprep.subr.mxu0 0.0
        %1307 = vmatpush1.xpose.msra.mxu0 0.0
        %1308 = vmatprep.subr.mxu0 0.0
        %1309 = vmatpush1.xpose.msra.mxu0 0.0
        %1310 = vmatprep.subr.mxu0 0.0
        %1311 = vmatpush1.xpose.msra.mxu0 0.0
        %1312 = vmatprep.subr.mxu0 0.0
        %1313 = vmatpush1.xpose.msra.mxu0 0.0
        %1314 = vmatprep.subr.mxu0 0.0
        %1315 = vmatpush1.xpose.msra.mxu0 0.0
        %1316 = vmatprep.subr.mxu0 0.0
        %1317 = vmatpush1.xpose.msra.mxu0 0.0
        %1318 = vmatprep.subr.mxu0 0.0
        %1319 = vmatpush1.xpose.msra.mxu0 0.0
        %1320 = vmatprep.subr.mxu0 0.0
        %1321 = vmatpush1.xpose.msra.mxu0 0.0
        %1322 = vmatprep.subr.mxu0 0.0
        %1323 = vmatpush1.xpose.msra.mxu0 0.0
        %1324 = vmatprep.subr.mxu0 0.0
        %1325 = vmatpush1.xpose.msra.mxu0 0.0
        %1326 = vmatprep.subr.mxu0 0.0
        %1327 = vmatpush1.xpose.msra.mxu0 0.0
        %1328 = vmatprep.subr.mxu0 0.0
        %1329 = vmatpush1.xpose.msra.mxu0 0.0
        %1330 = vmatprep.subr.mxu0 0.0
        %1331 = vmatpush1.xpose.msra.mxu0 0.0
        %1332 = vmatprep.subr.mxu0 0.0
        %1333 = vmatpush1.xpose.msra.mxu0 0.0
        %1334 = vmatprep.subr.mxu0 0.0
        %1335 = vmatpush1.xpose.msra.mxu0 0.0
        %1336 = vmatprep.subr.mxu0 0.0
        %1337 = vmatpush1.xpose.msra.mxu0 0.0
        %1338 = vmatprep.subr.mxu0 0.0
        %1339 = vmatpush1.xpose.msra.mxu0 0.0
        %1340 = vmatprep.subr.mxu0 0.0
        %1341 = vmatpush1.xpose.msra.mxu0 0.0
        %1342 = vmatprep.subr.mxu0 0.0
        %1343 = vmatpush1.xpose.msra.mxu0 0.0
        %1344 = vmatprep.subr.mxu0 0.0
        %1345 = vmatpush1.xpose.msra.mxu0 0.0
        %1346 = vmatprep.subr.mxu0 0.0
        %1347 = vmatpush1.xpose.msra.mxu0 0.0
        %1348 = vmatprep.mubr.f32.mxu0 0.0
        %1349 = vmatmul.mubr.f32.gmra.mrb[0].mxu0 %v714
        %v1350 = vpop.f32.mrb[0].mxu0
        %v1351 = vadd.f32 %v1057, %v1350
        %v1352 = vpop.f32.mrb[0].mxu0
        %1353 = vdwg.mxu0
        %v1354 = vadd.f32 %v1129, %v605
        %v1355 = vadd.f32 %v1203, %v605
        %v1356 = vadd.f32 %v1277, %v605
        %v1357 = vadd.f32 %v1351, %v605
        %v1358 = vsel %vm707, %v1354, -inf
        %1359 = vmax.xlane.f32.xlu0 %v1358
        %v1360 = vpop.xlane.xlu0 %1359
        %v1361 = vsel %vm707, %v1355, -inf
        %1362 = vmax.xlane.f32.xlu0 %v1361
        %v1363 = vpop.xlane.xlu0 %1362
        %v1364 = vsel %vm707, %v1356, -inf
        %1365 = vmax.xlane.f32.xlu0 %v1364
        %v1366 = vpop.xlane.xlu0 %1365
        %v1367 = vsel %vm707, %v1357, -inf
        %1368 = vmax.xlane.f32.xlu0 %v1367
        %v1369 = vpop.xlane.xlu0 %1368
        %v1370 = vsub.f32 %v1354, %v1360
        %v1371 = vsub.f32 %v1355, %v1363
        %v1372 = vsub.f32 %v1356, %v1366
        %v1373 = vsub.f32 %v1357, %v1369
        %v1374 = vmul.f32 %v1370, 1.442695
        %v1375 = vpow.pop %v1374
        %v1376 = vmul.f32 %v1371, 1.442695
        %v1377 = vpow.pop %v1376
        %v1378 = vmul.f32 %v1372, 1.442695
        %v1379 = vpow.pop %v1378
        %v1380 = vmul.f32 %v1373, 1.442695
        %v1381 = vpow.pop %v1380
        %v1382 = vsel %vm707, %v1375, 0.0
        %1383 = vadd.xlane.f32.xlu0 %v1382
        %v1384 = vpop.xlane.xlu0 %1383
        %v1385 = vsel %vm707, %v1377, 0.0
        %1386 = vadd.xlane.f32.xlu0 %v1385
        %v1387 = vpop.xlane.xlu0 %1386
        %v1388 = vsel %vm707, %v1379, 0.0
        %1389 = vadd.xlane.f32.xlu0 %v1388
        %v1390 = vpop.xlane.xlu0 %1389
        %v1391 = vsel %vm707, %v1381, 0.0
        %1392 = vadd.xlane.f32.xlu0 %v1391
        %v1393 = vpop.xlane.xlu0 %1392
        %v1394 = vrcp.pop %v1384
        %v1395 = vrcp.pop %v1387
        %v1396 = vrcp.pop %v1390
        %v1397 = vrcp.pop %v1393
        %v1398 = vmul.f32 %v1375, %v1394
        %v1399 = vmul.f32 %v1377, %v1395
        %v1400 = vmul.f32 %v1379, %v1396
        %v1401 = vmul.f32 %v1381, %v1397
        %v1402 = vld [vmem:[%s6] sm:$0xff]
        %v1403 = vld [vmem:[%s6 + $0x8] sm:$0x1]
        %v1404 = vmul.f32 %v1398, %v813
        %v1405 = vmul.f32 %v1399, %v813
        %v1406 = vmul.f32 %v1400, %v813
        %v1407 = vmul.f32 %v1401, %v813
        %v1408 = vsel %vm707, %v1404, 0.0
        %1409 = vadd.xlane.f32.xlu0 %v1408
        %v1410 = vpop.xlane.xlu0 %1409
        %v1411 = vsel %vm707, %v1405, 0.0
        %1412 = vadd.xlane.f32.xlu0 %v1411
        %v1413 = vpop.xlane.xlu0 %1412
        %v1414 = vsel %vm707, %v1406, 0.0
        %1415 = vadd.xlane.f32.xlu0 %v1414
        %v1416 = vpop.xlane.xlu0 %1415
        %v1417 = vsel %vm707, %v1407, 0.0
        %1418 = vadd.xlane.f32.xlu0 %v1417
        %v1419 = vpop.xlane.xlu0 %1418
        %v1420 = vlaneseq
        %v1421 = vshrl.u32 %v1420, 7
        %v1422 = vsub.s32 0, %v1421
        %v1423 = vrot.slane %v1402, %v1422
        %v1424 = vmul.f32 %v1410, %v1423
        %v1425 = vmul.f32 %v1413, %v1423
        %v1426 = vmul.f32 %v1416, %v1423
        %v1427 = vmul.f32 %v1419, %v1423
        %1428 = vrot.lane.b32.xlu0 %v688, 64
        %v1429 = vpop.permute.xlu0 %1428
        %v1432 = vsel %vm707, %v1398, 0
        %1434 = vmatprep.subr.mxu0 0.0
        %1435 = vmatpush1.msra.mxu0 %v1429
        %1436 = vmatprep.subr.mxu0 0.0
        %1437 = vmatpush1.msra.mxu0 0.0
        %1438 = vmatprep.subr.mxu0 0.0
        %1439 = vmatpush1.msra.mxu0 0.0
        %1440 = vmatprep.subr.mxu0 0.0
        %1441 = vmatpush1.msra.mxu0 0.0
        %1442 = vmatprep.subr.mxu0 0.0
        %1443 = vmatpush1.msra.mxu0 0.0
        %1444 = vmatprep.subr.mxu0 0.0
        %1445 = vmatpush1.msra.mxu0 0.0
        %1446 = vmatprep.subr.mxu0 0.0
        %1447 = vmatpush1.msra.mxu0 0.0
        %1448 = vmatprep.subr.mxu0 0.0
        %1449 = vmatpush1.msra.mxu0 0.0
        %1450 = vmatprep.subr.mxu0 0.0
        %1451 = vmatpush1.msra.mxu0 0.0
        %1452 = vmatprep.subr.mxu0 0.0
        %1453 = vmatpush1.msra.mxu0 0.0
        %1454 = vmatprep.subr.mxu0 0.0
        %1455 = vmatpush1.msra.mxu0 0.0
        %1456 = vmatprep.subr.mxu0 0.0
        %1457 = vmatpush1.msra.mxu0 0.0
        %1458 = vmatprep.subr.mxu0 0.0
        %1459 = vmatpush1.msra.mxu0 0.0
        %1460 = vmatprep.subr.mxu0 0.0
        %1461 = vmatpush1.msra.mxu0 0.0
        %1462 = vmatprep.subr.mxu0 0.0
        %1463 = vmatpush1.msra.mxu0 0.0
        %1464 = vmatprep.subr.mxu0 0.0
        %1465 = vmatpush1.msra.mxu0 0.0
        %1466 = vmatprep.subr.mxu0 0.0
        %1467 = vmatpush1.msra.mxu0 0.0
        %1468 = vmatprep.subr.mxu0 0.0
        %1469 = vmatpush1.msra.mxu0 0.0
        %1470 = vmatprep.subr.mxu0 0.0
        %1471 = vmatpush1.msra.mxu0 0.0
        %1472 = vmatprep.subr.mxu0 0.0
        %1473 = vmatpush1.msra.mxu0 0.0
        %1474 = vmatprep.subr.mxu0 0.0
        %1475 = vmatpush1.msra.mxu0 0.0
        %1476 = vmatprep.subr.mxu0 0.0
        %1477 = vmatpush1.msra.mxu0 0.0
        %1478 = vmatprep.subr.mxu0 0.0
        %1479 = vmatpush1.msra.mxu0 0.0
        %1480 = vmatprep.subr.mxu0 0.0
        %1481 = vmatpush1.msra.mxu0 0.0
        %1482 = vmatprep.subr.mxu0 0.0
        %1483 = vmatpush1.msra.mxu0 0.0
        %1484 = vmatprep.subr.mxu0 0.0
        %1485 = vmatpush1.msra.mxu0 0.0
        %1486 = vmatprep.subr.mxu0 0.0
        %1487 = vmatpush1.msra.mxu0 0.0
        %1488 = vmatprep.subr.mxu0 0.0
        %1489 = vmatpush1.msra.mxu0 0.0
        %1490 = vmatprep.subr.mxu0 0.0
        %1491 = vmatpush1.msra.mxu0 0.0
        %1492 = vmatprep.subr.mxu0 0.0
        %1493 = vmatpush1.msra.mxu0 0.0
        %1494 = vmatprep.subr.mxu0 0.0
        %1495 = vmatpush1.msra.mxu0 0.0
        %1496 = vmatprep.subr.mxu0 0.0
        %1497 = vmatpush1.msra.mxu0 0.0
        %1498 = vmatprep.mubr.f32.mxu0 0.0
        %1499 = vmatmul.mubr.f32.gmra.mrb[0].mxu0 %v1432
        %v1500 = vpop.f32.mrb[0].mxu0
        %v1501 = vadd.f32 %v1424, %v1500
        %v1502 = vpop.f32.mrb[0].mxu0
        %1503 = vdwg.mxu0
        %1504 = vrot.lane.b32.xlu0 %v701, 64
        %v1505 = vpop.permute.xlu0 %1504
        %v1508 = vsel %vm707, %v1399, 0
        %1510 = vmatprep.subr.mxu0 0.0
        %1511 = vmatpush1.msra.mxu0 %v1505
        %1512 = vmatprep.subr.mxu0 0.0
        %1513 = vmatpush1.msra.mxu0 0.0
        %1514 = vmatprep.subr.mxu0 0.0
        %1515 = vmatpush1.msra.mxu0 0.0
        %1516 = vmatprep.subr.mxu0 0.0
        %1517 = vmatpush1.msra.mxu0 0.0
        %1518 = vmatprep.subr.mxu0 0.0
        %1519 = vmatpush1.msra.mxu0 0.0
        %1520 = vmatprep.subr.mxu0 0.0
        %1521 = vmatpush1.msra.mxu0 0.0
        %1522 = vmatprep.subr.mxu0 0.0
        %1523 = vmatpush1.msra.mxu0 0.0
        %1524 = vmatprep.subr.mxu0 0.0
        %1525 = vmatpush1.msra.mxu0 0.0
        %1526 = vmatprep.subr.mxu0 0.0
        %1527 = vmatpush1.msra.mxu0 0.0
        %1528 = vmatprep.subr.mxu0 0.0
        %1529 = vmatpush1.msra.mxu0 0.0
        %1530 = vmatprep.subr.mxu0 0.0
        %1531 = vmatpush1.msra.mxu0 0.0
        %1532 = vmatprep.subr.mxu0 0.0
        %1533 = vmatpush1.msra.mxu0 0.0
        %1534 = vmatprep.subr.mxu0 0.0
        %1535 = vmatpush1.msra.mxu0 0.0
        %1536 = vmatprep.subr.mxu0 0.0
        %1537 = vmatpush1.msra.mxu0 0.0
        %1538 = vmatprep.subr.mxu0 0.0
        %1539 = vmatpush1.msra.mxu0 0.0
        %1540 = vmatprep.subr.mxu0 0.0
        %1541 = vmatpush1.msra.mxu0 0.0
        %1542 = vmatprep.subr.mxu0 0.0
        %1543 = vmatpush1.msra.mxu0 0.0
        %1544 = vmatprep.subr.mxu0 0.0
        %1545 = vmatpush1.msra.mxu0 0.0
        %1546 = vmatprep.subr.mxu0 0.0
        %1547 = vmatpush1.msra.mxu0 0.0
        %1548 = vmatprep.subr.mxu0 0.0
        %1549 = vmatpush1.msra.mxu0 0.0
        %1550 = vmatprep.subr.mxu0 0.0
        %1551 = vmatpush1.msra.mxu0 0.0
        %1552 = vmatprep.subr.mxu0 0.0
        %1553 = vmatpush1.msra.mxu0 0.0
        %1554 = vmatprep.subr.mxu0 0.0
        %1555 = vmatpush1.msra.mxu0 0.0
        %1556 = vmatprep.subr.mxu0 0.0
        %1557 = vmatpush1.msra.mxu0 0.0
        %1558 = vmatprep.subr.mxu0 0.0
        %1559 = vmatpush1.msra.mxu0 0.0
        %1560 = vmatprep.subr.mxu0 0.0
        %1561 = vmatpush1.msra.mxu0 0.0
        %1562 = vmatprep.subr.mxu0 0.0
        %1563 = vmatpush1.msra.mxu0 0.0
        %1564 = vmatprep.subr.mxu0 0.0
        %1565 = vmatpush1.msra.mxu0 0.0
        %1566 = vmatprep.subr.mxu0 0.0
        %1567 = vmatpush1.msra.mxu0 0.0
        %1568 = vmatprep.subr.mxu0 0.0
        %1569 = vmatpush1.msra.mxu0 0.0
        %1570 = vmatprep.subr.mxu0 0.0
        %1571 = vmatpush1.msra.mxu0 0.0
        %1572 = vmatprep.subr.mxu0 0.0
        %1573 = vmatpush1.msra.mxu0 0.0
        %1574 = vmatprep.mubr.f32.mxu0 0.0
        %1575 = vmatmul.mubr.f32.gmra.mrb[0].mxu0 %v1508
        %v1576 = vpop.f32.mrb[0].mxu0
        %v1577 = vadd.f32 %v1425, %v1576
        %v1578 = vpop.f32.mrb[0].mxu0
        %1579 = vdwg.mxu0
        %1580 = vrot.lane.b32.xlu0 %v703, 64
        %v1581 = vpop.permute.xlu0 %1580
        %v1584 = vsel %vm707, %v1400, 0
        %1586 = vmatprep.subr.mxu0 0.0
        %1587 = vmatpush1.msra.mxu0 %v1581
        %1588 = vmatprep.subr.mxu0 0.0
        %1589 = vmatpush1.msra.mxu0 0.0
        %1590 = vmatprep.subr.mxu0 0.0
        %1591 = vmatpush1.msra.mxu0 0.0
        %1592 = vmatprep.subr.mxu0 0.0
        %1593 = vmatpush1.msra.mxu0 0.0
        %1594 = vmatprep.subr.mxu0 0.0
        %1595 = vmatpush1.msra.mxu0 0.0
        %1596 = vmatprep.subr.mxu0 0.0
        %1597 = vmatpush1.msra.mxu0 0.0
        %1598 = vmatprep.subr.mxu0 0.0
        %1599 = vmatpush1.msra.mxu0 0.0
        %1600 = vmatprep.subr.mxu0 0.0
        %1601 = vmatpush1.msra.mxu0 0.0
        %1602 = vmatprep.subr.mxu0 0.0
        %1603 = vmatpush1.msra.mxu0 0.0
        %1604 = vmatprep.subr.mxu0 0.0
        %1605 = vmatpush1.msra.mxu0 0.0
        %1606 = vmatprep.subr.mxu0 0.0
        %1607 = vmatpush1.msra.mxu0 0.0
        %1608 = vmatprep.subr.mxu0 0.0
        %1609 = vmatpush1.msra.mxu0 0.0
        %1610 = vmatprep.subr.mxu0 0.0
        %1611 = vmatpush1.msra.mxu0 0.0
        %1612 = vmatprep.subr.mxu0 0.0
        %1613 = vmatpush1.msra.mxu0 0.0
        %1614 = vmatprep.subr.mxu0 0.0
        %1615 = vmatpush1.msra.mxu0 0.0
        %1616 = vmatprep.subr.mxu0 0.0
        %1617 = vmatpush1.msra.mxu0 0.0
        %1618 = vmatprep.subr.mxu0 0.0
        %1619 = vmatpush1.msra.mxu0 0.0
        %1620 = vmatprep.subr.mxu0 0.0
        %1621 = vmatpush1.msra.mxu0 0.0
        %1622 = vmatprep.subr.mxu0 0.0
        %1623 = vmatpush1.msra.mxu0 0.0
        %1624 = vmatprep.subr.mxu0 0.0
        %1625 = vmatpush1.msra.mxu0 0.0
        %1626 = vmatprep.subr.mxu0 0.0
        %1627 = vmatpush1.msra.mxu0 0.0
        %1628 = vmatprep.subr.mxu0 0.0
        %1629 = vmatpush1.msra.mxu0 0.0
        %1630 = vmatprep.subr.mxu0 0.0
        %1631 = vmatpush1.msra.mxu0 0.0
        %1632 = vmatprep.subr.mxu0 0.0
        %1633 = vmatpush1.msra.mxu0 0.0
        %1634 = vmatprep.subr.mxu0 0.0
        %1635 = vmatpush1.msra.mxu0 0.0
        %1636 = vmatprep.subr.mxu0 0.0
        %1637 = vmatpush1.msra.mxu0 0.0
        %1638 = vmatprep.subr.mxu0 0.0
        %1639 = vmatpush1.msra.mxu0 0.0
        %1640 = vmatprep.subr.mxu0 0.0
        %1641 = vmatpush1.msra.mxu0 0.0
        %1642 = vmatprep.subr.mxu0 0.0
        %1643 = vmatpush1.msra.mxu0 0.0
        %1644 = vmatprep.subr.mxu0 0.0
        %1645 = vmatpush1.msra.mxu0 0.0
        %1646 = vmatprep.subr.mxu0 0.0
        %1647 = vmatpush1.msra.mxu0 0.0
        %1648 = vmatprep.subr.mxu0 0.0
        %1649 = vmatpush1.msra.mxu0 0.0
        %1650 = vmatprep.mubr.f32.mxu0 0.0
        %1651 = vmatmul.mubr.f32.gmra.mrb[0].mxu0 %v1584
        %v1652 = vpop.f32.mrb[0].mxu0
        %v1653 = vadd.f32 %v1426, %v1652
        %v1654 = vpop.f32.mrb[0].mxu0
        %1655 = vdwg.mxu0
        %1656 = vrot.lane.b32.xlu0 %v705, 64
        %v1657 = vpop.permute.xlu0 %1656
        %v1660 = vsel %vm707, %v1401, 0
        %1662 = vmatprep.subr.mxu0 0.0
        %1663 = vmatpush1.msra.mxu0 %v1657
        %1664 = vmatprep.subr.mxu0 0.0
        %1665 = vmatpush1.msra.mxu0 0.0
        %1666 = vmatprep.subr.mxu0 0.0
        %1667 = vmatpush1.msra.mxu0 0.0
        %1668 = vmatprep.subr.mxu0 0.0
        %1669 = vmatpush1.msra.mxu0 0.0
        %1670 = vmatprep.subr.mxu0 0.0
        %1671 = vmatpush1.msra.mxu0 0.0
        %1672 = vmatprep.subr.mxu0 0.0
        %1673 = vmatpush1.msra.mxu0 0.0
        %1674 = vmatprep.subr.mxu0 0.0
        %1675 = vmatpush1.msra.mxu0 0.0
        %1676 = vmatprep.subr.mxu0 0.0
        %1677 = vmatpush1.msra.mxu0 0.0
        %1678 = vmatprep.subr.mxu0 0.0
        %1679 = vmatpush1.msra.mxu0 0.0
        %1680 = vmatprep.subr.mxu0 0.0
        %1681 = vmatpush1.msra.mxu0 0.0
        %1682 = vmatprep.subr.mxu0 0.0
        %1683 = vmatpush1.msra.mxu0 0.0
        %1684 = vmatprep.subr.mxu0 0.0
        %1685 = vmatpush1.msra.mxu0 0.0
        %1686 = vmatprep.subr.mxu0 0.0
        %1687 = vmatpush1.msra.mxu0 0.0
        %1688 = vmatprep.subr.mxu0 0.0
        %1689 = vmatpush1.msra.mxu0 0.0
        %1690 = vmatprep.subr.mxu0 0.0
        %1691 = vmatpush1.msra.mxu0 0.0
        %1692 = vmatprep.subr.mxu0 0.0
        %1693 = vmatpush1.msra.mxu0 0.0
        %1694 = vmatprep.subr.mxu0 0.0
        %1695 = vmatpush1.msra.mxu0 0.0
        %1696 = vmatprep.subr.mxu0 0.0
        %1697 = vmatpush1.msra.mxu0 0.0
        %1698 = vmatprep.subr.mxu0 0.0
        %1699 = vmatpush1.msra.mxu0 0.0
        %1700 = vmatprep.subr.mxu0 0.0
        %1701 = vmatpush1.msra.mxu0 0.0
        %1702 = vmatprep.subr.mxu0 0.0
        %1703 = vmatpush1.msra.mxu0 0.0
        %1704 = vmatprep.subr.mxu0 0.0
        %1705 = vmatpush1.msra.mxu0 0.0
        %1706 = vmatprep.subr.mxu0 0.0
        %1707 = vmatpush1.msra.mxu0 0.0
        %1708 = vmatprep.subr.mxu0 0.0
        %1709 = vmatpush1.msra.mxu0 0.0
        %1710 = vmatprep.subr.mxu0 0.0
        %1711 = vmatpush1.msra.mxu0 0.0
        %1712 = vmatprep.subr.mxu0 0.0
        %1713 = vmatpush1.msra.mxu0 0.0
        %1714 = vmatprep.subr.mxu0 0.0
        %1715 = vmatpush1.msra.mxu0 0.0
        %1716 = vmatprep.subr.mxu0 0.0
        %1717 = vmatpush1.msra.mxu0 0.0
        %1718 = vmatprep.subr.mxu0 0.0
        %1719 = vmatpush1.msra.mxu0 0.0
        %1720 = vmatprep.subr.mxu0 0.0
        %1721 = vmatpush1.msra.mxu0 0.0
        %1722 = vmatprep.subr.mxu0 0.0
        %1723 = vmatpush1.msra.mxu0 0.0
        %1724 = vmatprep.subr.mxu0 0.0
        %1725 = vmatpush1.msra.mxu0 0.0
        %1726 = vmatprep.mubr.f32.mxu0 0.0
        %1727 = vmatmul.mubr.f32.gmra.mrb[0].mxu0 %v1660
        %v1728 = vpop.f32.mrb[0].mxu0
        %v1729 = vadd.f32 %v1427, %v1728
        %v1730 = vpop.f32.mrb[0].mxu0
        %1731 = vdwg.mxu0
        %v1732 = vmul.f32 %v1398, %v844
        %v1733 = vmul.f32 %v1399, %v844
        %v1734 = vmul.f32 %v1400, %v844
        %v1735 = vmul.f32 %v1401, %v844
        %v1736 = vsel %vm707, %v1732, 0.0
        %1737 = vadd.xlane.f32.xlu0 %v1736
        %v1738 = vpop.xlane.xlu0 %1737
        %v1739 = vsel %vm707, %v1733, 0.0
        %1740 = vadd.xlane.f32.xlu0 %v1739
        %v1741 = vpop.xlane.xlu0 %1740
        %v1742 = vsel %vm707, %v1734, 0.0
        %1743 = vadd.xlane.f32.xlu0 %v1742
        %v1744 = vpop.xlane.xlu0 %1743
        %v1745 = vsel %vm707, %v1735, 0.0
        %1746 = vadd.xlane.f32.xlu0 %v1745
        %v1747 = vpop.xlane.xlu0 %1746
        %v1748 = vlaneseq
        %v1749 = vshrl.u32 %v1748, 7
        %v1750 = vsub.s32 1, %v1749
        %v1751 = vrot.slane %v1402, %v1750
        %v1752 = vmul.f32 %v1738, %v1751
        %v1753 = vmul.f32 %v1741, %v1751
        %v1754 = vmul.f32 %v1744, %v1751
        %v1755 = vmul.f32 %v1747, %v1751
        %v1756 = vadd.f32 %v1501, %v1752
        %v1757 = vadd.f32 %v1577, %v1753
        %v1758 = vadd.f32 %v1653, %v1754
        %v1759 = vadd.f32 %v1729, %v1755
        %v1760 = vmul.f32 %v1398, %v871
        %v1761 = vmul.f32 %v1399, %v871
        %v1762 = vmul.f32 %v1400, %v871
        %v1763 = vmul.f32 %v1401, %v871
        %v1764 = vsel %vm707, %v1760, 0.0
        %1765 = vadd.xlane.f32.xlu0 %v1764
        %v1766 = vpop.xlane.xlu0 %1765
        %v1767 = vsel %vm707, %v1761, 0.0
        %1768 = vadd.xlane.f32.xlu0 %v1767
        %v1769 = vpop.xlane.xlu0 %1768
        %v1770 = vsel %vm707, %v1762, 0.0
        %1771 = vadd.xlane.f32.xlu0 %v1770
        %v1772 = vpop.xlane.xlu0 %1771
        %v1773 = vsel %vm707, %v1763, 0.0
        %1774 = vadd.xlane.f32.xlu0 %v1773
        %v1775 = vpop.xlane.xlu0 %1774
        %v1776 = vlaneseq
        %v1777 = vshrl.u32 %v1776, 7
        %v1778 = vsub.s32 2, %v1777
        %v1779 = vrot.slane %v1402, %v1778
        %v1780 = vmul.f32 %v1766, %v1779
        %v1781 = vmul.f32 %v1769, %v1779
        %v1782 = vmul.f32 %v1772, %v1779
        %v1783 = vmul.f32 %v1775, %v1779
        %v1784 = vadd.f32 %v1756, %v1780
        %v1785 = vadd.f32 %v1757, %v1781
        %v1786 = vadd.f32 %v1758, %v1782
        %v1787 = vadd.f32 %v1759, %v1783
        %v1788 = vmul.f32 %v1398, %v898
        %v1789 = vmul.f32 %v1399, %v898
        %v1790 = vmul.f32 %v1400, %v898
        %v1791 = vmul.f32 %v1401, %v898
        %v1792 = vsel %vm707, %v1788, 0.0
        %1793 = vadd.xlane.f32.xlu0 %v1792
        %v1794 = vpop.xlane.xlu0 %1793
        %v1795 = vsel %vm707, %v1789, 0.0
        %1796 = vadd.xlane.f32.xlu0 %v1795
        %v1797 = vpop.xlane.xlu0 %1796
        %v1798 = vsel %vm707, %v1790, 0.0
        %1799 = vadd.xlane.f32.xlu0 %v1798
        %v1800 = vpop.xlane.xlu0 %1799
        %v1801 = vsel %vm707, %v1791, 0.0
        %1802 = vadd.xlane.f32.xlu0 %v1801
        %v1803 = vpop.xlane.xlu0 %1802
        %v1804 = vlaneseq
        %v1805 = vshrl.u32 %v1804, 7
        %v1806 = vsub.s32 3, %v1805
        %v1807 = vrot.slane %v1402, %v1806
        %v1808 = vmul.f32 %v1794, %v1807
        %v1809 = vmul.f32 %v1797, %v1807
        %v1810 = vmul.f32 %v1800, %v1807
        %v1811 = vmul.f32 %v1803, %v1807
        %v1812 = vadd.f32 %v1784, %v1808
        %v1813 = vadd.f32 %v1785, %v1809
        %v1814 = vadd.f32 %v1786, %v1810
        %v1815 = vadd.f32 %v1787, %v1811
        %v1816 = vmul.f32 %v1398, %v925
        %v1817 = vmul.f32 %v1399, %v925
        %v1818 = vmul.f32 %v1400, %v925
        %v1819 = vmul.f32 %v1401, %v925
        %v1820 = vsel %vm707, %v1816, 0.0
        %1821 = vadd.xlane.f32.xlu0 %v1820
        %v1822 = vpop.xlane.xlu0 %1821
        %v1823 = vsel %vm707, %v1817, 0.0
        %1824 = vadd.xlane.f32.xlu0 %v1823
        %v1825 = vpop.xlane.xlu0 %1824
        %v1826 = vsel %vm707, %v1818, 0.0
        %1827 = vadd.xlane.f32.xlu0 %v1826
        %v1828 = vpop.xlane.xlu0 %1827
        %v1829 = vsel %vm707, %v1819, 0.0
        %1830 = vadd.xlane.f32.xlu0 %v1829
        %v1831 = vpop.xlane.xlu0 %1830
        %v1832 = vlaneseq
        %v1833 = vshrl.u32 %v1832, 7
        %v1834 = vsub.s32 4, %v1833
        %v1835 = vrot.slane %v1402, %v1834
        %v1836 = vmul.f32 %v1822, %v1835
        %v1837 = vmul.f32 %v1825, %v1835
        %v1838 = vmul.f32 %v1828, %v1835
        %v1839 = vmul.f32 %v1831, %v1835
        %v1840 = vadd.f32 %v1812, %v1836
        %v1841 = vadd.f32 %v1813, %v1837
        %v1842 = vadd.f32 %v1814, %v1838
        %v1843 = vadd.f32 %v1815, %v1839
        %v1844 = vmul.f32 %v1398, %v952
        %v1845 = vmul.f32 %v1399, %v952
        %v1846 = vmul.f32 %v1400, %v952
        %v1847 = vmul.f32 %v1401, %v952
        %v1848 = vsel %vm707, %v1844, 0.0
        %1849 = vadd.xlane.f32.xlu0 %v1848
        %v1850 = vpop.xlane.xlu0 %1849
        %v1851 = vsel %vm707, %v1845, 0.0
        %1852 = vadd.xlane.f32.xlu0 %v1851
        %v1853 = vpop.xlane.xlu0 %1852
        %v1854 = vsel %vm707, %v1846, 0.0
        %1855 = vadd.xlane.f32.xlu0 %v1854
        %v1856 = vpop.xlane.xlu0 %1855
        %v1857 = vsel %vm707, %v1847, 0.0
        %1858 = vadd.xlane.f32.xlu0 %v1857
        %v1859 = vpop.xlane.xlu0 %1858
        %v1860 = vlaneseq
        %v1861 = vshrl.u32 %v1860, 7
        %v1862 = vsub.s32 5, %v1861
        %v1863 = vrot.slane %v1402, %v1862
        %v1864 = vmul.f32 %v1850, %v1863
        %v1865 = vmul.f32 %v1853, %v1863
        %v1866 = vmul.f32 %v1856, %v1863
        %v1867 = vmul.f32 %v1859, %v1863
        %v1868 = vadd.f32 %v1840, %v1864
        %v1869 = vadd.f32 %v1841, %v1865
        %v1870 = vadd.f32 %v1842, %v1866
        %v1871 = vadd.f32 %v1843, %v1867
        %v1872 = vmul.f32 %v1398, %v979
        %v1873 = vmul.f32 %v1399, %v979
        %v1874 = vmul.f32 %v1400, %v979
        %v1875 = vmul.f32 %v1401, %v979
        %v1876 = vsel %vm707, %v1872, 0.0
        %1877 = vadd.xlane.f32.xlu0 %v1876
        %v1878 = vpop.xlane.xlu0 %1877
        %v1879 = vsel %vm707, %v1873, 0.0
        %1880 = vadd.xlane.f32.xlu0 %v1879
        %v1881 = vpop.xlane.xlu0 %1880
        %v1882 = vsel %vm707, %v1874, 0.0
        %1883 = vadd.xlane.f32.xlu0 %v1882
        %v1884 = vpop.xlane.xlu0 %1883
        %v1885 = vsel %vm707, %v1875, 0.0
        %1886 = vadd.xlane.f32.xlu0 %v1885
        %v1887 = vpop.xlane.xlu0 %1886
        %v1888 = vlaneseq
        %v1889 = vshrl.u32 %v1888, 7
        %v1890 = vsub.s32 6, %v1889
        %v1891 = vrot.slane %v1402, %v1890
        %v1892 = vmul.f32 %v1878, %v1891
        %v1893 = vmul.f32 %v1881, %v1891
        %v1894 = vmul.f32 %v1884, %v1891
        %v1895 = vmul.f32 %v1887, %v1891
        %v1896 = vadd.f32 %v1868, %v1892
        %v1897 = vadd.f32 %v1869, %v1893
        %v1898 = vadd.f32 %v1870, %v1894
        %v1899 = vadd.f32 %v1871, %v1895
        %v1900 = vmul.f32 %v1398, %v1006
        %v1901 = vmul.f32 %v1399, %v1006
        %v1902 = vmul.f32 %v1400, %v1006
        %v1903 = vmul.f32 %v1401, %v1006
        %v1904 = vsel %vm707, %v1900, 0.0
        %1905 = vadd.xlane.f32.xlu0 %v1904
        %v1906 = vpop.xlane.xlu0 %1905
        %v1907 = vsel %vm707, %v1901, 0.0
        %1908 = vadd.xlane.f32.xlu0 %v1907
        %v1909 = vpop.xlane.xlu0 %1908
        %v1910 = vsel %vm707, %v1902, 0.0
        %1911 = vadd.xlane.f32.xlu0 %v1910
        %v1912 = vpop.xlane.xlu0 %1911
        %v1913 = vsel %vm707, %v1903, 0.0
        %1914 = vadd.xlane.f32.xlu0 %v1913
        %v1915 = vpop.xlane.xlu0 %1914
        %v1916 = vlaneseq
        %v1917 = vshrl.u32 %v1916, 7
        %v1918 = vsub.s32 7, %v1917
        %v1919 = vrot.slane %v1402, %v1918
        %v1920 = vmul.f32 %v1906, %v1919
        %v1921 = vmul.f32 %v1909, %v1919
        %v1922 = vmul.f32 %v1912, %v1919
        %v1923 = vmul.f32 %v1915, %v1919
        %v1924 = vadd.f32 %v1896, %v1920
        %v1925 = vadd.f32 %v1897, %v1921
        %v1926 = vadd.f32 %v1898, %v1922
        %v1927 = vadd.f32 %v1899, %v1923
        %v1928 = vmul.f32 %v1398, %v1033
        %v1929 = vmul.f32 %v1399, %v1033
        %v1930 = vmul.f32 %v1400, %v1033
        %v1931 = vmul.f32 %v1401, %v1033
        %v1932 = vsel %vm707, %v1928, 0.0
        %1933 = vadd.xlane.f32.xlu0 %v1932
        %v1934 = vpop.xlane.xlu0 %1933
        %v1935 = vsel %vm707, %v1929, 0.0
        %1936 = vadd.xlane.f32.xlu0 %v1935
        %v1937 = vpop.xlane.xlu0 %1936
        %v1938 = vsel %vm707, %v1930, 0.0
        %1939 = vadd.xlane.f32.xlu0 %v1938
        %v1940 = vpop.xlane.xlu0 %1939
        %v1941 = vsel %vm707, %v1931, 0.0
        %1942 = vadd.xlane.f32.xlu0 %v1941
        %v1943 = vpop.xlane.xlu0 %1942
        %v1944 = vlaneseq
        %v1945 = vshrl.u32 %v1944, 7
        %v1946 = vsub.s32 0, %v1945
        %v1947 = vrot.slane %v1403, %v1946
        %v1948 = vmul.f32 %v1934, %v1947
        %v1949 = vmul.f32 %v1937, %v1947
        %v1950 = vmul.f32 %v1940, %v1947
        %v1951 = vmul.f32 %v1943, %v1947
        %v1952 = vadd.f32 %v1924, %v1948
        %v1953 = vadd.f32 %v1925, %v1949
        %v1954 = vadd.f32 %v1926, %v1950
        %v1955 = vadd.f32 %v1927, %v1951
        %1957 = vrot.lane.b32.xlu0 %v1953, 8
        %v1958 = vpop.permute.xlu0 %1957
        %1961 = vrot.lane.b32.xlu0 %v1954, 16
        %v1962 = vpop.permute.xlu0 %1961
        %1965 = vrot.lane.b32.xlu0 %v1955, 24
        %v1966 = vpop.permute.xlu0 %1965
        %v1968 = vsel %vm707, %v1952, %v1958
        %vm1969 = vcmask 130048
        %v1970 = vsel %vm1969, %v1968, %v1962
        %vm1971 = vcmask 195584
        %v1972 = vsel %vm1971, %v1970, %v1966
        %v1973 = vld [vmem:[%s4] sm:$0xff]
        %v1974 = vld [vmem:[%s4 + $0x8] sm:$0xff]
        %v1975 = vld [vmem:[%s4 + $0x10] sm:$0xff]
        %v1976 = vld [vmem:[%s4 + $0x18] sm:$0xff]
        %v1977 = vld [vmem:[#allocation5] sm:$0x1]
        %v1979 = vlaneseq
        %v1980 = vshrl.u32 %v1979, 7
        %v1981 = vsub.s32 0, %v1980
        %v1982 = vrot.slane %v1977, %v1981
        %v1985 = vsel %vm617, %v1972, 0
        %1987 = vmatprep.subr.mxu0 0.0
        %1988 = vmatpush1.msra.mxu0 %v1973
        %1989 = vmatprep.subr.mxu0 0.0
        %1990 = vmatpush1.msra.mxu0 %v1974
        %1991 = vmatprep.subr.mxu0 0.0
        %1992 = vmatpush1.msra.mxu0 %v1975
        %1993 = vmatprep.subr.mxu0 0.0
        %1994 = vmatpush1.msra.mxu0 %v1976
        %1995 = vmatprep.subr.mxu0 0.0
        %1996 = vmatpush1.msra.mxu0 0.0
        %1997 = vmatprep.subr.mxu0 0.0
        %1998 = vmatpush1.msra.mxu0 0.0
        %1999 = vmatprep.subr.mxu0 0.0
        %2000 = vmatpush1.msra.mxu0 0.0
        %2001 = vmatprep.subr.mxu0 0.0
        %2002 = vmatpush1.msra.mxu0 0.0
        %2003 = vmatprep.subr.mxu0 0.0
        %2004 = vmatpush1.msra.mxu0 0.0
        %2005 = vmatprep.subr.mxu0 0.0
        %2006 = vmatpush1.msra.mxu0 0.0
        %2007 = vmatprep.subr.mxu0 0.0
        %2008 = vmatpush1.msra.mxu0 0.0
        %2009 = vmatprep.subr.mxu0 0.0
        %2010 = vmatpush1.msra.mxu0 0.0
        %2011 = vmatprep.subr.mxu0 0.0
        %2012 = vmatpush1.msra.mxu0 0.0
        %2013 = vmatprep.subr.mxu0 0.0
        %2014 = vmatpush1.msra.mxu0 0.0
        %2015 = vmatprep.subr.mxu0 0.0
        %2016 = vmatpush1.msra.mxu0 0.0
        %2017 = vmatprep.subr.mxu0 0.0
        %2018 = vmatpush1.msra.mxu0 0.0
        %2019 = vmatprep.subr.mxu0 0.0
        %2020 = vmatpush1.msra.mxu0 0.0
        %2021 = vmatprep.subr.mxu0 0.0
        %2022 = vmatpush1.msra.mxu0 0.0
        %2023 = vmatprep.subr.mxu0 0.0
        %2024 = vmatpush1.msra.mxu0 0.0
        %2025 = vmatprep.subr.mxu0 0.0
        %2026 = vmatpush1.msra.mxu0 0.0
        %2027 = vmatprep.subr.mxu0 0.0
        %2028 = vmatpush1.msra.mxu0 0.0
        %2029 = vmatprep.subr.mxu0 0.0
        %2030 = vmatpush1.msra.mxu0 0.0
        %2031 = vmatprep.subr.mxu0 0.0
        %2032 = vmatpush1.msra.mxu0 0.0
        %2033 = vmatprep.subr.mxu0 0.0
        %2034 = vmatpush1.msra.mxu0 0.0
        %2035 = vmatprep.subr.mxu0 0.0
        %2036 = vmatpush1.msra.mxu0 0.0
        %2037 = vmatprep.subr.mxu0 0.0
        %2038 = vmatpush1.msra.mxu0 0.0
        %2039 = vmatprep.subr.mxu0 0.0
        %2040 = vmatpush1.msra.mxu0 0.0
        %2041 = vmatprep.subr.mxu0 0.0
        %2042 = vmatpush1.msra.mxu0 0.0
        %2043 = vmatprep.subr.mxu0 0.0
        %2044 = vmatpush1.msra.mxu0 0.0
        %2045 = vmatprep.subr.mxu0 0.0
        %2046 = vmatpush1.msra.mxu0 0.0
        %2047 = vmatprep.subr.mxu0 0.0
        %2048 = vmatpush1.msra.mxu0 0.0
        %2049 = vmatprep.subr.mxu0 0.0
        %2050 = vmatpush1.msra.mxu0 0.0
        %2051 = vmatprep.mubr.f32.mxu0 0.0
        %2052 = vmatmul.mubr.f32.gmra.mrb[0].mxu0 %v1985
        %v2053 = vpop.f32.mrb[0].mxu0
        %v2054 = vadd.f32 %v1982, %v2053
        %v2055 = vpop.f32.mrb[0].mxu0
        %2056 = vdwg.mxu0
        %v2057 = vadd.f32 %v604, %v2054
        %v2058 = vsel %vm617, %v2057, 0.0
        %2059 = vadd.xlane.f32.xlu0 %v2058
        %v2060 = vpop.xlane.xlu0 %2059
        %v2061 = vrcp.pop 32.0
        %v2062 = vmul.f32 %v2060, %v2061
        %v2063 = vsub.f32 %v2057, %v2062
        %v2064 = vmul.f32 %v2063, %v2063
        %v2065 = vsel %vm617, %v2064, 0.0
        %2066 = vadd.xlane.f32.xlu0 %v2065
        %v2067 = vpop.xlane.xlu0 %2066
        %v2068 = vmul.f32 %v2067, %v2061
        %v2069 = vadd.f32 %v2068, 1e-05
        %v2070 = vrsqrt.pop %v2069
        %v2071 = vmul.f32 %v2063, %v2070
        %v2072 = vld [vmem:[#allocation7] sm:$0x1]
        %v2074 = vlaneseq
        %v2075 = vshrl.u32 %v2074, 7
        %v2076 = vsub.s32 0, %v2075
        %v2077 = vrot.slane %v2072, %v2076
        %v2079 = vmul.f32 %v2071, %v2077
        %v2080 = vld [vmem:[#allocation8] sm:$0x1]
        %v2082 = vlaneseq
        %v2083 = vshrl.u32 %v2082, 7
        %v2084 = vsub.s32 0, %v2083
        %v2085 = vrot.slane %v2080, %v2084
        %v2087 = vadd.f32 %v2079, %v2085
        %v2088 = vld [vmem:[%s10] sm:$0xff]
        %v2089 = vld [vmem:[%s10 + $0x8] sm:$0xff]
        %v2090 = vld [vmem:[%s10 + $0x10] sm:$0xff]
        %v2091 = vld [vmem:[%s10 + $0x18] sm:$0xff]
        %v2092 = vld [vmem:[#allocation10] sm:$0x1]
        %v2094 = vlaneseq
        %v2095 = vshrl.u32 %v2094, 7
        %v2096 = vsub.s32 0, %v2095
        %v2097 = vrot.slane %v2092, %v2096
        %v2100 = vsel %vm617, %v2087, 0
        %2102 = vmatprep.subr.mxu0 0.0
        %2103 = vmatpush1.msra.mxu0 %v2088
        %2104 = vmatprep.subr.mxu0 0.0
        %2105 = vmatpush1.msra.mxu0 %v2089
        %2106 = vmatprep.subr.mxu0 0.0
        %2107 = vmatpush1.msra.mxu0 %v2090
        %2108 = vmatprep.subr.mxu0 0.0
        %2109 = vmatpush1.msra.mxu0 %v2091
        %2110 = vmatprep.subr.mxu0 0.0
        %2111 = vmatpush1.msra.mxu0 0.0
        %2112 = vmatprep.subr.mxu0 0.0
        %2113 = vmatpush1.msra.mxu0 0.0
        %2114 = vmatprep.subr.mxu0 0.0
        %2115 = vmatpush1.msra.mxu0 0.0
        %2116 = vmatprep.subr.mxu0 0.0
        %2117 = vmatpush1.msra.mxu0 0.0
        %2118 = vmatprep.subr.mxu0 0.0
        %2119 = vmatpush1.msra.mxu0 0.0
        %2120 = vmatprep.subr.mxu0 0.0
        %2121 = vmatpush1.msra.mxu0 0.0
        %2122 = vmatprep.subr.mxu0 0.0
        %2123 = vmatpush1.msra.mxu0 0.0
        %2124 = vmatprep.subr.mxu0 0.0
        %2125 = vmatpush1.msra.mxu0 0.0
        %2126 = vmatprep.subr.mxu0 0.0
        %2127 = vmatpush1.msra.mxu0 0.0
        %2128 = vmatprep.subr.mxu0 0.0
        %2129 = vmatpush1.msra.mxu0 0.0
        %2130 = vmatprep.subr.mxu0 0.0
        %2131 = vmatpush1.msra.mxu0 0.0
        %2132 = vmatprep.subr.mxu0 0.0
        %2133 = vmatpush1.msra.mxu0 0.0
        %2134 = vmatprep.subr.mxu0 0.0
        %2135 = vmatpush1.msra.mxu0 0.0
        %2136 = vmatprep.subr.mxu0 0.0
        %2137 = vmatpush1.msra.mxu0 0.0
        %2138 = vmatprep.subr.mxu0 0.0
        %2139 = vmatpush1.msra.mxu0 0.0
        %2140 = vmatprep.subr.mxu0 0.0
        %2141 = vmatpush1.msra.mxu0 0.0
        %2142 = vmatprep.subr.mxu0 0.0
        %2143 = vmatpush1.msra.mxu0 0.0
        %2144 = vmatprep.subr.mxu0 0.0
        %2145 = vmatpush1.msra.mxu0 0.0
        %2146 = vmatprep.subr.mxu0 0.0
        %2147 = vmatpush1.msra.mxu0 0.0
        %2148 = vmatprep.subr.mxu0 0.0
        %2149 = vmatpush1.msra.mxu0 0.0
        %2150 = vmatprep.subr.mxu0 0.0
        %2151 = vmatpush1.msra.mxu0 0.0
        %2152 = vmatprep.subr.mxu0 0.0
        %2153 = vmatpush1.msra.mxu0 0.0
        %2154 = vmatprep.subr.mxu0 0.0
        %2155 = vmatpush1.msra.mxu0 0.0
        %2156 = vmatprep.subr.mxu0 0.0
        %2157 = vmatpush1.msra.mxu0 0.0
        %2158 = vmatprep.subr.mxu0 0.0
        %2159 = vmatpush1.msra.mxu0 0.0
        %2160 = vmatprep.subr.mxu0 0.0
        %2161 = vmatpush1.msra.mxu0 0.0
        %2162 = vmatprep.subr.mxu0 0.0
        %2163 = vmatpush1.msra.mxu0 0.0
        %2164 = vmatprep.subr.mxu0 0.0
        %2165 = vmatpush1.msra.mxu0 0.0
        %2166 = vmatprep.mubr.f32.mxu0 0.0
        %2167 = vmatmul.mubr.f32.gmra.mrb[0].mxu0 %v2100
        %v2168 = vpop.f32.mrb[0].mxu0
        %v2169 = vadd.f32 %v2097, %v2168
        %v2170 = vpop.f32.mrb[0].mxu0
        %2171 = vdwg.mxu0
        %v2172 = vmax.f32 %v2169, 0.0
        %v2173 = vld [vmem:[%s12] sm:$0xff]
        %v2174 = vld [vmem:[%s12 + $0x8] sm:$0xff]
        %v2175 = vld [vmem:[%s12 + $0x10] sm:$0xff]
        %v2176 = vld [vmem:[%s12 + $0x18] sm:$0xff]
        %v2177 = vld [vmem:[%s12 + $0x20] sm:$0xff]
        %v2178 = vld [vmem:[%s12 + $0x28] sm:$0xff]
        %v2179 = vld [vmem:[%s12 + $0x30] sm:$0xff]
        %v2180 = vld [vmem:[%s12 + $0x38] sm:$0xff]
        %v2181 = vld [vmem:[%s13] sm:$0x1]
        %v2183 = vlaneseq
        %v2184 = vshrl.u32 %v2183, 7
        %v2185 = vsub.s32 0, %v2184
        %v2186 = vrot.slane %v2181, %v2185
        %vm2188 = vcmask 523264
        %v2190 = vsel %vm2188, %v2172, 0
        %2192 = vmatprep.subr.mxu0 0.0
        %2193 = vmatpush1.msra.mxu0 %v2173
        %2194 = vmatprep.subr.mxu0 0.0
        %2195 = vmatpush1.msra.mxu0 %v2174
        %2196 = vmatprep.subr.mxu0 0.0
        %2197 = vmatpush1.msra.mxu0 %v2175
        %2198 = vmatprep.subr.mxu0 0.0
        %2199 = vmatpush1.msra.mxu0 %v2176
        %2200 = vmatprep.subr.mxu0 0.0
        %2201 = vmatpush1.msra.mxu0 %v2177
        %2202 = vmatprep.subr.mxu0 0.0
        %2203 = vmatpush1.msra.mxu0 %v2178
        %2204 = vmatprep.subr.mxu0 0.0
        %2205 = vmatpush1.msra.mxu0 %v2179
        %2206 = vmatprep.subr.mxu0 0.0
        %2207 = vmatpush1.msra.mxu0 %v2180
        %2208 = vmatprep.subr.mxu0 0.0
        %2209 = vmatpush1.msra.mxu0 0.0
        %2210 = vmatprep.subr.mxu0 0.0
        %2211 = vmatpush1.msra.mxu0 0.0
        %2212 = vmatprep.subr.mxu0 0.0
        %2213 = vmatpush1.msra.mxu0 0.0
        %2214 = vmatprep.subr.mxu0 0.0
        %2215 = vmatpush1.msra.mxu0 0.0
        %2216 = vmatprep.subr.mxu0 0.0
        %2217 = vmatpush1.msra.mxu0 0.0
        %2218 = vmatprep.subr.mxu0 0.0
        %2219 = vmatpush1.msra.mxu0 0.0
        %2220 = vmatprep.subr.mxu0 0.0
        %2221 = vmatpush1.msra.mxu0 0.0
        %2222 = vmatprep.subr.mxu0 0.0
        %2223 = vmatpush1.msra.mxu0 0.0
        %2224 = vmatprep.subr.mxu0 0.0
        %2225 = vmatpush1.msra.mxu0 0.0
        %2226 = vmatprep.subr.mxu0 0.0
        %2227 = vmatpush1.msra.mxu0 0.0
        %2228 = vmatprep.subr.mxu0 0.0
        %2229 = vmatpush1.msra.mxu0 0.0
        %2230 = vmatprep.subr.mxu0 0.0
        %2231 = vmatpush1.msra.mxu0 0.0
        %2232 = vmatprep.subr.mxu0 0.0
        %2233 = vmatpush1.msra.mxu0 0.0
        %2234 = vmatprep.subr.mxu0 0.0
        %2235 = vmatpush1.msra.mxu0 0.0
        %2236 = vmatprep.subr.mxu0 0.0
        %2237 = vmatpush1.msra.mxu0 0.0
        %2238 = vmatprep.subr.mxu0 0.0
        %2239 = vmatpush1.msra.mxu0 0.0
        %2240 = vmatprep.subr.mxu0 0.0
        %2241 = vmatpush1.msra.mxu0 0.0
        %2242 = vmatprep.subr.mxu0 0.0
        %2243 = vmatpush1.msra.mxu0 0.0
        %2244 = vmatprep.subr.mxu0 0.0
        %2245 = vmatpush1.msra.mxu0 0.0
        %2246 = vmatprep.subr.mxu0 0.0
        %2247 = vmatpush1.msra.mxu0 0.0
        %2248 = vmatprep.subr.mxu0 0.0
        %2249 = vmatpush1.msra.mxu0 0.0
        %2250 = vmatprep.subr.mxu0 0.0
        %2251 = vmatpush1.msra.mxu0 0.0
        %2252 = vmatprep.subr.mxu0 0.0
        %2253 = vmatpush1.msra.mxu0 0.0
        %2254 = vmatprep.subr.mxu0 0.0
        %2255 = vmatpush1.msra.mxu0 0.0
        %2256 = vmatprep.mubr.f32.mxu0 0.0
        %2257 = vmatmul.mubr.f32.gmra.mrb[0].mxu0 %v2190
        %v2258 = vpop.f32.mrb[0].mxu0
        %v2259 = vadd.f32 %v2186, %v2258
        %v2260 = vpop.f32.mrb[0].mxu0
        %2261 = vdwg.mxu0
        %v2262 = vadd.f32 %v2087, %v2259
        %v2263 = vsel %vm617, %v2262, 0.0
        %2264 = vadd.xlane.f32.xlu0 %v2263
        %v2265 = vpop.xlane.xlu0 %2264
        %v2266 = vmul.f32 %v2265, %v2061
        %v2267 = vsub.f32 %v2262, %v2266
        %v2268 = vmul.f32 %v2267, %v2267
        %v2269 = vsel %vm617, %v2268, 0.0
        %2270 = vadd.xlane.f32.xlu0 %v2269
        %v2271 = vpop.xlane.xlu0 %2270
        %v2272 = vmul.f32 %v2271, %v2061
        %v2273 = vadd.f32 %v2272, 1e-05
        %v2274 = vrsqrt.pop %v2273
        %v2275 = vmul.f32 %v2267, %v2274
        %v2276 = vld [vmem:[%s14] sm:$0x1]
        %v2278 = vlaneseq
        %v2279 = vshrl.u32 %v2278, 7
        %v2280 = vsub.s32 0, %v2279
        %v2281 = vrot.slane %v2276, %v2280
        %v2283 = vmul.f32 %v2275, %v2281
        %v2284 = vld [vmem:[%s15] sm:$0x1]
        %v2286 = vlaneseq
        %v2287 = vshrl.u32 %v2286, 7
        %v2288 = vsub.s32 0, %v2287
        %v2289 = vrot.slane %v2284, %v2288
        %v2291 = vadd.f32 %v2283, %v2289
        %2292 = vst.msk [vmem:[%s599] sm:$0xff] %vm617, %v2291
        %s2293 = sand.u32 %s389, 1
        %s2294 = scalar_lea.sflag [#allocation4], %s2293
        %s2295 = sand.u32 %s389, 1
        %s2296 = smul.addr %s2295, 8
        %s2297 = scalar_lea.vmem [#allocation11], %s2296
        // Predicated region
        $region105: #{tpu_custom_call.1} parent=83 // pred_check
          %p2298 = pneg %p399
        $region106: #{tpu_custom_call.1} parent=83 // pred_check_branch
          %2300 = sbr.rel (%p2298) target = $region108
        $region107: #{tpu_custom_call.1} parent=83 // pred_region
          %s2302 = ssub.s32 128, 128
          %2303 = vsyncadd %s2294, %s2302
          %s2304 = smul.addr %s35, 128
          %s2305 = scalar_lea.hbm %s16, %s2304
          %s2307 = sshll.u32 %s2297, 4
          %s2308 = int_to_ptr.vmem [resolvable:$true] %s2307
          %2310 = dma.vmem_to_hbm [thread:$0]  %s2308, 128, %s2305, %s2294
        $region108: #{tpu_custom_call.1} parent=83 // pred_fallthru
          _
      $region84: #{tpu_custom_call.1} parent=5 // pred_fallthru
        _
      %p2311 = scmp.le.s32.totalorder 2, %s30
      // Predicated region
      $region109: #{tpu_custom_call.1} parent=5 // pred_check
        %p2312 = pneg %p2311
      $region110: #{tpu_custom_call.1} parent=5 // pred_check_branch
        %2314 = sbr.rel (%p2312) target = $region112
      $region111: #{tpu_custom_call.1} parent=5 // pred_region
        %s2315 = ssub.s32 %s30, 2
        // Predicated region
        $region113: #{tpu_custom_call.1} parent=111 // pred_check
          %p2316 = pneg %p405
        $region114: #{tpu_custom_call.1} parent=111 // pred_check_branch
          %2318 = sbr.rel (%p2316) target = $region116
        $region115: #{tpu_custom_call.1} parent=111 // pred_region
          %s2319 = sand.u32 %s390, 1
          %s2320 = scalar_lea.sflag [#allocation4], %s2319
          %s2321 = sand.u32 %s390, 1
          %s2322 = smul.addr %s2321, 8
          %s2323 = scalar_lea.vmem [#allocation11], %s2322
          %2324 = dma.done %s2320, 128
        $region116: #{tpu_custom_call.1} parent=111 // pred_fallthru
          _
      $region112: #{tpu_custom_call.1} parent=5 // pred_fallthru
        _
    $region6: #{tpu_custom_call.1} parent=1 // loop_footer
      %s34 = sadd.s32 1, %s30
    $region7: #{tpu_custom_call.1} parent=1 // loop_footer_branch
      %29 = sbr.rel target = $region3
    $region8: #{tpu_custom_call.1} parent=1 // loop_exit
      _
    %2325 = vsyncpa [#allocation3], 1
    %s2326 = scalar_lea.sflag [#allocation3], 1
    %2327 = vsyncpa %s2326, 1
    %2328 = vsyncpa [#allocation6], 1
    %2329 = vsyncpa [#allocation9], 1
    %2330 = vsyncpa [#allocation4], 1
    %s2331 = scalar_lea.sflag [#allocation4], 1
    %2332 = vsyncpa %s2331, 1

</llo_original>
